<compile_context>
chip_gen: v6e
topology: v6e:2x2x1
jax: 0.10.0
libtpu: 0.0.40
codegen_flags: <defaults>
</compile_context>

<pallas_src>
import numpy as np
import jax
import jax.numpy as jnp
from jax import lax
from jax.experimental import pallas as pl
from jax.experimental.pallas import tpu as pltpu

B, S, E, I = 2, 8, 64, 8          # batch, seq_len, embed_dim (must be 64), interact_dim
UP = 64                           # fixed upsample target size in the module
G = E // S                        # number of (S,S) blocks in the torch .view permutation
LN_EPS = 1e-5
INV_SQRT_E = 1.0 / float(np.sqrt(E))

assert E == UP, "module adds a (64,64) conv map to the (E,E) scores -> embed_dim must be 64"
assert E % S == 0, "in-kernel .view handling requires seq_len | embed_dim"


# ---------------------------------------------------------------------------
# in-kernel helpers (operate on values, not refs)
# ---------------------------------------------------------------------------
def _gelu(x):
    # tanh-form GELU (EUP); accepted approximation of nn.GELU()'s erf form.
    c = 0.7978845608028654  # sqrt(2/pi)
    return 0.5 * x * (1.0 + jnp.tanh(c * (x + 0.044715 * x * x * x)))


def _ln_rows(x, gamma, beta):
    # LayerNorm over the last dim, params shaped (1, E).
    mu = jnp.mean(x, axis=-1, keepdims=True)
    var = jnp.mean((x - mu) ** 2, axis=-1, keepdims=True)
    return (x - mu) * lax.rsqrt(var + LN_EPS) * gamma + beta


def _act_quant_rows(x):
    # BitNet-b1.58 per-row int8 activation quant: integer part (exact in bf16, feeds
    # the MXU) and per-row dequant multiplier amax/127 (no divide on the dequant path).
    amax = jnp.maximum(jnp.max(jnp.abs(x), axis=-1, keepdims=True), 1e-5)
    s = 127.0 / amax                           # tiny (<=16,1) divide, kept exact
    xi = jnp.clip(jnp.round(x * s), -128.0, 127.0)
    return xi.astype(jnp.bfloat16), amax * (1.0 / 127.0)


def _nt_matmul(a, w):
    # a @ w^T without materializing a transpose.
    return lax.dot_general(a, w, (((1,), (1,)), ((), ())),
                           preferred_element_type=jnp.float32)


def _tn_matmul(a, w):
    # a^T @ w without materializing a transpose (contract over dim 0 of both).
    return lax.dot_general(a, w, (((0,), (0,)), ((), ())),
                           preferred_element_type=jnp.float32)


# ---------------------------------------------------------------------------
# fused kernel: ln1 + q/k/v BitLinear + interact conv branch (MXU) + channel attention
#               + residual/LN/MLP tail, everything in natural (rows, E) layout
# ---------------------------------------------------------------------------
def ca_kernel(x_ref, i2_ref, wup_ref, wupt_ref, p_ref, ptb_ref,
              wqkv_ref, qkvsb_ref, ln_ref, wfc_ref, fcb_ref,
              cband_ref, lsh_ref, convb_ref, fcs_ref,
              out_ref, qkvw_s):
    # ---- ln1 + fused q/k/v BitLinear projection, both batches stacked (16, 64) ----
    x = x_ref[...]                                  # (B*S, E)
    ln = ln_ref[...]                                # (8, E): g1 b1 g2 b2 g3 b3 g4 b4
    g1, b1 = ln[0:1, :], ln[1:2, :]
    g2, b2 = ln[2:3, :], ln[3:4, :]
    g3, b3 = ln[4:5, :], ln[5:6, :]
    g4, b4 = ln[6:7, :], ln[7:8, :]

    xn = _ln_rows(x, g1, b1)                        # ln1(x), reused by the tail

    xi, inv_sx = _act_quant_rows(xn)                # bf16 ints, (B*S, 1) dequant scale
    sb = qkvsb_ref[...]                             # (2, 3E): [w-scale ; bias], permuted cols
    qkv = _nt_matmul(xi, wqkv_ref[...])             # (B*S, 3E) exact integer sums (f32)
    qkv = qkv * inv_sx * sb[0:1, :] + sb[1:2, :]    # dequant + bias

    # ---- torch .view(B, E, S): permuted views  {Q,K,V}w = P @ {q,k,v}.view(E,S).
    #      Weight columns are pre-interleaved so block i's [q_i|k_i|v_i] lanes are
    #      contiguous -> one 24-lane store per (batch, block).
    for b in range(B):
        for i in range(G):
            qkvw_s[b, i * S:(i + 1) * S, :] = qkv[b * S:(b + 1) * S,
                                                  i * 3 * S:(i + 1) * 3 * S]

    # ---- interact branch: bilinear upsample + 3 x (3x3 conv + GELU), all on the MXU,
    #      both batch images lane-packed into a (64, 128) slab.
    img = jnp.concatenate([i2_ref[0], i2_ref[1]], axis=1)                 # (I, 2I)
    t0 = jnp.dot(wup_ref[...], img, preferred_element_type=jnp.float32)   # (UP, 2I)
    h = jnp.dot(t0, wupt_ref[...], preferred_element_type=jnp.float32)    # (UP, 2UP)

    lm1 = lsh_ref[0]                                 # row shift dy = -1 (zero boundary)
    lp1 = lsh_ref[1]                                 # row shift dy = +1
    for ci in range(3):
        tm = jnp.dot(h, cband_ref[ci * 3 + 0], preferred_element_type=jnp.float32)
        tz = jnp.dot(h, cband_ref[ci * 3 + 1], preferred_element_type=jnp.float32)
        tp = jnp.dot(h, cband_ref[ci * 3 + 2], preferred_element_type=jnp.float32)
        acc = (jnp.dot(lm1, tm, preferred_element_type=jnp.float32) + tz
               + jnp.dot(lp1, tp, preferred_element_type=jnp.float32)
               + convb_ref[ci])
        h = _gelu(acc)
    inter_pack = h                                   # (64, 128) = [inter_0 | inter_1]

    # ---- channel attention in the permuted ("w") basis ----
    # scores_w = P scores P^T ; softmax commutes with the simultaneous row/col perm.
    pmat = p_ref[...]                                # P (E, E)
    pi = jnp.dot(pmat, inter_pack, preferred_element_type=jnp.float32)       # [P i0 | P i1]
    inter_w = jnp.dot(pi, ptb_ref[...], preferred_element_type=jnp.float32)  # [P i0 P^T | P i1 P^T]

    zs = []
    for b in range(B):
        qw = qkvw_s[b, :, 0:S]                       # (E, S)
        kw = qkvw_s[b, :, S:2 * S]
        vw = qkvw_s[b, :, 2 * S:3 * S]
        scores = _nt_matmul(qw, kw) * INV_SQRT_E + inter_w[:, b * E:(b + 1) * E]
        scores = scores - jnp.max(scores, axis=-1, keepdims=True)
        pexp = jnp.exp(scores)
        attn = pexp * pl.reciprocal(jnp.sum(pexp, axis=-1, keepdims=True), approx=True)
        zs.append(jnp.dot(attn, vw, preferred_element_type=jnp.float32))     # (E, S)
    z_pack = jnp.concatenate(zs, axis=1)             # (E, B*S)
    # natural-layout attention output for both batches in one matmul:
    #   ao[b*S+s, j] = sum_i z_pack[i, b*S+s] * P[i, j]   (== attn_out.transpose(1,2))
    ao = _tn_matmul(z_pack, pmat)                    # (B*S, E)

    # ---- residual / LN / MLP tail, natural (rows, E) layout, xn reused ----
    a1 = _ln_rows(ao - xn, g2, b2)                   # ln2(attn_out - ln1(x))
    r2 = a1 + x                                      # residual2
    h1 = _ln_rows(r2, g3, b3)                        # ln3

    fcb = fcb_ref[...]                               # (2, E) fc1/fc2 bias rows
    hq, inv_s1 = _act_quant_rows(h1)
    y = _nt_matmul(hq, wfc_ref[0]) * (inv_s1 * fcs_ref[0]) + fcb[0:1, :]   # fc1 (BitLinear)
    y = _gelu(y)
    y = _ln_rows(y, g4, b4)                          # ln4
    hq, inv_s2 = _act_quant_rows(y)
    y = _nt_matmul(hq, wfc_ref[1]) * (inv_s2 * fcs_ref[1]) + fcb[1:2, :]   # fc2 (BitLinear)

    out_ref[...] = y + r2                            # (B*S, E), lane-dense store


# ---------------------------------------------------------------------------
# host-side precomputation (tiny constant matrices)
# ---------------------------------------------------------------------------
def _bilinear_matrix(out_size, in_size):
    # PyTorch bilinear, align_corners=False (separable 1-D interpolation matrix).
    scale = in_size / out_size
    o = np.arange(out_size)
    src = np.maximum((o + 0.5) * scale - 0.5, 0.0)
    i0 = np.minimum(np.floor(src).astype(np.int64), in_size - 1)
    i1 = np.minimum(i0 + 1, in_size - 1)
    lam = (src - i0).astype(np.float32)
    W = np.zeros((out_size, in_size), np.float32)
    np.add.at(W, (o, i0), 1.0 - lam)
    np.add.at(W, (o, i1), lam)
    return W


def _upsample_rhs_block(wup):
    # (B*I, B*UP) block-diagonal Wup^T: keeps the two lane-packed batches separate.
    out = np.zeros((B * I, B * UP), np.float32)
    for b in range(B):
        out[b * I:(b + 1) * I, b * UP:(b + 1) * UP] = wup.T
    return out


def _view_perm_matrix(e, s):
    # Row permutation with (P @ M)[i*s + a, :] = M[a*(e//s) + i, :]; P @ q.view(E,S)
    # equals the block stack [ q[:, 0:S] ; q[:, S:2S] ; ... ] built by lane-slicing.
    g = e // s
    P = np.zeros((e, e), np.float32)
    for i in range(g):
        for a in range(s):
            P[i * s + a, a * g + i] = 1.0
    return P


def _pt_block(P):
    out = np.zeros((B * UP, B * UP), np.float32)
    for b in range(B):
        out[b * UP:(b + 1) * UP, b * UP:(b + 1) * UP] = P.T
    return out


def _conv_band_matrices(convw):
    # C_dy[j, x] = w[ci, dy+1, (j-x)+1] for |j-x|<=1 (zero padding baked in), block-
    # diagonal over the two lane-packed batches.  Layout: (9, 2UP, 2UP), index ci*3+dy.
    Cb = np.zeros((9, B * UP, B * UP), np.float32)
    for ci in range(3):
        for dyi in range(3):
            C = np.zeros((UP, UP), np.float32)
            for dxi in range(3):
                dx = dxi - 1
                w = float(convw[ci, dyi, dxi])
                for x_ in range(UP):
                    j = x_ + dx
                    if 0 <= j < UP:
                        C[j, x_] = w
            for b in range(B):
                Cb[ci * 3 + dyi, b * UP:(b + 1) * UP, b * UP:(b + 1) * UP] = C
    return Cb


def _row_shift_matrices():
    # L_dy[y, j] = 1 iff j = y + dy (rows that fall off the image stay zero).
    L = np.zeros((2, UP, UP), np.float32)
    for y in range(1, UP):
        L[0, y, y - 1] = 1.0          # dy = -1
    for y in range(UP - 1):
        L[1, y, y + 1] = 1.0          # dy = +1
    return L


def _ternary_int_and_scale(w):
    # BitNet-b1.58 per-tensor ternary weight quantization: integer part (exact in bf16)
    # and the f32 dequant multiplier.
    s = 1.0 / jnp.maximum(jnp.mean(jnp.abs(w)), 1e-5)
    wi = jnp.clip(jnp.round(w * s), -1.0, 1.0)
    return wi, 1.0 / s


def make_params(key):
    f32 = jnp.float32
    ks = jax.random.split(key, 12)

    # q/k/v BitLinear weights -> fused (3E, E) ternary bf16 matrix; rows permuted so
    # that each .view block i exposes contiguous [q_i | k_i | v_i] output columns.
    w_int, w_scale = [], []
    for t in range(3):
        wi, sc = _ternary_int_and_scale(jax.random.normal(ks[t], (E, E), f32) * 0.05)
        w_int.append(wi)
        w_scale.append(sc)
    wqkv = jnp.concatenate(w_int, axis=0)                                  # (3E, E)
    bqkv = (jax.random.normal(ks[3], (3, E), f32) * 0.02).reshape(3 * E)
    scale_row = jnp.concatenate([jnp.full((E,), w_scale[t], f32) for t in range(3)])
    perm = np.empty(3 * E, np.int64)
    for i in range(G):
        for t in range(3):
            for u in range(S):
                perm[i * 3 * S + t * S + u] = t * E + i * S + u
    perm = jnp.asarray(perm)
    wqkv = wqkv[perm].astype(jnp.bfloat16)                                 # (3E, E) bf16
    qkv_sb = jnp.stack([scale_row[perm], bqkv[perm]])                      # (2, 3E)

    # fc1/fc2 BitLinear weights.
    w_int, w_scale = [], []
    for t in range(2):
        wi, sc = _ternary_int_and_scale(jax.random.normal(ks[4 + t], (E, E), f32) * 0.05)
        w_int.append(wi)
        w_scale.append(sc)
    wfc = jnp.stack(w_int).astype(jnp.bfloat16)                            # (2, E, E)
    fc_ws = jnp.stack([w_scale[0], w_scale[1]]).astype(f32)                # (2,)
    fcb = jax.random.normal(ks[6], (2, E), f32) * 0.02                     # (2, E)

    # LayerNorm 1..4 gamma/beta rows.
    g1 = 1.0 + 0.1 * jax.random.normal(ks[7], (E,), f32)
    b1 = 0.1 * jax.random.normal(ks[8], (E,), f32)
    g = 1.0 + 0.1 * jax.random.normal(ks[9], (3, E), f32)
    b = 0.1 * jax.random.normal(ks[10], (3, E), f32)
    ln_p = jnp.stack([g1, b1, g[0], b[0], g[1], b[1], g[2], b[2]])         # (8, E)

    convw = np.asarray(jax.random.normal(ks[11], (3, 3, 3), f32)) * 0.1    # (layer, ky, kx)
    convb = jnp.array([0.01, -0.02, 0.03], f32)

    wup = _bilinear_matrix(UP, I)
    P = _view_perm_matrix(E, S)
    return dict(
        wup=jnp.asarray(wup),
        wupt_blk=jnp.asarray(_upsample_rhs_block(wup)),
        pmat=jnp.asarray(P),
        ptblk=jnp.asarray(_pt_block(P)),
        wqkv=wqkv, qkv_sb=qkv_sb, ln_p=ln_p,
        wfc=wfc, fcb=fcb, fc_ws=fc_ws,
        cband=jnp.asarray(_conv_band_matrices(convw)),
        lshift=jnp.asarray(_row_shift_matrices()),
        convb=convb,
    )


# ---------------------------------------------------------------------------
# wrapper
# ---------------------------------------------------------------------------
def _full(shape):
    n = len(shape)
    return pl.BlockSpec(shape, lambda i: (0,) * n)


@jax.jit
def channel_attention(x, interact2, params):
    x2d = jnp.reshape(x, (B * S, E))                 # free bitcast, natural layout rows

    out2d = pl.pallas_call(
        ca_kernel,
        grid=(1,),                                   # single step: B folded into the kernel
        in_specs=[
            _full((B * S, E)),                       # x (natural, batches stacked on rows)
            _full((B, I, I)),                        # interact2
            _full((UP, I)),                          # bilinear upsample matrix
            _full((B * I, B * UP)),                  # block-diag Wup^T (lane-packed batches)
            _full((E, E)),                           # P (view permutation)
            _full((B * UP, B * UP)),                 # block-diag P^T
            _full((3 * E, E)),                       # fused Wq/Wk/Wv ternary ints (bf16)
            _full((2, 3 * E)),                       # per-column dequant scale + bias
            _full((8, E)),                           # ln1..ln4 gamma/beta rows
            _full((2, E, E)),                        # fc1/fc2 ternary ints (bf16)
            _full((2, E)),                           # fc1/fc2 bias rows
            _full((9, B * UP, B * UP)),              # conv column band matrices (MXU taps)
            _full((2, UP, UP)),                      # conv row shift matrices
            pl.BlockSpec(memory_space=pltpu.MemorySpace.SMEM),   # conv biases (3,)
            pl.BlockSpec(memory_space=pltpu.MemorySpace.SMEM),   # fc dequant scales (2,)
        ],
        out_specs=_full((B * S, E)),
        out_shape=jax.ShapeDtypeStruct((B * S, E), jnp.float32),
        scratch_shapes=[pltpu.VMEM((B, E, 3 * S), jnp.float32)],  # permuted [q|k|v] views
        compiler_params=pltpu.CompilerParams(
            dimension_semantics=("arbitrary",)),
    )(x2d, interact2, params["wup"], params["wupt_blk"], params["pmat"],
      params["ptblk"], params["wqkv"], params["qkv_sb"], params["ln_p"],
      params["wfc"], params["fcb"], params["cband"], params["lshift"],
      params["convb"], params["fc_ws"])

    return jnp.reshape(out2d, (B, S, E))             # free bitcast


if __name__ == "__main__":
    key = jax.random.PRNGKey(0)
    kx, ki, kp = jax.random.split(key, 3)
    x = jax.random.normal(kx, (B, S, E), jnp.float32)
    interact2 = jax.random.normal(ki, (B, I, I), jnp.float32)
    params = make_params(kp)

    out = channel_attention(x, interact2, params)
    out = jax.block_until_ready(out)

    assert out.shape == (B, S, E), out.shape
    assert bool(jnp.all(jnp.isfinite(out)))
    print("KERNEL_OK")
</pallas_src>

<mosaic_0001>
module attributes {stable_mosaic.version = 11 : i64} {
  func.func @ca_kernel(%arg0: i32, %arg1: memref<16x64xf32, #tpu.memory_space<vmem>>, %arg2: memref<2x8x8xf32, #tpu.memory_space<vmem>>, %arg3: memref<64x8xf32, #tpu.memory_space<vmem>>, %arg4: memref<16x128xf32, #tpu.memory_space<vmem>>, %arg5: memref<64x64xf32, #tpu.memory_space<vmem>>, %arg6: memref<128x128xf32, #tpu.memory_space<vmem>>, %arg7: memref<192x64xbf16, #tpu.memory_space<vmem>>, %arg8: memref<2x192xf32, #tpu.memory_space<vmem>>, %arg9: memref<8x64xf32, #tpu.memory_space<vmem>>, %arg10: memref<2x64x64xbf16, #tpu.memory_space<vmem>>, %arg11: memref<2x64xf32, #tpu.memory_space<vmem>>, %arg12: memref<9x128x128xf32, #tpu.memory_space<vmem>>, %arg13: memref<2x64x64xf32, #tpu.memory_space<vmem>>, %arg14: memref<3xf32, #tpu.memory_space<smem>>, %arg15: memref<2xf32, #tpu.memory_space<smem>>, %arg16: memref<16x64xf32, #tpu.memory_space<vmem>>, %arg17: memref<2x64x24xf32, #tpu.memory_space<vmem>>) attributes {dimension_semantics = [#tpu.dimension_semantics<arbitrary>], iteration_bounds = array<i64: 1>, scalar_prefetch = 0 : i64, scratch_operands = 1 : i64, tpu.core_type = #tpu.core_type<tc>, window_params = [{pipeline_mode = #tpu.pipeline_mode<synchronous>, transform_indices = @transform_0, window_bounds = array<i64: 16, 64>}, {pipeline_mode = #tpu.pipeline_mode<synchronous>, transform_indices = @transform_1, window_bounds = array<i64: 2, 8, 8>}, {pipeline_mode = #tpu.pipeline_mode<synchronous>, transform_indices = @transform_2, window_bounds = array<i64: 64, 8>}, {pipeline_mode = #tpu.pipeline_mode<synchronous>, transform_indices = @transform_3, window_bounds = array<i64: 16, 128>}, {pipeline_mode = #tpu.pipeline_mode<synchronous>, transform_indices = @transform_4, window_bounds = array<i64: 64, 64>}, {pipeline_mode = #tpu.pipeline_mode<synchronous>, transform_indices = @transform_5, window_bounds = array<i64: 128, 128>}, {pipeline_mode = #tpu.pipeline_mode<synchronous>, transform_indices = @transform_6, window_bounds = array<i64: 192, 64>}, {pipeline_mode = #tpu.pipeline_mode<synchronous>, transform_indices = @transform_7, window_bounds = array<i64: 2, 192>}, {pipeline_mode = #tpu.pipeline_mode<synchronous>, transform_indices = @transform_8, window_bounds = array<i64: 8, 64>}, {pipeline_mode = #tpu.pipeline_mode<synchronous>, transform_indices = @transform_9, window_bounds = array<i64: 2, 64, 64>}, {pipeline_mode = #tpu.pipeline_mode<synchronous>, transform_indices = @transform_10, window_bounds = array<i64: 2, 64>}, {pipeline_mode = #tpu.pipeline_mode<synchronous>, transform_indices = @transform_11, window_bounds = array<i64: 9, 128, 128>}, {pipeline_mode = #tpu.pipeline_mode<synchronous>, transform_indices = @transform_12, window_bounds = array<i64: 2, 64, 64>}, {transform_indices = @transform_13, window_bounds = array<i64: 3>}, {transform_indices = @transform_14, window_bounds = array<i64: 2>}, {pipeline_mode = #tpu.pipeline_mode<synchronous>, transform_indices = @transform_15, window_bounds = array<i64: 16, 64>}]} {
    %c0 = arith.constant 0 : index
    %c0_0 = arith.constant 0 : index
    %0 = vector.load %arg1[%c0, %c0_0] : memref<16x64xf32, #tpu.memory_space<vmem>>, vector<16x64xf32>
    %c0_1 = arith.constant 0 : index
    %c0_2 = arith.constant 0 : index
    %1 = vector.load %arg9[%c0_1, %c0_2] : memref<8x64xf32, #tpu.memory_space<vmem>>, vector<8x64xf32>
    %2 = vector.extract_strided_slice %1 {offsets = [0, 0], sizes = [1, 64], strides = [1, 1]} : vector<8x64xf32> to vector<1x64xf32>
    %3 = vector.extract_strided_slice %1 {offsets = [1, 0], sizes = [1, 64], strides = [1, 1]} : vector<8x64xf32> to vector<1x64xf32>
    %4 = vector.extract_strided_slice %1 {offsets = [2, 0], sizes = [1, 64], strides = [1, 1]} : vector<8x64xf32> to vector<1x64xf32>
    %5 = vector.extract_strided_slice %1 {offsets = [3, 0], sizes = [1, 64], strides = [1, 1]} : vector<8x64xf32> to vector<1x64xf32>
    %6 = vector.extract_strided_slice %1 {offsets = [4, 0], sizes = [1, 64], strides = [1, 1]} : vector<8x64xf32> to vector<1x64xf32>
    %7 = vector.extract_strided_slice %1 {offsets = [5, 0], sizes = [1, 64], strides = [1, 1]} : vector<8x64xf32> to vector<1x64xf32>
    %8 = vector.extract_strided_slice %1 {offsets = [6, 0], sizes = [1, 64], strides = [1, 1]} : vector<8x64xf32> to vector<1x64xf32>
    %9 = vector.extract_strided_slice %1 {offsets = [7, 0], sizes = [1, 64], strides = [1, 1]} : vector<8x64xf32> to vector<1x64xf32>
    %cst = arith.constant dense<0.000000e+00> : vector<16xf32>
    %10 = vector.multi_reduction <add>, %0, %cst [1] : vector<16x64xf32> to vector<16xf32>
    %11 = vector.shape_cast %10 : vector<16xf32> to vector<16x1xf32>
    %cst_3 = arith.constant 6.400000e+01 : f32
    %12 = vector.broadcast %cst_3 : f32 to vector<16x1xf32>
    %13 = arith.divf %11, %12 : vector<16x1xf32>
    %14 = vector.broadcast %13 : vector<16x1xf32> to vector<16x64xf32>
    %15 = arith.subf %0, %14 : vector<16x64xf32>
    %16 = arith.mulf %15, %15 : vector<16x64xf32>
    %cst_4 = arith.constant dense<0.000000e+00> : vector<16xf32>
    %17 = vector.multi_reduction <add>, %16, %cst_4 [1] : vector<16x64xf32> to vector<16xf32>
    %18 = vector.shape_cast %17 : vector<16xf32> to vector<16x1xf32>
    %cst_5 = arith.constant 6.400000e+01 : f32
    %19 = vector.broadcast %cst_5 : f32 to vector<16x1xf32>
    %20 = arith.divf %18, %19 : vector<16x1xf32>
    %21 = vector.broadcast %13 : vector<16x1xf32> to vector<16x64xf32>
    %22 = arith.subf %0, %21 : vector<16x64xf32>
    %cst_6 = arith.constant 9.99999974E-6 : f32
    %23 = vector.broadcast %cst_6 : f32 to vector<16x1xf32>
    %24 = arith.addf %20, %23 : vector<16x1xf32>
    %25 = math.rsqrt %24 : vector<16x1xf32>
    %26 = vector.broadcast %25 : vector<16x1xf32> to vector<16x64xf32>
    %27 = arith.mulf %22, %26 : vector<16x64xf32>
    %28 = vector.broadcast %2 : vector<1x64xf32> to vector<16x64xf32>
    %29 = arith.mulf %27, %28 : vector<16x64xf32>
    %30 = vector.broadcast %3 : vector<1x64xf32> to vector<16x64xf32>
    %31 = arith.addf %29, %30 : vector<16x64xf32>
    %32 = math.absf %31 : vector<16x64xf32>
    %cst_7 = arith.constant dense<0xFF800000> : vector<16xf32>
    %33 = vector.multi_reduction <maximumf>, %32, %cst_7 [1] : vector<16x64xf32> to vector<16xf32>
    %34 = vector.shape_cast %33 : vector<16xf32> to vector<16x1xf32>
    %cst_8 = arith.constant 9.99999974E-6 : f32
    %35 = vector.broadcast %cst_8 : f32 to vector<16x1xf32>
    %36 = arith.maximumf %34, %35 : vector<16x1xf32>
    %cst_9 = arith.constant 1.270000e+02 : f32
    %37 = vector.broadcast %cst_9 : f32 to vector<16x1xf32>
    %38 = arith.divf %37, %36 : vector<16x1xf32>
    %39 = vector.broadcast %38 : vector<16x1xf32> to vector<16x64xf32>
    %40 = arith.mulf %31, %39 : vector<16x64xf32>
    %41 = math.roundeven %40 : vector<16x64xf32>
    %cst_10 = arith.constant -1.280000e+02 : f32
    %cst_11 = arith.constant 1.270000e+02 : f32
    %42 = vector.broadcast %cst_10 : f32 to vector<16x64xf32>
    %43 = arith.maximumf %42, %41 : vector<16x64xf32>
    %44 = vector.broadcast %cst_11 : f32 to vector<16x64xf32>
    %45 = arith.minimumf %44, %43 : vector<16x64xf32>
    %46 = arith.truncf %45 : vector<16x64xf32> to vector<16x64xbf16>
    %cst_12 = arith.constant 0.00787401571 : f32
    %47 = vector.broadcast %cst_12 : f32 to vector<16x1xf32>
    %48 = arith.mulf %36, %47 : vector<16x1xf32>
    %c0_13 = arith.constant 0 : index
    %c0_14 = arith.constant 0 : index
    %49 = vector.load %arg8[%c0_13, %c0_14] : memref<2x192xf32, #tpu.memory_space<vmem>>, vector<2x192xf32>
    %c0_15 = arith.constant 0 : index
    %c0_16 = arith.constant 0 : index
    %50 = vector.load %arg7[%c0_15, %c0_16] : memref<192x64xbf16, #tpu.memory_space<vmem>>, vector<192x64xbf16>
    %cst_17 = arith.constant dense<0.000000e+00> : vector<16x192xf32>
    %51 = tpu.matmul %46, %50, %cst_17 {dimension_numbers = #tpu.dot_dimension_numbers<[1], [1], [0], [0], [0, 0, 1, 0], [], []>} : vector<16x64xbf16>, vector<192x64xbf16>, vector<16x192xf32> -> vector<16x192xf32>
    %52 = vector.broadcast %48 : vector<16x1xf32> to vector<16x192xf32>
    %53 = arith.mulf %51, %52 : vector<16x192xf32>
    %54 = vector.extract_strided_slice %49 {offsets = [0, 0], sizes = [1, 192], strides = [1, 1]} : vector<2x192xf32> to vector<1x192xf32>
    %55 = vector.broadcast %54 : vector<1x192xf32> to vector<16x192xf32>
    %56 = arith.mulf %53, %55 : vector<16x192xf32>
    %57 = vector.extract_strided_slice %49 {offsets = [1, 0], sizes = [1, 192], strides = [1, 1]} : vector<2x192xf32> to vector<1x192xf32>
    %58 = vector.broadcast %57 : vector<1x192xf32> to vector<16x192xf32>
    %59 = arith.addf %56, %58 : vector<16x192xf32>
    %60 = vector.extract_strided_slice %59 {offsets = [0, 0], sizes = [8, 24], strides = [1, 1]} : vector<16x192xf32> to vector<8x24xf32>
    %c0_18 = arith.constant 0 : index
    %c0_19 = arith.constant 0 : index
    %c0_20 = arith.constant 0 : index
    %61 = vector.load %arg17[%c0_18, %c0_19, %c0_20] : memref<2x64x24xf32, #tpu.memory_space<vmem>>, vector<1x8x24xf32>
    %62 = vector.shape_cast %61 : vector<1x8x24xf32> to vector<8x24xf32>
    %63 = vector.shape_cast %60 : vector<8x24xf32> to vector<1x8x24xf32>
    tpu.vector_store %arg17[%c0_18, %c0_19, %c0_20], %63 {strides = array<i32>} : memref<2x64x24xf32, #tpu.memory_space<vmem>>, vector<1x8x24xf32>,
    %64 = vector.extract_strided_slice %59 {offsets = [0, 24], sizes = [8, 24], strides = [1, 1]} : vector<16x192xf32> to vector<8x24xf32>
    %c0_21 = arith.constant 0 : index
    %c8 = arith.constant 8 : index
    %c0_22 = arith.constant 0 : index
    %65 = vector.load %arg17[%c0_21, %c8, %c0_22] : memref<2x64x24xf32, #tpu.memory_space<vmem>>, vector<1x8x24xf32>
    %66 = vector.shape_cast %65 : vector<1x8x24xf32> to vector<8x24xf32>
    %67 = vector.shape_cast %64 : vector<8x24xf32> to vector<1x8x24xf32>
    tpu.vector_store %arg17[%c0_21, %c8, %c0_22], %67 {strides = array<i32>} : memref<2x64x24xf32, #tpu.memory_space<vmem>>, vector<1x8x24xf32>,
    %68 = vector.extract_strided_slice %59 {offsets = [0, 48], sizes = [8, 24], strides = [1, 1]} : vector<16x192xf32> to vector<8x24xf32>
    %c0_23 = arith.constant 0 : index
    %c16 = arith.constant 16 : index
    %c0_24 = arith.constant 0 : index
    %69 = vector.load %arg17[%c0_23, %c16, %c0_24] : memref<2x64x24xf32, #tpu.memory_space<vmem>>, vector<1x8x24xf32>
    %70 = vector.shape_cast %69 : vector<1x8x24xf32> to vector<8x24xf32>
    %71 = vector.shape_cast %68 : vector<8x24xf32> to vector<1x8x24xf32>
    tpu.vector_store %arg17[%c0_23, %c16, %c0_24], %71 {strides = array<i32>} : memref<2x64x24xf32, #tpu.memory_space<vmem>>, vector<1x8x24xf32>,
    %72 = vector.extract_strided_slice %59 {offsets = [0, 72], sizes = [8, 24], strides = [1, 1]} : vector<16x192xf32> to vector<8x24xf32>
    %c0_25 = arith.constant 0 : index
    %c24 = arith.constant 24 : index
    %c0_26 = arith.constant 0 : index
    %73 = vector.load %arg17[%c0_25, %c24, %c0_26] : memref<2x64x24xf32, #tpu.memory_space<vmem>>, vector<1x8x24xf32>
    %74 = vector.shape_cast %73 : vector<1x8x24xf32> to vector<8x24xf32>
    %75 = vector.shape_cast %72 : vector<8x24xf32> to vector<1x8x24xf32>
    tpu.vector_store %arg17[%c0_25, %c24, %c0_26], %75 {strides = array<i32>} : memref<2x64x24xf32, #tpu.memory_space<vmem>>, vector<1x8x24xf32>,
    %76 = vector.extract_strided_slice %59 {offsets = [0, 96], sizes = [8, 24], strides = [1, 1]} : vector<16x192xf32> to vector<8x24xf32>
    %c0_27 = arith.constant 0 : index
    %c32 = arith.constant 32 : index
    %c0_28 = arith.constant 0 : index
    %77 = vector.load %arg17[%c0_27, %c32, %c0_28] : memref<2x64x24xf32, #tpu.memory_space<vmem>>, vector<1x8x24xf32>
    %78 = vector.shape_cast %77 : vector<1x8x24xf32> to vector<8x24xf32>
    %79 = vector.shape_cast %76 : vector<8x24xf32> to vector<1x8x24xf32>
    tpu.vector_store %arg17[%c0_27, %c32, %c0_28], %79 {strides = array<i32>} : memref<2x64x24xf32, #tpu.memory_space<vmem>>, vector<1x8x24xf32>,
    %80 = vector.extract_strided_slice %59 {offsets = [0, 120], sizes = [8, 24], strides = [1, 1]} : vector<16x192xf32> to vector<8x24xf32>
    %c0_29 = arith.constant 0 : index
    %c40 = arith.constant 40 : index
    %c0_30 = arith.constant 0 : index
    %81 = vector.load %arg17[%c0_29, %c40, %c0_30] : memref<2x64x24xf32, #tpu.memory_space<vmem>>, vector<1x8x24xf32>
    %82 = vector.shape_cast %81 : vector<1x8x24xf32> to vector<8x24xf32>
    %83 = vector.shape_cast %80 : vector<8x24xf32> to vector<1x8x24xf32>
    tpu.vector_store %arg17[%c0_29, %c40, %c0_30], %83 {strides = array<i32>} : memref<2x64x24xf32, #tpu.memory_space<vmem>>, vector<1x8x24xf32>,
    %84 = vector.extract_strided_slice %59 {offsets = [0, 144], sizes = [8, 24], strides = [1, 1]} : vector<16x192xf32> to vector<8x24xf32>
    %c0_31 = arith.constant 0 : index
    %c48 = arith.constant 48 : index
    %c0_32 = arith.constant 0 : index
    %85 = vector.load %arg17[%c0_31, %c48, %c0_32] : memref<2x64x24xf32, #tpu.memory_space<vmem>>, vector<1x8x24xf32>
    %86 = vector.shape_cast %85 : vector<1x8x24xf32> to vector<8x24xf32>
    %87 = vector.shape_cast %84 : vector<8x24xf32> to vector<1x8x24xf32>
    tpu.vector_store %arg17[%c0_31, %c48, %c0_32], %87 {strides = array<i32>} : memref<2x64x24xf32, #tpu.memory_space<vmem>>, vector<1x8x24xf32>,
    %88 = vector.extract_strided_slice %59 {offsets = [0, 168], sizes = [8, 24], strides = [1, 1]} : vector<16x192xf32> to vector<8x24xf32>
    %c0_33 = arith.constant 0 : index
    %c56 = arith.constant 56 : index
    %c0_34 = arith.constant 0 : index
    %89 = vector.load %arg17[%c0_33, %c56, %c0_34] : memref<2x64x24xf32, #tpu.memory_space<vmem>>, vector<1x8x24xf32>
    %90 = vector.shape_cast %89 : vector<1x8x24xf32> to vector<8x24xf32>
    %91 = vector.shape_cast %88 : vector<8x24xf32> to vector<1x8x24xf32>
    tpu.vector_store %arg17[%c0_33, %c56, %c0_34], %91 {strides = array<i32>} : memref<2x64x24xf32, #tpu.memory_space<vmem>>, vector<1x8x24xf32>,
    %92 = vector.extract_strided_slice %59 {offsets = [8, 0], sizes = [8, 24], strides = [1, 1]} : vector<16x192xf32> to vector<8x24xf32>
    %c1 = arith.constant 1 : index
    %c0_35 = arith.constant 0 : index
    %c0_36 = arith.constant 0 : index
    %93 = vector.load %arg17[%c1, %c0_35, %c0_36] : memref<2x64x24xf32, #tpu.memory_space<vmem>>, vector<1x8x24xf32>
    %94 = vector.shape_cast %93 : vector<1x8x24xf32> to vector<8x24xf32>
    %95 = vector.shape_cast %92 : vector<8x24xf32> to vector<1x8x24xf32>
    tpu.vector_store %arg17[%c1, %c0_35, %c0_36], %95 {strides = array<i32>} : memref<2x64x24xf32, #tpu.memory_space<vmem>>, vector<1x8x24xf32>,
    %96 = vector.extract_strided_slice %59 {offsets = [8, 24], sizes = [8, 24], strides = [1, 1]} : vector<16x192xf32> to vector<8x24xf32>
    %c1_37 = arith.constant 1 : index
    %c8_38 = arith.constant 8 : index
    %c0_39 = arith.constant 0 : index
    %97 = vector.load %arg17[%c1_37, %c8_38, %c0_39] : memref<2x64x24xf32, #tpu.memory_space<vmem>>, vector<1x8x24xf32>
    %98 = vector.shape_cast %97 : vector<1x8x24xf32> to vector<8x24xf32>
    %99 = vector.shape_cast %96 : vector<8x24xf32> to vector<1x8x24xf32>
    tpu.vector_store %arg17[%c1_37, %c8_38, %c0_39], %99 {strides = array<i32>} : memref<2x64x24xf32, #tpu.memory_space<vmem>>, vector<1x8x24xf32>,
    %100 = vector.extract_strided_slice %59 {offsets = [8, 48], sizes = [8, 24], strides = [1, 1]} : vector<16x192xf32> to vector<8x24xf32>
    %c1_40 = arith.constant 1 : index
    %c16_41 = arith.constant 16 : index
    %c0_42 = arith.constant 0 : index
    %101 = vector.load %arg17[%c1_40, %c16_41, %c0_42] : memref<2x64x24xf32, #tpu.memory_space<vmem>>, vector<1x8x24xf32>
    %102 = vector.shape_cast %101 : vector<1x8x24xf32> to vector<8x24xf32>
    %103 = vector.shape_cast %100 : vector<8x24xf32> to vector<1x8x24xf32>
    tpu.vector_store %arg17[%c1_40, %c16_41, %c0_42], %103 {strides = array<i32>} : memref<2x64x24xf32, #tpu.memory_space<vmem>>, vector<1x8x24xf32>,
    %104 = vector.extract_strided_slice %59 {offsets = [8, 72], sizes = [8, 24], strides = [1, 1]} : vector<16x192xf32> to vector<8x24xf32>
    %c1_43 = arith.constant 1 : index
    %c24_44 = arith.constant 24 : index
    %c0_45 = arith.constant 0 : index
    %105 = vector.load %arg17[%c1_43, %c24_44, %c0_45] : memref<2x64x24xf32, #tpu.memory_space<vmem>>, vector<1x8x24xf32>
    %106 = vector.shape_cast %105 : vector<1x8x24xf32> to vector<8x24xf32>
    %107 = vector.shape_cast %104 : vector<8x24xf32> to vector<1x8x24xf32>
    tpu.vector_store %arg17[%c1_43, %c24_44, %c0_45], %107 {strides = array<i32>} : memref<2x64x24xf32, #tpu.memory_space<vmem>>, vector<1x8x24xf32>,
    %108 = vector.extract_strided_slice %59 {offsets = [8, 96], sizes = [8, 24], strides = [1, 1]} : vector<16x192xf32> to vector<8x24xf32>
    %c1_46 = arith.constant 1 : index
    %c32_47 = arith.constant 32 : index
    %c0_48 = arith.constant 0 : index
    %109 = vector.load %arg17[%c1_46, %c32_47, %c0_48] : memref<2x64x24xf32, #tpu.memory_space<vmem>>, vector<1x8x24xf32>
    %110 = vector.shape_cast %109 : vector<1x8x24xf32> to vector<8x24xf32>
    %111 = vector.shape_cast %108 : vector<8x24xf32> to vector<1x8x24xf32>
    tpu.vector_store %arg17[%c1_46, %c32_47, %c0_48], %111 {strides = array<i32>} : memref<2x64x24xf32, #tpu.memory_space<vmem>>, vector<1x8x24xf32>,
    %112 = vector.extract_strided_slice %59 {offsets = [8, 120], sizes = [8, 24], strides = [1, 1]} : vector<16x192xf32> to vector<8x24xf32>
    %c1_49 = arith.constant 1 : index
    %c40_50 = arith.constant 40 : index
    %c0_51 = arith.constant 0 : index
    %113 = vector.load %arg17[%c1_49, %c40_50, %c0_51] : memref<2x64x24xf32, #tpu.memory_space<vmem>>, vector<1x8x24xf32>
    %114 = vector.shape_cast %113 : vector<1x8x24xf32> to vector<8x24xf32>
    %115 = vector.shape_cast %112 : vector<8x24xf32> to vector<1x8x24xf32>
    tpu.vector_store %arg17[%c1_49, %c40_50, %c0_51], %115 {strides = array<i32>} : memref<2x64x24xf32, #tpu.memory_space<vmem>>, vector<1x8x24xf32>,
    %116 = vector.extract_strided_slice %59 {offsets = [8, 144], sizes = [8, 24], strides = [1, 1]} : vector<16x192xf32> to vector<8x24xf32>
    %c1_52 = arith.constant 1 : index
    %c48_53 = arith.constant 48 : index
    %c0_54 = arith.constant 0 : index
    %117 = vector.load %arg17[%c1_52, %c48_53, %c0_54] : memref<2x64x24xf32, #tpu.memory_space<vmem>>, vector<1x8x24xf32>
    %118 = vector.shape_cast %117 : vector<1x8x24xf32> to vector<8x24xf32>
    %119 = vector.shape_cast %116 : vector<8x24xf32> to vector<1x8x24xf32>
    tpu.vector_store %arg17[%c1_52, %c48_53, %c0_54], %119 {strides = array<i32>} : memref<2x64x24xf32, #tpu.memory_space<vmem>>, vector<1x8x24xf32>,
    %120 = vector.extract_strided_slice %59 {offsets = [8, 168], sizes = [8, 24], strides = [1, 1]} : vector<16x192xf32> to vector<8x24xf32>
    %c1_55 = arith.constant 1 : index
    %c56_56 = arith.constant 56 : index
    %c0_57 = arith.constant 0 : index
    %121 = vector.load %arg17[%c1_55, %c56_56, %c0_57] : memref<2x64x24xf32, #tpu.memory_space<vmem>>, vector<1x8x24xf32>
    %122 = vector.shape_cast %121 : vector<1x8x24xf32> to vector<8x24xf32>
    %123 = vector.shape_cast %120 : vector<8x24xf32> to vector<1x8x24xf32>
    tpu.vector_store %arg17[%c1_55, %c56_56, %c0_57], %123 {strides = array<i32>} : memref<2x64x24xf32, #tpu.memory_space<vmem>>, vector<1x8x24xf32>,
    %c0_58 = arith.constant 0 : index
    %c0_59 = arith.constant 0 : index
    %c0_60 = arith.constant 0 : index
    %124 = vector.load %arg2[%c0_58, %c0_59, %c0_60] : memref<2x8x8xf32, #tpu.memory_space<vmem>>, vector<1x8x8xf32>
    %125 = vector.shape_cast %124 : vector<1x8x8xf32> to vector<8x8xf32>
    %c1_61 = arith.constant 1 : index
    %c0_62 = arith.constant 0 : index
    %c0_63 = arith.constant 0 : index
    %126 = vector.load %arg2[%c1_61, %c0_62, %c0_63] : memref<2x8x8xf32, #tpu.memory_space<vmem>>, vector<1x8x8xf32>
    %127 = vector.shape_cast %126 : vector<1x8x8xf32> to vector<8x8xf32>
    %128 = tpu.concatenate %125, %127 in 1 : vector<8x8xf32>, vector<8x8xf32> -> vector<8x16xf32>
    %c0_64 = arith.constant 0 : index
    %c0_65 = arith.constant 0 : index
    %129 = vector.load %arg3[%c0_64, %c0_65] : memref<64x8xf32, #tpu.memory_space<vmem>>, vector<64x8xf32>
    %cst_66 = arith.constant dense<0.000000e+00> : vector<64x16xf32>
    %130 = tpu.matmul %129, %128, %cst_66 {dimension_numbers = #tpu.dot_dimension_numbers<[1], [0], [0], [1], [0, 0, 1, 1], [], []>} : vector<64x8xf32>, vector<8x16xf32>, vector<64x16xf32> -> vector<64x16xf32>
    %c0_67 = arith.constant 0 : index
    %c0_68 = arith.constant 0 : index
    %131 = vector.load %arg4[%c0_67, %c0_68] : memref<16x128xf32, #tpu.memory_space<vmem>>, vector<16x128xf32>
    %cst_69 = arith.constant dense<0.000000e+00> : vector<64x128xf32>
    %132 = tpu.matmul %130, %131, %cst_69 {dimension_numbers = #tpu.dot_dimension_numbers<[1], [0], [0], [1], [0, 0, 1, 1], [], []>} : vector<64x16xf32>, vector<16x128xf32>, vector<64x128xf32> -> vector<64x128xf32>
    %c0_70 = arith.constant 0 : index
    %c0_71 = arith.constant 0 : index
    %c0_72 = arith.constant 0 : index
    %133 = vector.load %arg13[%c0_70, %c0_71, %c0_72] : memref<2x64x64xf32, #tpu.memory_space<vmem>>, vector<1x64x64xf32>
    %134 = vector.shape_cast %133 : vector<1x64x64xf32> to vector<64x64xf32>
    %c1_73 = arith.constant 1 : index
    %c0_74 = arith.constant 0 : index
    %c0_75 = arith.constant 0 : index
    %135 = vector.load %arg13[%c1_73, %c0_74, %c0_75] : memref<2x64x64xf32, #tpu.memory_space<vmem>>, vector<1x64x64xf32>
    %136 = vector.shape_cast %135 : vector<1x64x64xf32> to vector<64x64xf32>
    %c0_76 = arith.constant 0 : index
    %c0_77 = arith.constant 0 : index
    %c0_78 = arith.constant 0 : index
    %137 = vector.load %arg12[%c0_76, %c0_77, %c0_78] : memref<9x128x128xf32, #tpu.memory_space<vmem>>, vector<1x128x128xf32>
    %138 = vector.shape_cast %137 : vector<1x128x128xf32> to vector<128x128xf32>
    %cst_79 = arith.constant dense<0.000000e+00> : vector<64x128xf32>
    %139 = tpu.matmul %132, %138, %cst_79 {dimension_numbers = #tpu.dot_dimension_numbers<[1], [0], [0], [1], [0, 0, 1, 1], [], []>} : vector<64x128xf32>, vector<128x128xf32>, vector<64x128xf32> -> vector<64x128xf32>
    %c1_80 = arith.constant 1 : index
    %c0_81 = arith.constant 0 : index
    %c0_82 = arith.constant 0 : index
    %140 = vector.load %arg12[%c1_80, %c0_81, %c0_82] : memref<9x128x128xf32, #tpu.memory_space<vmem>>, vector<1x128x128xf32>
    %141 = vector.shape_cast %140 : vector<1x128x128xf32> to vector<128x128xf32>
    %cst_83 = arith.constant dense<0.000000e+00> : vector<64x128xf32>
    %142 = tpu.matmul %132, %141, %cst_83 {dimension_numbers = #tpu.dot_dimension_numbers<[1], [0], [0], [1], [0, 0, 1, 1], [], []>} : vector<64x128xf32>, vector<128x128xf32>, vector<64x128xf32> -> vector<64x128xf32>
    %c2 = arith.constant 2 : index
    %c0_84 = arith.constant 0 : index
    %c0_85 = arith.constant 0 : index
    %143 = vector.load %arg12[%c2, %c0_84, %c0_85] : memref<9x128x128xf32, #tpu.memory_space<vmem>>, vector<1x128x128xf32>
    %144 = vector.shape_cast %143 : vector<1x128x128xf32> to vector<128x128xf32>
    %cst_86 = arith.constant dense<0.000000e+00> : vector<64x128xf32>
    %145 = tpu.matmul %132, %144, %cst_86 {dimension_numbers = #tpu.dot_dimension_numbers<[1], [0], [0], [1], [0, 0, 1, 1], [], []>} : vector<64x128xf32>, vector<128x128xf32>, vector<64x128xf32> -> vector<64x128xf32>
    %cst_87 = arith.constant dense<0.000000e+00> : vector<64x128xf32>
    %146 = tpu.matmul %134, %139, %cst_87 {dimension_numbers = #tpu.dot_dimension_numbers<[1], [0], [0], [1], [0, 0, 1, 1], [], []>} : vector<64x64xf32>, vector<64x128xf32>, vector<64x128xf32> -> vector<64x128xf32>
    %147 = arith.addf %146, %142 : vector<64x128xf32>
    %cst_88 = arith.constant dense<0.000000e+00> : vector<64x128xf32>
    %148 = tpu.matmul %136, %145, %cst_88 {dimension_numbers = #tpu.dot_dimension_numbers<[1], [0], [0], [1], [0, 0, 1, 1], [], []>} : vector<64x64xf32>, vector<64x128xf32>, vector<64x128xf32> -> vector<64x128xf32>
    %149 = arith.addf %147, %148 : vector<64x128xf32>
    %c0_89 = arith.constant 0 : index
    %150 = memref.load %arg14[%c0_89] : memref<3xf32, #tpu.memory_space<smem>>
    %151 = vector.broadcast %150 : f32 to vector<64x128xf32>
    %152 = arith.addf %149, %151 : vector<64x128xf32>
    %cst_90 = arith.constant 5.000000e-01 : f32
    %153 = vector.broadcast %cst_90 : f32 to vector<64x128xf32>
    %154 = arith.mulf %153, %152 : vector<64x128xf32>
    %cst_91 = arith.constant 4.471500e-02 : f32
    %155 = vector.broadcast %cst_91 : f32 to vector<64x128xf32>
    %156 = arith.mulf %155, %152 : vector<64x128xf32>
    %157 = arith.mulf %156, %152 : vector<64x128xf32>
    %158 = arith.mulf %157, %152 : vector<64x128xf32>
    %159 = arith.addf %152, %158 : vector<64x128xf32>
    %cst_92 = arith.constant 0.797884583 : f32
    %160 = vector.broadcast %cst_92 : f32 to vector<64x128xf32>
    %161 = arith.mulf %160, %159 : vector<64x128xf32>
    %162 = math.tanh %161 : vector<64x128xf32>
    %cst_93 = arith.constant 1.000000e+00 : f32
    %163 = vector.broadcast %cst_93 : f32 to vector<64x128xf32>
    %164 = arith.addf %163, %162 : vector<64x128xf32>
    %165 = arith.mulf %154, %164 : vector<64x128xf32>
    %c3 = arith.constant 3 : index
    %c0_94 = arith.constant 0 : index
    %c0_95 = arith.constant 0 : index
    %166 = vector.load %arg12[%c3, %c0_94, %c0_95] : memref<9x128x128xf32, #tpu.memory_space<vmem>>, vector<1x128x128xf32>
    %167 = vector.shape_cast %166 : vector<1x128x128xf32> to vector<128x128xf32>
    %cst_96 = arith.constant dense<0.000000e+00> : vector<64x128xf32>
    %168 = tpu.matmul %165, %167, %cst_96 {dimension_numbers = #tpu.dot_dimension_numbers<[1], [0], [0], [1], [0, 0, 1, 1], [], []>} : vector<64x128xf32>, vector<128x128xf32>, vector<64x128xf32> -> vector<64x128xf32>
    %c4 = arith.constant 4 : index
    %c0_97 = arith.constant 0 : index
    %c0_98 = arith.constant 0 : index
    %169 = vector.load %arg12[%c4, %c0_97, %c0_98] : memref<9x128x128xf32, #tpu.memory_space<vmem>>, vector<1x128x128xf32>
    %170 = vector.shape_cast %169 : vector<1x128x128xf32> to vector<128x128xf32>
    %cst_99 = arith.constant dense<0.000000e+00> : vector<64x128xf32>
    %171 = tpu.matmul %165, %170, %cst_99 {dimension_numbers = #tpu.dot_dimension_numbers<[1], [0], [0], [1], [0, 0, 1, 1], [], []>} : vector<64x128xf32>, vector<128x128xf32>, vector<64x128xf32> -> vector<64x128xf32>
    %c5 = arith.constant 5 : index
    %c0_100 = arith.constant 0 : index
    %c0_101 = arith.constant 0 : index
    %172 = vector.load %arg12[%c5, %c0_100, %c0_101] : memref<9x128x128xf32, #tpu.memory_space<vmem>>, vector<1x128x128xf32>
    %173 = vector.shape_cast %172 : vector<1x128x128xf32> to vector<128x128xf32>
    %cst_102 = arith.constant dense<0.000000e+00> : vector<64x128xf32>
    %174 = tpu.matmul %165, %173, %cst_102 {dimension_numbers = #tpu.dot_dimension_numbers<[1], [0], [0], [1], [0, 0, 1, 1], [], []>} : vector<64x128xf32>, vector<128x128xf32>, vector<64x128xf32> -> vector<64x128xf32>
    %cst_103 = arith.constant dense<0.000000e+00> : vector<64x128xf32>
    %175 = tpu.matmul %134, %168, %cst_103 {dimension_numbers = #tpu.dot_dimension_numbers<[1], [0], [0], [1], [0, 0, 1, 1], [], []>} : vector<64x64xf32>, vector<64x128xf32>, vector<64x128xf32> -> vector<64x128xf32>
    %176 = arith.addf %175, %171 : vector<64x128xf32>
    %cst_104 = arith.constant dense<0.000000e+00> : vector<64x128xf32>
    %177 = tpu.matmul %136, %174, %cst_104 {dimension_numbers = #tpu.dot_dimension_numbers<[1], [0], [0], [1], [0, 0, 1, 1], [], []>} : vector<64x64xf32>, vector<64x128xf32>, vector<64x128xf32> -> vector<64x128xf32>
    %178 = arith.addf %176, %177 : vector<64x128xf32>
    %c1_105 = arith.constant 1 : index
    %179 = memref.load %arg14[%c1_105] : memref<3xf32, #tpu.memory_space<smem>>
    %180 = vector.broadcast %179 : f32 to vector<64x128xf32>
    %181 = arith.addf %178, %180 : vector<64x128xf32>
    %cst_106 = arith.constant 5.000000e-01 : f32
    %182 = vector.broadcast %cst_106 : f32 to vector<64x128xf32>
    %183 = arith.mulf %182, %181 : vector<64x128xf32>
    %cst_107 = arith.constant 4.471500e-02 : f32
    %184 = vector.broadcast %cst_107 : f32 to vector<64x128xf32>
    %185 = arith.mulf %184, %181 : vector<64x128xf32>
    %186 = arith.mulf %185, %181 : vector<64x128xf32>
    %187 = arith.mulf %186, %181 : vector<64x128xf32>
    %188 = arith.addf %181, %187 : vector<64x128xf32>
    %cst_108 = arith.constant 0.797884583 : f32
    %189 = vector.broadcast %cst_108 : f32 to vector<64x128xf32>
    %190 = arith.mulf %189, %188 : vector<64x128xf32>
    %191 = math.tanh %190 : vector<64x128xf32>
    %cst_109 = arith.constant 1.000000e+00 : f32
    %192 = vector.broadcast %cst_109 : f32 to vector<64x128xf32>
    %193 = arith.addf %192, %191 : vector<64x128xf32>
    %194 = arith.mulf %183, %193 : vector<64x128xf32>
    %c6 = arith.constant 6 : index
    %c0_110 = arith.constant 0 : index
    %c0_111 = arith.constant 0 : index
    %195 = vector.load %arg12[%c6, %c0_110, %c0_111] : memref<9x128x128xf32, #tpu.memory_space<vmem>>, vector<1x128x128xf32>
    %196 = vector.shape_cast %195 : vector<1x128x128xf32> to vector<128x128xf32>
    %cst_112 = arith.constant dense<0.000000e+00> : vector<64x128xf32>
    %197 = tpu.matmul %194, %196, %cst_112 {dimension_numbers = #tpu.dot_dimension_numbers<[1], [0], [0], [1], [0, 0, 1, 1], [], []>} : vector<64x128xf32>, vector<128x128xf32>, vector<64x128xf32> -> vector<64x128xf32>
    %c7 = arith.constant 7 : index
    %c0_113 = arith.constant 0 : index
    %c0_114 = arith.constant 0 : index
    %198 = vector.load %arg12[%c7, %c0_113, %c0_114] : memref<9x128x128xf32, #tpu.memory_space<vmem>>, vector<1x128x128xf32>
    %199 = vector.shape_cast %198 : vector<1x128x128xf32> to vector<128x128xf32>
    %cst_115 = arith.constant dense<0.000000e+00> : vector<64x128xf32>
    %200 = tpu.matmul %194, %199, %cst_115 {dimension_numbers = #tpu.dot_dimension_numbers<[1], [0], [0], [1], [0, 0, 1, 1], [], []>} : vector<64x128xf32>, vector<128x128xf32>, vector<64x128xf32> -> vector<64x128xf32>
    %c8_116 = arith.constant 8 : index
    %c0_117 = arith.constant 0 : index
    %c0_118 = arith.constant 0 : index
    %201 = vector.load %arg12[%c8_116, %c0_117, %c0_118] : memref<9x128x128xf32, #tpu.memory_space<vmem>>, vector<1x128x128xf32>
    %202 = vector.shape_cast %201 : vector<1x128x128xf32> to vector<128x128xf32>
    %cst_119 = arith.constant dense<0.000000e+00> : vector<64x128xf32>
    %203 = tpu.matmul %194, %202, %cst_119 {dimension_numbers = #tpu.dot_dimension_numbers<[1], [0], [0], [1], [0, 0, 1, 1], [], []>} : vector<64x128xf32>, vector<128x128xf32>, vector<64x128xf32> -> vector<64x128xf32>
    %cst_120 = arith.constant dense<0.000000e+00> : vector<64x128xf32>
    %204 = tpu.matmul %134, %197, %cst_120 {dimension_numbers = #tpu.dot_dimension_numbers<[1], [0], [0], [1], [0, 0, 1, 1], [], []>} : vector<64x64xf32>, vector<64x128xf32>, vector<64x128xf32> -> vector<64x128xf32>
    %205 = arith.addf %204, %200 : vector<64x128xf32>
    %cst_121 = arith.constant dense<0.000000e+00> : vector<64x128xf32>
    %206 = tpu.matmul %136, %203, %cst_121 {dimension_numbers = #tpu.dot_dimension_numbers<[1], [0], [0], [1], [0, 0, 1, 1], [], []>} : vector<64x64xf32>, vector<64x128xf32>, vector<64x128xf32> -> vector<64x128xf32>
    %207 = arith.addf %205, %206 : vector<64x128xf32>
    %c2_122 = arith.constant 2 : index
    %208 = memref.load %arg14[%c2_122] : memref<3xf32, #tpu.memory_space<smem>>
    %209 = vector.broadcast %208 : f32 to vector<64x128xf32>
    %210 = arith.addf %207, %209 : vector<64x128xf32>
    %cst_123 = arith.constant 5.000000e-01 : f32
    %211 = vector.broadcast %cst_123 : f32 to vector<64x128xf32>
    %212 = arith.mulf %211, %210 : vector<64x128xf32>
    %cst_124 = arith.constant 4.471500e-02 : f32
    %213 = vector.broadcast %cst_124 : f32 to vector<64x128xf32>
    %214 = arith.mulf %213, %210 : vector<64x128xf32>
    %215 = arith.mulf %214, %210 : vector<64x128xf32>
    %216 = arith.mulf %215, %210 : vector<64x128xf32>
    %217 = arith.addf %210, %216 : vector<64x128xf32>
    %cst_125 = arith.constant 0.797884583 : f32
    %218 = vector.broadcast %cst_125 : f32 to vector<64x128xf32>
    %219 = arith.mulf %218, %217 : vector<64x128xf32>
    %220 = math.tanh %219 : vector<64x128xf32>
    %cst_126 = arith.constant 1.000000e+00 : f32
    %221 = vector.broadcast %cst_126 : f32 to vector<64x128xf32>
    %222 = arith.addf %221, %220 : vector<64x128xf32>
    %223 = arith.mulf %212, %222 : vector<64x128xf32>
    %c0_127 = arith.constant 0 : index
    %c0_128 = arith.constant 0 : index
    %224 = vector.load %arg5[%c0_127, %c0_128] : memref<64x64xf32, #tpu.memory_space<vmem>>, vector<64x64xf32>
    %cst_129 = arith.constant dense<0.000000e+00> : vector<64x128xf32>
    %225 = tpu.matmul %224, %223, %cst_129 {dimension_numbers = #tpu.dot_dimension_numbers<[1], [0], [0], [1], [0, 0, 1, 1], [], []>} : vector<64x64xf32>, vector<64x128xf32>, vector<64x128xf32> -> vector<64x128xf32>
    %c0_130 = arith.constant 0 : index
    %c0_131 = arith.constant 0 : index
    %226 = vector.load %arg6[%c0_130, %c0_131] : memref<128x128xf32, #tpu.memory_space<vmem>>, vector<128x128xf32>
    %cst_132 = arith.constant dense<0.000000e+00> : vector<64x128xf32>
    %227 = tpu.matmul %225, %226, %cst_132 {dimension_numbers = #tpu.dot_dimension_numbers<[1], [0], [0], [1], [0, 0, 1, 1], [], []>} : vector<64x128xf32>, vector<128x128xf32>, vector<64x128xf32> -> vector<64x128xf32>
    %c0_133 = arith.constant 0 : index
    %c0_134 = arith.constant 0 : index
    %c0_135 = arith.constant 0 : index
    %228 = vector.load %arg17[%c0_133, %c0_134, %c0_135] : memref<2x64x24xf32, #tpu.memory_space<vmem>>, vector<1x64x8xf32>
    %229 = vector.shape_cast %228 : vector<1x64x8xf32> to vector<64x8xf32>
    %c0_136 = arith.constant 0 : index
    %c0_137 = arith.constant 0 : index
    %c8_138 = arith.constant 8 : index
    %230 = vector.load %arg17[%c0_136, %c0_137, %c8_138] : memref<2x64x24xf32, #tpu.memory_space<vmem>>, vector<1x64x8xf32>
    %231 = vector.shape_cast %230 : vector<1x64x8xf32> to vector<64x8xf32>
    %c0_139 = arith.constant 0 : index
    %c0_140 = arith.constant 0 : index
    %c16_141 = arith.constant 16 : index
    %232 = vector.load %arg17[%c0_139, %c0_140, %c16_141] : memref<2x64x24xf32, #tpu.memory_space<vmem>>, vector<1x64x8xf32>
    %233 = vector.shape_cast %232 : vector<1x64x8xf32> to vector<64x8xf32>
    %cst_142 = arith.constant dense<0.000000e+00> : vector<64x64xf32>
    %234 = tpu.matmul %229, %231, %cst_142 {dimension_numbers = #tpu.dot_dimension_numbers<[1], [1], [0], [0], [0, 0, 1, 0], [], []>} : vector<64x8xf32>, vector<64x8xf32>, vector<64x64xf32> -> vector<64x64xf32>
    %cst_143 = arith.constant 1.250000e-01 : f32
    %235 = vector.broadcast %cst_143 : f32 to vector<64x64xf32>
    %236 = arith.mulf %234, %235 : vector<64x64xf32>
    %237 = vector.extract_strided_slice %227 {offsets = [0, 0], sizes = [64, 64], strides = [1, 1]} : vector<64x128xf32> to vector<64x64xf32>
    %238 = arith.addf %236, %237 : vector<64x64xf32>
    %cst_144 = arith.constant dense<0xFF800000> : vector<64xf32>
    %239 = vector.multi_reduction <maximumf>, %238, %cst_144 [1] : vector<64x64xf32> to vector<64xf32>
    %240 = vector.shape_cast %239 : vector<64xf32> to vector<64x1xf32>
    %241 = vector.broadcast %240 : vector<64x1xf32> to vector<64x64xf32>
    %242 = arith.subf %238, %241 : vector<64x64xf32>
    %243 = math.exp %242 : vector<64x64xf32>
    %cst_145 = arith.constant dense<0.000000e+00> : vector<64xf32>
    %244 = vector.multi_reduction <add>, %243, %cst_145 [1] : vector<64x64xf32> to vector<64xf32>
    %245 = vector.shape_cast %244 : vector<64xf32> to vector<64x1xf32>
    %246 = tpu.reciprocal %245 {approx = true} : vector<64x1xf32> -> vector<64x1xf32>
    %247 = vector.broadcast %246 : vector<64x1xf32> to vector<64x64xf32>
    %248 = arith.mulf %243, %247 : vector<64x64xf32>
    %cst_146 = arith.constant dense<0.000000e+00> : vector<64x8xf32>
    %249 = tpu.matmul %248, %233, %cst_146 {dimension_numbers = #tpu.dot_dimension_numbers<[1], [0], [0], [1], [0, 0, 1, 1], [], []>} : vector<64x64xf32>, vector<64x8xf32>, vector<64x8xf32> -> vector<64x8xf32>
    %c1_147 = arith.constant 1 : index
    %c0_148 = arith.constant 0 : index
    %c0_149 = arith.constant 0 : index
    %250 = vector.load %arg17[%c1_147, %c0_148, %c0_149] : memref<2x64x24xf32, #tpu.memory_space<vmem>>, vector<1x64x8xf32>
    %251 = vector.shape_cast %250 : vector<1x64x8xf32> to vector<64x8xf32>
    %c1_150 = arith.constant 1 : index
    %c0_151 = arith.constant 0 : index
    %c8_152 = arith.constant 8 : index
    %252 = vector.load %arg17[%c1_150, %c0_151, %c8_152] : memref<2x64x24xf32, #tpu.memory_space<vmem>>, vector<1x64x8xf32>
    %253 = vector.shape_cast %252 : vector<1x64x8xf32> to vector<64x8xf32>
    %c1_153 = arith.constant 1 : index
    %c0_154 = arith.constant 0 : index
    %c16_155 = arith.constant 16 : index
    %254 = vector.load %arg17[%c1_153, %c0_154, %c16_155] : memref<2x64x24xf32, #tpu.memory_space<vmem>>, vector<1x64x8xf32>
    %255 = vector.shape_cast %254 : vector<1x64x8xf32> to vector<64x8xf32>
    %cst_156 = arith.constant dense<0.000000e+00> : vector<64x64xf32>
    %256 = tpu.matmul %251, %253, %cst_156 {dimension_numbers = #tpu.dot_dimension_numbers<[1], [1], [0], [0], [0, 0, 1, 0], [], []>} : vector<64x8xf32>, vector<64x8xf32>, vector<64x64xf32> -> vector<64x64xf32>
    %cst_157 = arith.constant 1.250000e-01 : f32
    %257 = vector.broadcast %cst_157 : f32 to vector<64x64xf32>
    %258 = arith.mulf %256, %257 : vector<64x64xf32>
    %259 = vector.extract_strided_slice %227 {offsets = [0, 64], sizes = [64, 64], strides = [1, 1]} : vector<64x128xf32> to vector<64x64xf32>
    %260 = arith.addf %258, %259 : vector<64x64xf32>
    %cst_158 = arith.constant dense<0xFF800000> : vector<64xf32>
    %261 = vector.multi_reduction <maximumf>, %260, %cst_158 [1] : vector<64x64xf32> to vector<64xf32>
    %262 = vector.shape_cast %261 : vector<64xf32> to vector<64x1xf32>
    %263 = vector.broadcast %262 : vector<64x1xf32> to vector<64x64xf32>
    %264 = arith.subf %260, %263 : vector<64x64xf32>
    %265 = math.exp %264 : vector<64x64xf32>
    %cst_159 = arith.constant dense<0.000000e+00> : vector<64xf32>
    %266 = vector.multi_reduction <add>, %265, %cst_159 [1] : vector<64x64xf32> to vector<64xf32>
    %267 = vector.shape_cast %266 : vector<64xf32> to vector<64x1xf32>
    %268 = tpu.reciprocal %267 {approx = true} : vector<64x1xf32> -> vector<64x1xf32>
    %269 = vector.broadcast %268 : vector<64x1xf32> to vector<64x64xf32>
    %270 = arith.mulf %265, %269 : vector<64x64xf32>
    %cst_160 = arith.constant dense<0.000000e+00> : vector<64x8xf32>
    %271 = tpu.matmul %270, %255, %cst_160 {dimension_numbers = #tpu.dot_dimension_numbers<[1], [0], [0], [1], [0, 0, 1, 1], [], []>} : vector<64x64xf32>, vector<64x8xf32>, vector<64x8xf32> -> vector<64x8xf32>
    %272 = tpu.concatenate %249, %271 in 1 : vector<64x8xf32>, vector<64x8xf32> -> vector<64x16xf32>
    %cst_161 = arith.constant dense<0.000000e+00> : vector<16x64xf32>
    %273 = tpu.matmul %272, %224, %cst_161 {dimension_numbers = #tpu.dot_dimension_numbers<[0], [0], [1], [1], [0, 1, 1, 1], [], []>} : vector<64x16xf32>, vector<64x64xf32>, vector<16x64xf32> -> vector<16x64xf32>
    %274 = arith.subf %273, %31 : vector<16x64xf32>
    %cst_162 = arith.constant dense<0.000000e+00> : vector<16xf32>
    %275 = vector.multi_reduction <add>, %274, %cst_162 [1] : vector<16x64xf32> to vector<16xf32>
    %276 = vector.shape_cast %275 : vector<16xf32> to vector<16x1xf32>
    %cst_163 = arith.constant 6.400000e+01 : f32
    %277 = vector.broadcast %cst_163 : f32 to vector<16x1xf32>
    %278 = arith.divf %276, %277 : vector<16x1xf32>
    %279 = vector.broadcast %278 : vector<16x1xf32> to vector<16x64xf32>
    %280 = arith.subf %274, %279 : vector<16x64xf32>
    %281 = arith.mulf %280, %280 : vector<16x64xf32>
    %cst_164 = arith.constant dense<0.000000e+00> : vector<16xf32>
    %282 = vector.multi_reduction <add>, %281, %cst_164 [1] : vector<16x64xf32> to vector<16xf32>
    %283 = vector.shape_cast %282 : vector<16xf32> to vector<16x1xf32>
    %cst_165 = arith.constant 6.400000e+01 : f32
    %284 = vector.broadcast %cst_165 : f32 to vector<16x1xf32>
    %285 = arith.divf %283, %284 : vector<16x1xf32>
    %286 = vector.broadcast %278 : vector<16x1xf32> to vector<16x64xf32>
    %287 = arith.subf %274, %286 : vector<16x64xf32>
    %cst_166 = arith.constant 9.99999974E-6 : f32
    %288 = vector.broadcast %cst_166 : f32 to vector<16x1xf32>
    %289 = arith.addf %285, %288 : vector<16x1xf32>
    %290 = math.rsqrt %289 : vector<16x1xf32>
    %291 = vector.broadcast %290 : vector<16x1xf32> to vector<16x64xf32>
    %292 = arith.mulf %287, %291 : vector<16x64xf32>
    %293 = vector.broadcast %4 : vector<1x64xf32> to vector<16x64xf32>
    %294 = arith.mulf %292, %293 : vector<16x64xf32>
    %295 = vector.broadcast %5 : vector<1x64xf32> to vector<16x64xf32>
    %296 = arith.addf %294, %295 : vector<16x64xf32>
    %297 = arith.addf %296, %0 : vector<16x64xf32>
    %cst_167 = arith.constant dense<0.000000e+00> : vector<16xf32>
    %298 = vector.multi_reduction <add>, %297, %cst_167 [1] : vector<16x64xf32> to vector<16xf32>
    %299 = vector.shape_cast %298 : vector<16xf32> to vector<16x1xf32>
    %cst_168 = arith.constant 6.400000e+01 : f32
    %300 = vector.broadcast %cst_168 : f32 to vector<16x1xf32>
    %301 = arith.divf %299, %300 : vector<16x1xf32>
    %302 = vector.broadcast %301 : vector<16x1xf32> to vector<16x64xf32>
    %303 = arith.subf %297, %302 : vector<16x64xf32>
    %304 = arith.mulf %303, %303 : vector<16x64xf32>
    %cst_169 = arith.constant dense<0.000000e+00> : vector<16xf32>
    %305 = vector.multi_reduction <add>, %304, %cst_169 [1] : vector<16x64xf32> to vector<16xf32>
    %306 = vector.shape_cast %305 : vector<16xf32> to vector<16x1xf32>
    %cst_170 = arith.constant 6.400000e+01 : f32
    %307 = vector.broadcast %cst_170 : f32 to vector<16x1xf32>
    %308 = arith.divf %306, %307 : vector<16x1xf32>
    %309 = vector.broadcast %301 : vector<16x1xf32> to vector<16x64xf32>
    %310 = arith.subf %297, %309 : vector<16x64xf32>
    %cst_171 = arith.constant 9.99999974E-6 : f32
    %311 = vector.broadcast %cst_171 : f32 to vector<16x1xf32>
    %312 = arith.addf %308, %311 : vector<16x1xf32>
    %313 = math.rsqrt %312 : vector<16x1xf32>
    %314 = vector.broadcast %313 : vector<16x1xf32> to vector<16x64xf32>
    %315 = arith.mulf %310, %314 : vector<16x64xf32>
    %316 = vector.broadcast %6 : vector<1x64xf32> to vector<16x64xf32>
    %317 = arith.mulf %315, %316 : vector<16x64xf32>
    %318 = vector.broadcast %7 : vector<1x64xf32> to vector<16x64xf32>
    %319 = arith.addf %317, %318 : vector<16x64xf32>
    %c0_172 = arith.constant 0 : index
    %c0_173 = arith.constant 0 : index
    %320 = vector.load %arg11[%c0_172, %c0_173] : memref<2x64xf32, #tpu.memory_space<vmem>>, vector<2x64xf32>
    %321 = math.absf %319 : vector<16x64xf32>
    %cst_174 = arith.constant dense<0xFF800000> : vector<16xf32>
    %322 = vector.multi_reduction <maximumf>, %321, %cst_174 [1] : vector<16x64xf32> to vector<16xf32>
    %323 = vector.shape_cast %322 : vector<16xf32> to vector<16x1xf32>
    %cst_175 = arith.constant 9.99999974E-6 : f32
    %324 = vector.broadcast %cst_175 : f32 to vector<16x1xf32>
    %325 = arith.maximumf %323, %324 : vector<16x1xf32>
    %cst_176 = arith.constant 1.270000e+02 : f32
    %326 = vector.broadcast %cst_176 : f32 to vector<16x1xf32>
    %327 = arith.divf %326, %325 : vector<16x1xf32>
    %328 = vector.broadcast %327 : vector<16x1xf32> to vector<16x64xf32>
    %329 = arith.mulf %319, %328 : vector<16x64xf32>
    %330 = math.roundeven %329 : vector<16x64xf32>
    %cst_177 = arith.constant -1.280000e+02 : f32
    %cst_178 = arith.constant 1.270000e+02 : f32
    %331 = vector.broadcast %cst_177 : f32 to vector<16x64xf32>
    %332 = arith.maximumf %331, %330 : vector<16x64xf32>
    %333 = vector.broadcast %cst_178 : f32 to vector<16x64xf32>
    %334 = arith.minimumf %333, %332 : vector<16x64xf32>
    %335 = arith.truncf %334 : vector<16x64xf32> to vector<16x64xbf16>
    %cst_179 = arith.constant 0.00787401571 : f32
    %336 = vector.broadcast %cst_179 : f32 to vector<16x1xf32>
    %337 = arith.mulf %325, %336 : vector<16x1xf32>
    %c0_180 = arith.constant 0 : index
    %c0_181 = arith.constant 0 : index
    %c0_182 = arith.constant 0 : index
    %338 = vector.load %arg10[%c0_180, %c0_181, %c0_182] : memref<2x64x64xbf16, #tpu.memory_space<vmem>>, vector<1x64x64xbf16>
    %339 = vector.shape_cast %338 : vector<1x64x64xbf16> to vector<64x64xbf16>
    %cst_183 = arith.constant dense<0.000000e+00> : vector<16x64xf32>
    %340 = tpu.matmul %335, %339, %cst_183 {dimension_numbers = #tpu.dot_dimension_numbers<[1], [1], [0], [0], [0, 0, 1, 0], [], []>} : vector<16x64xbf16>, vector<64x64xbf16>, vector<16x64xf32> -> vector<16x64xf32>
    %c0_184 = arith.constant 0 : index
    %341 = memref.load %arg15[%c0_184] : memref<2xf32, #tpu.memory_space<smem>>
    %342 = vector.broadcast %341 : f32 to vector<16x1xf32>
    %343 = arith.mulf %337, %342 : vector<16x1xf32>
    %344 = vector.broadcast %343 : vector<16x1xf32> to vector<16x64xf32>
    %345 = arith.mulf %340, %344 : vector<16x64xf32>
    %346 = vector.extract_strided_slice %320 {offsets = [0, 0], sizes = [1, 64], strides = [1, 1]} : vector<2x64xf32> to vector<1x64xf32>
    %347 = vector.broadcast %346 : vector<1x64xf32> to vector<16x64xf32>
    %348 = arith.addf %345, %347 : vector<16x64xf32>
    %cst_185 = arith.constant 5.000000e-01 : f32
    %349 = vector.broadcast %cst_185 : f32 to vector<16x64xf32>
    %350 = arith.mulf %349, %348 : vector<16x64xf32>
    %cst_186 = arith.constant 4.471500e-02 : f32
    %351 = vector.broadcast %cst_186 : f32 to vector<16x64xf32>
    %352 = arith.mulf %351, %348 : vector<16x64xf32>
    %353 = arith.mulf %352, %348 : vector<16x64xf32>
    %354 = arith.mulf %353, %348 : vector<16x64xf32>
    %355 = arith.addf %348, %354 : vector<16x64xf32>
    %cst_187 = arith.constant 0.797884583 : f32
    %356 = vector.broadcast %cst_187 : f32 to vector<16x64xf32>
    %357 = arith.mulf %356, %355 : vector<16x64xf32>
    %358 = math.tanh %357 : vector<16x64xf32>
    %cst_188 = arith.constant 1.000000e+00 : f32
    %359 = vector.broadcast %cst_188 : f32 to vector<16x64xf32>
    %360 = arith.addf %359, %358 : vector<16x64xf32>
    %361 = arith.mulf %350, %360 : vector<16x64xf32>
    %cst_189 = arith.constant dense<0.000000e+00> : vector<16xf32>
    %362 = vector.multi_reduction <add>, %361, %cst_189 [1] : vector<16x64xf32> to vector<16xf32>
    %363 = vector.shape_cast %362 : vector<16xf32> to vector<16x1xf32>
    %cst_190 = arith.constant 6.400000e+01 : f32
    %364 = vector.broadcast %cst_190 : f32 to vector<16x1xf32>
    %365 = arith.divf %363, %364 : vector<16x1xf32>
    %366 = vector.broadcast %365 : vector<16x1xf32> to vector<16x64xf32>
    %367 = arith.subf %361, %366 : vector<16x64xf32>
    %368 = arith.mulf %367, %367 : vector<16x64xf32>
    %cst_191 = arith.constant dense<0.000000e+00> : vector<16xf32>
    %369 = vector.multi_reduction <add>, %368, %cst_191 [1] : vector<16x64xf32> to vector<16xf32>
    %370 = vector.shape_cast %369 : vector<16xf32> to vector<16x1xf32>
    %cst_192 = arith.constant 6.400000e+01 : f32
    %371 = vector.broadcast %cst_192 : f32 to vector<16x1xf32>
    %372 = arith.divf %370, %371 : vector<16x1xf32>
    %373 = vector.broadcast %365 : vector<16x1xf32> to vector<16x64xf32>
    %374 = arith.subf %361, %373 : vector<16x64xf32>
    %cst_193 = arith.constant 9.99999974E-6 : f32
    %375 = vector.broadcast %cst_193 : f32 to vector<16x1xf32>
    %376 = arith.addf %372, %375 : vector<16x1xf32>
    %377 = math.rsqrt %376 : vector<16x1xf32>
    %378 = vector.broadcast %377 : vector<16x1xf32> to vector<16x64xf32>
    %379 = arith.mulf %374, %378 : vector<16x64xf32>
    %380 = vector.broadcast %8 : vector<1x64xf32> to vector<16x64xf32>
    %381 = arith.mulf %379, %380 : vector<16x64xf32>
    %382 = vector.broadcast %9 : vector<1x64xf32> to vector<16x64xf32>
    %383 = arith.addf %381, %382 : vector<16x64xf32>
    %384 = math.absf %383 : vector<16x64xf32>
    %cst_194 = arith.constant dense<0xFF800000> : vector<16xf32>
    %385 = vector.multi_reduction <maximumf>, %384, %cst_194 [1] : vector<16x64xf32> to vector<16xf32>
    %386 = vector.shape_cast %385 : vector<16xf32> to vector<16x1xf32>
    %cst_195 = arith.constant 9.99999974E-6 : f32
    %387 = vector.broadcast %cst_195 : f32 to vector<16x1xf32>
    %388 = arith.maximumf %386, %387 : vector<16x1xf32>
    %cst_196 = arith.constant 1.270000e+02 : f32
    %389 = vector.broadcast %cst_196 : f32 to vector<16x1xf32>
    %390 = arith.divf %389, %388 : vector<16x1xf32>
    %391 = vector.broadcast %390 : vector<16x1xf32> to vector<16x64xf32>
    %392 = arith.mulf %383, %391 : vector<16x64xf32>
    %393 = math.roundeven %392 : vector<16x64xf32>
    %cst_197 = arith.constant -1.280000e+02 : f32
    %cst_198 = arith.constant 1.270000e+02 : f32
    %394 = vector.broadcast %cst_197 : f32 to vector<16x64xf32>
    %395 = arith.maximumf %394, %393 : vector<16x64xf32>
    %396 = vector.broadcast %cst_198 : f32 to vector<16x64xf32>
    %397 = arith.minimumf %396, %395 : vector<16x64xf32>
    %398 = arith.truncf %397 : vector<16x64xf32> to vector<16x64xbf16>
    %cst_199 = arith.constant 0.00787401571 : f32
    %399 = vector.broadcast %cst_199 : f32 to vector<16x1xf32>
    %400 = arith.mulf %388, %399 : vector<16x1xf32>
    %c1_200 = arith.constant 1 : index
    %c0_201 = arith.constant 0 : index
    %c0_202 = arith.constant 0 : index
    %401 = vector.load %arg10[%c1_200, %c0_201, %c0_202] : memref<2x64x64xbf16, #tpu.memory_space<vmem>>, vector<1x64x64xbf16>
    %402 = vector.shape_cast %401 : vector<1x64x64xbf16> to vector<64x64xbf16>
    %cst_203 = arith.constant dense<0.000000e+00> : vector<16x64xf32>
    %403 = tpu.matmul %398, %402, %cst_203 {dimension_numbers = #tpu.dot_dimension_numbers<[1], [1], [0], [0], [0, 0, 1, 0], [], []>} : vector<16x64xbf16>, vector<64x64xbf16>, vector<16x64xf32> -> vector<16x64xf32>
    %c1_204 = arith.constant 1 : index
    %404 = memref.load %arg15[%c1_204] : memref<2xf32, #tpu.memory_space<smem>>
    %405 = vector.broadcast %404 : f32 to vector<16x1xf32>
    %406 = arith.mulf %400, %405 : vector<16x1xf32>
    %407 = vector.broadcast %406 : vector<16x1xf32> to vector<16x64xf32>
    %408 = arith.mulf %403, %407 : vector<16x64xf32>
    %409 = vector.extract_strided_slice %320 {offsets = [1, 0], sizes = [1, 64], strides = [1, 1]} : vector<2x64xf32> to vector<1x64xf32>
    %410 = vector.broadcast %409 : vector<1x64xf32> to vector<16x64xf32>
    %411 = arith.addf %408, %410 : vector<16x64xf32>
    %412 = arith.addf %411, %297 : vector<16x64xf32>
    %c0_205 = arith.constant 0 : index
    %c0_206 = arith.constant 0 : index
    %413 = vector.load %arg16[%c0_205, %c0_206] : memref<16x64xf32, #tpu.memory_space<vmem>>, vector<16x64xf32>
    tpu.vector_store %arg16[%c0_205, %c0_206], %412 {strides = array<i32>} : memref<16x64xf32, #tpu.memory_space<vmem>>, vector<16x64xf32>,
    return
  }
  func.func @transform_0(%arg0: i32) -> (i32, i32) {
    %c0_i32 = arith.constant 0 : i32
    %c0_i32_0 = arith.constant 0 : i32
    %c0_i32_1 = arith.constant 0 : i32
    return %c0_i32, %c0_i32_0 : i32, i32
  }
  func.func @transform_1(%arg0: i32) -> (i32, i32, i32) {
    %c0_i32 = arith.constant 0 : i32
    %c0_i32_0 = arith.constant 0 : i32
    %c0_i32_1 = arith.constant 0 : i32
    %c0_i32_2 = arith.constant 0 : i32
    return %c0_i32, %c0_i32_0, %c0_i32_1 : i32, i32, i32
  }
  func.func @transform_2(%arg0: i32) -> (i32, i32) {
    %c0_i32 = arith.constant 0 : i32
    %c0_i32_0 = arith.constant 0 : i32
    %c0_i32_1 = arith.constant 0 : i32
    return %c0_i32, %c0_i32_0 : i32, i32
  }
  func.func @transform_3(%arg0: i32) -> (i32, i32) {
    %c0_i32 = arith.constant 0 : i32
    %c0_i32_0 = arith.constant 0 : i32
    %c0_i32_1 = arith.constant 0 : i32
    return %c0_i32, %c0_i32_0 : i32, i32
  }
  func.func @transform_4(%arg0: i32) -> (i32, i32) {
    %c0_i32 = arith.constant 0 : i32
    %c0_i32_0 = arith.constant 0 : i32
    %c0_i32_1 = arith.constant 0 : i32
    return %c0_i32, %c0_i32_0 : i32, i32
  }
  func.func @transform_5(%arg0: i32) -> (i32, i32) {
    %c0_i32 = arith.constant 0 : i32
    %c0_i32_0 = arith.constant 0 : i32
    %c0_i32_1 = arith.constant 0 : i32
    return %c0_i32, %c0_i32_0 : i32, i32
  }
  func.func @transform_6(%arg0: i32) -> (i32, i32) {
    %c0_i32 = arith.constant 0 : i32
    %c0_i32_0 = arith.constant 0 : i32
    %c0_i32_1 = arith.constant 0 : i32
    return %c0_i32, %c0_i32_0 : i32, i32
  }
  func.func @transform_7(%arg0: i32) -> (i32, i32) {
    %c0_i32 = arith.constant 0 : i32
    %c0_i32_0 = arith.constant 0 : i32
    %c0_i32_1 = arith.constant 0 : i32
    return %c0_i32, %c0_i32_0 : i32, i32
  }
  func.func @transform_8(%arg0: i32) -> (i32, i32) {
    %c0_i32 = arith.constant 0 : i32
    %c0_i32_0 = arith.constant 0 : i32
    %c0_i32_1 = arith.constant 0 : i32
    return %c0_i32, %c0_i32_0 : i32, i32
  }
  func.func @transform_9(%arg0: i32) -> (i32, i32, i32) {
    %c0_i32 = arith.constant 0 : i32
    %c0_i32_0 = arith.constant 0 : i32
    %c0_i32_1 = arith.constant 0 : i32
    %c0_i32_2 = arith.constant 0 : i32
    return %c0_i32, %c0_i32_0, %c0_i32_1 : i32, i32, i32
  }
  func.func @transform_10(%arg0: i32) -> (i32, i32) {
    %c0_i32 = arith.constant 0 : i32
    %c0_i32_0 = arith.constant 0 : i32
    %c0_i32_1 = arith.constant 0 : i32
    return %c0_i32, %c0_i32_0 : i32, i32
  }
  func.func @transform_11(%arg0: i32) -> (i32, i32, i32) {
    %c0_i32 = arith.constant 0 : i32
    %c0_i32_0 = arith.constant 0 : i32
    %c0_i32_1 = arith.constant 0 : i32
    %c0_i32_2 = arith.constant 0 : i32
    return %c0_i32, %c0_i32_0, %c0_i32_1 : i32, i32, i32
  }
  func.func @transform_12(%arg0: i32) -> (i32, i32, i32) {
    %c0_i32 = arith.constant 0 : i32
    %c0_i32_0 = arith.constant 0 : i32
    %c0_i32_1 = arith.constant 0 : i32
    %c0_i32_2 = arith.constant 0 : i32
    return %c0_i32, %c0_i32_0, %c0_i32_1 : i32, i32, i32
  }
  func.func @transform_13(%arg0: i32) -> i32 {
    %c0_i32 = arith.constant 0 : i32
    %c0_i32_0 = arith.constant 0 : i32
    return %c0_i32 : i32
  }
  func.func @transform_14(%arg0: i32) -> i32 {
    %c0_i32 = arith.constant 0 : i32
    %c0_i32_0 = arith.constant 0 : i32
    return %c0_i32 : i32
  }
  func.func @transform_15(%arg0: i32) -> (i32, i32) {
    %c0_i32 = arith.constant 0 : i32
    %c0_i32_0 = arith.constant 0 : i32
    %c0_i32_1 = arith.constant 0 : i32
    return %c0_i32, %c0_i32_0 : i32, i32
  }
}

</mosaic_0001>

<llo_original>
// kernel: channel_attention.1
$region0: #{channel_attention.1}
  #allocation0 [shape = 'u32[]', space=smem, size = 0x4, offset = 0x4, fixed_abs, tag = 'smem constant byte address 0x4 - core index']
  #allocation1 [shape = 'u32[144,128]{1,0:T(1,128)}', space=vmem, size = 0x12000, scoped, tag = 'internal scratch']
  #allocation2 [shape = 'f32[2,64,24]{2,1,0:T(8,128)}', space=vmem, size = 0x10000, scoped, tag = 'scratch operand']
  %s0 = inlined_call_operand.vmem [shape: f32[16,64], index: 0, kind: input, shape index: {}]
  %s1 = inlined_call_operand.vmem [shape: f32[2,8,8], index: 1, kind: input, shape index: {}]
  %s2 = inlined_call_operand.vmem [shape: f32[64,8], index: 2, kind: input, shape index: {}]
  %s3 = inlined_call_operand.vmem [shape: f32[16,128], index: 3, kind: input, shape index: {}]
  %s4 = inlined_call_operand.hbm [shape: f32[64,64], index: 4, kind: input, shape index: {}]
  %s5 = inlined_call_operand.vmem [shape: f32[128,128], index: 5, kind: input, shape index: {}]
  %s6 = inlined_call_operand.vmem [shape: bf16[192,64], index: 6, kind: input, shape index: {}]
  %s7 = inlined_call_operand.hbm [shape: f32[2,192], index: 7, kind: input, shape index: {}]
  %s8 = inlined_call_operand.vmem [shape: f32[8,64], index: 8, kind: input, shape index: {}]
  %s9 = inlined_call_operand.hbm [shape: bf16[2,64,64], index: 9, kind: input, shape index: {}]
  %s10 = inlined_call_operand.hbm [shape: f32[2,64], index: 10, kind: input, shape index: {}]
  %s11 = inlined_call_operand.hbm [shape: f32[9,128,128], index: 11, kind: input, shape index: {}]
  %s12 = inlined_call_operand.hbm [shape: f32[2,64,64], index: 12, kind: input, shape index: {}]
  %s13 = inlined_call_operand.vmem [shape: f32[3], index: 13, kind: input, shape index: {}]
  %s14 = inlined_call_operand.hbm [shape: f32[2], index: 14, kind: input, shape index: {}]
  %s15 = inlined_call_operand.hbm [shape: f32[16,64], index: 15, kind: output, shape index: {}]
  %s16 = sld [smem:[#allocation0]]
  $region102: #{channel_attention.1} parent=0
    _
  %s18 = ssub.s32 1, %s16
  %s19 = scalar_select 0, %s18, %s16
  $region1: #{channel_attention.1} parent=0
    #allocation3 [shape = 'u8[32768]{0}', space=vmem, size = 0x8000, scoped, tag = 'input window, operand 4, single buffered']
    #allocation4 [shape = 's32[1]{0}', space=sflag, size = 0x4, scoped, tag = 'scoped memory for channel_attention.1']
    #allocation5 [shape = 's32[1]{0}', space=sflag, size = 0x4, scoped, tag = 'scoped memory for channel_attention.1']
    #allocation6 [shape = 's32[1]{0}', space=sflag, size = 0x4, scoped, tag = 'scoped memory for channel_attention.1']
    #allocation7 [shape = 's32[1]{0}', space=sflag, size = 0x4, scoped, tag = 'scoped memory for channel_attention.1']
    #allocation8 [shape = 'u8[2048]{0}', space=vmem, size = 0x800, scoped, tag = 'input window, operand 7, single buffered']
    #allocation9 [shape = 's32[1]{0}', space=sflag, size = 0x4, scoped, tag = 'scoped memory for channel_attention.1']
    #allocation10 [shape = 'u8[32768]{0}', space=vmem, size = 0x8000, scoped, tag = 'input window, operand 9, single buffered']
    #allocation11 [shape = 'u8[1024]{0}', space=vmem, size = 0x400, scoped, tag = 'input window, operand 10, single buffered']
    #allocation12 [shape = 's32[1]{0}', space=sflag, size = 0x4, scoped, tag = 'scoped memory for channel_attention.1']
    #allocation13 [shape = 'u8[589824]{0}', space=vmem, size = 0x90000, scoped, tag = 'input window, operand 11, single buffered']
    #allocation14 [shape = 'u8[65536]{0}', space=vmem, size = 0x10000, scoped, tag = 'input window, operand 12, single buffered']
    #allocation15 [shape = 's32[1]{0}', space=sflag, size = 0x4, scoped, tag = 'scoped memory for channel_attention.1']
    #allocation16 [shape = 'u8[512]{0}', space=smem, size = 0x200, scoped, tag = 'input window, operand 13, single buffered']
    #allocation17 [shape = 'u8[512]{0}', space=smem, size = 0x200, scoped, tag = 'input window, operand 14, single buffered']
    #allocation18 [shape = 'u8[8192]{0}', space=vmem, size = 0x2000, scoped, tag = 'output window, operand 0, single buffered']
    %20 = vsyncpa [#allocation4], 0
    %21 = vsyncpa [#allocation9], 0
    %22 = vsyncpa [#allocation12], 0
    %23 = vsyncpa [#allocation15], 0
    %24 = vsyncpa [#allocation7], 0
    %25 = vsyncpa [#allocation6], 0
    %26 = vsyncpa [#allocation5], 0
    // Predicated region
    $region2: #{channel_attention.1} parent=1 // pred_check
      _
    $region3: #{channel_attention.1} parent=1 // pred_check_branch
      %28 = sbr.rel (0) target = $region5
    $region4: #{channel_attention.1} parent=1 // pred_region
      _
    $region5: #{channel_attention.1} parent=1 // pred_fallthru
      _
    // Predicated region
    $region6: #{channel_attention.1} parent=1 // pred_check
      _
    $region7: #{channel_attention.1} parent=1 // pred_check_branch
      %30 = sbr.rel (0) target = $region9
    $region8: #{channel_attention.1} parent=1 // pred_region
      _
    $region9: #{channel_attention.1} parent=1 // pred_fallthru
      _
    // Predicated region
    $region10: #{channel_attention.1} parent=1 // pred_check
      _
    $region11: #{channel_attention.1} parent=1 // pred_check_branch
      %32 = sbr.rel (0) target = $region13
    $region12: #{channel_attention.1} parent=1 // pred_region
      _
    $region13: #{channel_attention.1} parent=1 // pred_fallthru
      _
    // Predicated region
    $region14: #{channel_attention.1} parent=1 // pred_check
      _
    $region15: #{channel_attention.1} parent=1 // pred_check_branch
      %34 = sbr.rel (0) target = $region17
    $region16: #{channel_attention.1} parent=1 // pred_region
      _
    $region17: #{channel_attention.1} parent=1 // pred_fallthru
      _
    // Predicated region
    $region18: #{channel_attention.1} parent=1 // pred_check
      _
    $region19: #{channel_attention.1} parent=1 // pred_check_branch
      %36 = sbr.rel (0) target = $region21
    $region20: #{channel_attention.1} parent=1 // pred_region
      %s38 = ssub.s32 1024, 1024
      %39 = vsyncadd [#allocation4], %s38
      %s40 = sshll.u32 [#allocation3], 4
      %s41 = int_to_ptr.vmem [resolvable:$true] %s40
      %46 = dma.hbm_to_vmem [thread:$0]  %s4, 1024, %s41, [#allocation4], 128, 128, 8
    $region21: #{channel_attention.1} parent=1 // pred_fallthru
      _
    // Predicated region
    $region22: #{channel_attention.1} parent=1 // pred_check
      _
    $region23: #{channel_attention.1} parent=1 // pred_check_branch
      %48 = sbr.rel (0) target = $region25
    $region24: #{channel_attention.1} parent=1 // pred_region
      _
    $region25: #{channel_attention.1} parent=1 // pred_fallthru
      _
    // Predicated region
    $region26: #{channel_attention.1} parent=1 // pred_check
      _
    $region27: #{channel_attention.1} parent=1 // pred_check_branch
      %50 = sbr.rel (0) target = $region29
    $region28: #{channel_attention.1} parent=1 // pred_region
      _
    $region29: #{channel_attention.1} parent=1 // pred_fallthru
      _
    // Predicated region
    $region30: #{channel_attention.1} parent=1 // pred_check
      _
    $region31: #{channel_attention.1} parent=1 // pred_check_branch
      %52 = sbr.rel (0) target = $region33
    $region32: #{channel_attention.1} parent=1 // pred_region
      %s54 = ssub.s32 64, 64
      %55 = vsyncadd [#allocation9], %s54
      %s57 = sshll.u32 [#allocation8], 4
      %s58 = int_to_ptr.vmem [resolvable:$true] %s57
      %60 = dma.hbm_to_vmem [thread:$0]  %s7, 64, %s58, [#allocation9]
    $region33: #{channel_attention.1} parent=1 // pred_fallthru
      _
    // Predicated region
    $region34: #{channel_attention.1} parent=1 // pred_check
      _
    $region35: #{channel_attention.1} parent=1 // pred_check_branch
      %62 = sbr.rel (0) target = $region37
    $region36: #{channel_attention.1} parent=1 // pred_region
      _
    $region37: #{channel_attention.1} parent=1 // pred_fallthru
      _
    // Predicated region
    $region38: #{channel_attention.1} parent=1 // pred_check
      _
    $region39: #{channel_attention.1} parent=1 // pred_check_branch
      %64 = sbr.rel (0) target = $region41
    $region40: #{channel_attention.1} parent=1 // pred_region
      %s66 = ssub.s32 1024, 1024
      %67 = vsyncadd [#allocation9], %s66
      %s68 = sshll.u32 [#allocation10], 4
      %s69 = int_to_ptr.vmem [resolvable:$true] %s68
      %74 = dma.hbm_to_vmem [thread:$0]  %s9, 1024, %s69, [#allocation9], 64, 64, 4
    $region41: #{channel_attention.1} parent=1 // pred_fallthru
      _
    // Predicated region
    $region42: #{channel_attention.1} parent=1 // pred_check
      _
    $region43: #{channel_attention.1} parent=1 // pred_check_branch
      %76 = sbr.rel (0) target = $region45
    $region44: #{channel_attention.1} parent=1 // pred_region
      %s78 = ssub.s32 32, 32
      %79 = vsyncadd [#allocation12], %s78
      %s81 = sshll.u32 [#allocation11], 4
      %s82 = int_to_ptr.vmem [resolvable:$true] %s81
      %84 = dma.hbm_to_vmem [thread:$0]  %s10, 32, %s82, [#allocation12]
    $region45: #{channel_attention.1} parent=1 // pred_fallthru
      _
    // Predicated region
    $region46: #{channel_attention.1} parent=1 // pred_check
      _
    $region47: #{channel_attention.1} parent=1 // pred_check_branch
      %86 = sbr.rel (0) target = $region49
    $region48: #{channel_attention.1} parent=1 // pred_region
      %s88 = ssub.s32 18432, 18432
      %89 = vsyncadd [#allocation12], %s88
      %s90 = sshll.u32 [#allocation13], 4
      %s91 = int_to_ptr.vmem [resolvable:$true] %s90
      %96 = dma.hbm_to_vmem [thread:$0]  %s11, 18432, %s91, [#allocation12], 128, 128, 8
    $region49: #{channel_attention.1} parent=1 // pred_fallthru
      _
    // Predicated region
    $region50: #{channel_attention.1} parent=1 // pred_check
      _
    $region51: #{channel_attention.1} parent=1 // pred_check_branch
      %98 = sbr.rel (0) target = $region53
    $region52: #{channel_attention.1} parent=1 // pred_region
      %s100 = ssub.s32 2048, 2048
      %101 = vsyncadd [#allocation15], %s100
      %s102 = sshll.u32 [#allocation14], 4
      %s103 = int_to_ptr.vmem [resolvable:$true] %s102
      %108 = dma.hbm_to_vmem [thread:$0]  %s12, 2048, %s103, [#allocation15], 128, 128, 8
    $region53: #{channel_attention.1} parent=1 // pred_fallthru
      _
    // Predicated region
    $region54: #{channel_attention.1} parent=1 // pred_check
      _
    $region55: #{channel_attention.1} parent=1 // pred_check_branch
      %110 = sbr.rel (0) target = $region57
    $region56: #{channel_attention.1} parent=1 // pred_region
      %s112 = ssub.s32 16, 16
      %113 = vsyncadd [#allocation7], %s112
      %s115 = sshll.u32 %s13, 4
      %s116 = int_to_ptr.vmem [resolvable:$true] %s115
      %118 = dma.vmem_to_smem %s116, 16, [#allocation16], [#allocation7]
    $region57: #{channel_attention.1} parent=1 // pred_fallthru
      _
    // Predicated region
    $region58: #{channel_attention.1} parent=1 // pred_check
      _
    $region59: #{channel_attention.1} parent=1 // pred_check_branch
      %120 = sbr.rel (0) target = $region61
    $region60: #{channel_attention.1} parent=1 // pred_region
      %s122 = ssub.s32 16, 16
      %123 = vsyncadd [#allocation6], %s122
      %126 = dma.hbm_to_smem %s14, 16, [#allocation17], [#allocation6]
    $region61: #{channel_attention.1} parent=1 // pred_fallthru
      _
    // Predicated region
    $region62: #{channel_attention.1} parent=1 // pred_check
      _
    $region63: #{channel_attention.1} parent=1 // pred_check_branch
      %128 = sbr.rel (0) target = $region65
    $region64: #{channel_attention.1} parent=1 // pred_region
      %129 = dma.done [#allocation4], 1024
    $region65: #{channel_attention.1} parent=1 // pred_fallthru
      _
    // Predicated region
    $region66: #{channel_attention.1} parent=1 // pred_check
      _
    $region67: #{channel_attention.1} parent=1 // pred_check_branch
      %131 = sbr.rel (0) target = $region69
    $region68: #{channel_attention.1} parent=1 // pred_region
      %132 = dma.done [#allocation9], 64
    $region69: #{channel_attention.1} parent=1 // pred_fallthru
      _
    // Predicated region
    $region70: #{channel_attention.1} parent=1 // pred_check
      _
    $region71: #{channel_attention.1} parent=1 // pred_check_branch
      %134 = sbr.rel (0) target = $region73
    $region72: #{channel_attention.1} parent=1 // pred_region
      %135 = dma.done [#allocation9], 1024
    $region73: #{channel_attention.1} parent=1 // pred_fallthru
      _
    // Predicated region
    $region74: #{channel_attention.1} parent=1 // pred_check
      _
    $region75: #{channel_attention.1} parent=1 // pred_check_branch
      %137 = sbr.rel (0) target = $region77
    $region76: #{channel_attention.1} parent=1 // pred_region
      %138 = dma.done [#allocation12], 32
    $region77: #{channel_attention.1} parent=1 // pred_fallthru
      _
    // Predicated region
    $region78: #{channel_attention.1} parent=1 // pred_check
      _
    $region79: #{channel_attention.1} parent=1 // pred_check_branch
      %140 = sbr.rel (0) target = $region81
    $region80: #{channel_attention.1} parent=1 // pred_region
      %141 = dma.done [#allocation12], 18432
    $region81: #{channel_attention.1} parent=1 // pred_fallthru
      _
    // Predicated region
    $region82: #{channel_attention.1} parent=1 // pred_check
      _
    $region83: #{channel_attention.1} parent=1 // pred_check_branch
      %143 = sbr.rel (0) target = $region85
    $region84: #{channel_attention.1} parent=1 // pred_region
      %144 = dma.done [#allocation15], 2048
    $region85: #{channel_attention.1} parent=1 // pred_fallthru
      _
    // Predicated region
    $region86: #{channel_attention.1} parent=1 // pred_check
      _
    $region87: #{channel_attention.1} parent=1 // pred_check_branch
      %146 = sbr.rel (0) target = $region89
    $region88: #{channel_attention.1} parent=1 // pred_region
      %147 = dma.done [#allocation7], 16
    $region89: #{channel_attention.1} parent=1 // pred_fallthru
      _
    // Predicated region
    $region90: #{channel_attention.1} parent=1 // pred_check
      _
    $region91: #{channel_attention.1} parent=1 // pred_check_branch
      %149 = sbr.rel (0) target = $region93
    $region92: #{channel_attention.1} parent=1 // pred_region
      %150 = dma.done [#allocation6], 16
    $region93: #{channel_attention.1} parent=1 // pred_fallthru
      _
    %151 = sfence
    %v153 = vld [vmem:[%s0] sm:$0xff]
    %v154 = vld [vmem:[%s0 + $0x8] sm:$0xff]
    %v155 = vld [vmem:[%s8] sm:$0xff]
    %vm156 = vcmask 523264
    %v157 = vsel %vm156, %v153, 0.0
    %158 = vadd.xlane.f32.xlu0 %v157
    %v159 = vpop.xlane.xlu0 %158
    %v160 = vsel %vm156, %v154, 0.0
    %161 = vadd.xlane.f32.xlu0 %v160
    %v162 = vpop.xlane.xlu0 %161
    %v163 = vrcp.pop 64.0
    %v164 = vmul.f32 %v159, %v163
    %v165 = vmul.f32 %v162, %v163
    %v166 = vsub.f32 %v153, %v164
    %v167 = vsub.f32 %v154, %v165
    %v168 = vmul.f32 %v166, %v166
    %v169 = vmul.f32 %v167, %v167
    %v170 = vsel %vm156, %v168, 0.0
    %171 = vadd.xlane.f32.xlu0 %v170
    %v172 = vpop.xlane.xlu0 %171
    %v173 = vsel %vm156, %v169, 0.0
    %174 = vadd.xlane.f32.xlu0 %v173
    %v175 = vpop.xlane.xlu0 %174
    %v176 = vmul.f32 %v172, %v163
    %v177 = vmul.f32 %v175, %v163
    %v178 = vadd.f32 %v176, 1e-05
    %v179 = vadd.f32 %v177, 1e-05
    %v180 = vrsqrt.pop %v178
    %v181 = vrsqrt.pop %v179
    %v182 = vmul.f32 %v166, %v180
    %v183 = vmul.f32 %v167, %v181
    %v184 = vlaneseq
    %v185 = vshrl.u32 %v184, 7
    %v186 = vsub.s32 0, %v185
    %v187 = vrot.slane %v155, %v186
    %v188 = vmul.f32 %v182, %v187
    %v189 = vmul.f32 %v183, %v187
    %v190 = vlaneseq
    %v191 = vshrl.u32 %v190, 7
    %v192 = vsub.s32 1, %v191
    %v193 = vrot.slane %v155, %v192
    %v194 = vadd.f32 %v188, %v193
    %v195 = vadd.f32 %v189, %v193
    %v196 = vand.u32 2147483647, %v194
    %v197 = vand.u32 2147483647, %v195
    %v198 = vsel %vm156, %v196, -inf
    %199 = vmax.xlane.f32.xlu0 %v198
    %v200 = vpop.xlane.xlu0 %199
    %v201 = vsel %vm156, %v197, -inf
    %202 = vmax.xlane.f32.xlu0 %v201
    %v203 = vpop.xlane.xlu0 %202
    %v204 = vmax.f32 %v200, 1e-05
    %v205 = vmax.f32 %v203, 1e-05
    %v206 = vrcp.pop %v204
    %v207 = vmul.f32 127.0, %v206
    %v208 = vrcp.pop %v205
    %v209 = vmul.f32 127.0, %v208
    %v210 = vmul.f32 %v194, %v207
    %v211 = vmul.f32 %v195, %v209
    %v212 = vround.ne.pseudo %v210
    %v213 = vround.ne.pseudo %v211
    %v214 = vmax.f32 %v212, -128.0
    %v215 = vmax.f32 %v213, -128.0
    %v216 = vmin.f32 %v214, 127.0
    %v217 = vmin.f32 %v215, 127.0
    %v218 = vpack.c.bf16 %v217, %v216
    %v219 = vmul.f32 %v204, 0.007874016
    %v220 = vmul.f32 %v205, 0.007874016
    %v221 = vld [vmem:[#allocation8] sm:$0xf]
    %v222 = vld [vmem:[%s6] sm:$0xf]
    %v223 = vld [vmem:[%s6 + $0x4] sm:$0xf]
    %v224 = vld [vmem:[%s6 + $0x8] sm:$0xf]
    %v225 = vld [vmem:[%s6 + $0xc] sm:$0xf]
    %v226 = vld [vmem:[%s6 + $0x10] sm:$0xf]
    %v227 = vld [vmem:[%s6 + $0x14] sm:$0xf]
    %v228 = vld [vmem:[%s6 + $0x18] sm:$0xf]
    %v229 = vld [vmem:[%s6 + $0x1c] sm:$0xf]
    %v230 = vld [vmem:[%s6 + $0x20] sm:$0xf]
    %v231 = vld [vmem:[%s6 + $0x24] sm:$0xf]
    %v232 = vld [vmem:[%s6 + $0x28] sm:$0xf]
    %v233 = vld [vmem:[%s6 + $0x2c] sm:$0xf]
    %v234 = vld [vmem:[%s6 + $0x30] sm:$0xf]
    %v235 = vld [vmem:[%s6 + $0x34] sm:$0xf]
    %v236 = vld [vmem:[%s6 + $0x38] sm:$0xf]
    %v237 = vld [vmem:[%s6 + $0x3c] sm:$0xf]
    %v238 = vld [vmem:[%s6 + $0x40] sm:$0xf]
    %v239 = vld [vmem:[%s6 + $0x44] sm:$0xf]
    %v240 = vld [vmem:[%s6 + $0x48] sm:$0xf]
    %v241 = vld [vmem:[%s6 + $0x4c] sm:$0xf]
    %v242 = vld [vmem:[%s6 + $0x50] sm:$0xf]
    %v243 = vld [vmem:[%s6 + $0x54] sm:$0xf]
    %v244 = vld [vmem:[%s6 + $0x58] sm:$0xf]
    %v245 = vld [vmem:[%s6 + $0x5c] sm:$0xf]
    %v270 = vunpack.c.l.b16 %v222
    %v271 = vunpack.c.l.b16 %v223
    %v272 = vunpack.c.l.b16 %v224
    %v273 = vunpack.c.l.b16 %v225
    %v274 = vunpack.c.l.b16 %v226
    %v275 = vunpack.c.l.b16 %v227
    %v276 = vunpack.c.l.b16 %v228
    %v277 = vunpack.c.l.b16 %v229
    %v278 = vunpack.c.l.b16 %v230
    %v279 = vunpack.c.l.b16 %v231
    %v280 = vunpack.c.l.b16 %v232
    %v281 = vunpack.c.l.b16 %v233
    %v282 = vunpack.c.l.b16 %v234
    %v283 = vunpack.c.l.b16 %v235
    %v284 = vunpack.c.l.b16 %v236
    %v285 = vunpack.c.l.b16 %v237
    %v286 = vunpack.c.l.b16 %v238
    %v287 = vunpack.c.l.b16 %v239
    %v288 = vunpack.c.l.b16 %v240
    %v289 = vunpack.c.l.b16 %v241
    %v290 = vunpack.c.l.b16 %v242
    %v291 = vunpack.c.l.b16 %v243
    %v292 = vunpack.c.l.b16 %v244
    %v293 = vunpack.c.l.b16 %v245
    %v294 = vpack.c.b16 %v271, %v270
    %v295 = vpack.c.b16 %v273, %v272
    %v296 = vpack.c.b16 %v275, %v274
    %v297 = vpack.c.b16 %v277, %v276
    %v298 = vpack.c.b16 %v279, %v278
    %v299 = vpack.c.b16 %v281, %v280
    %v300 = vpack.c.b16 %v283, %v282
    %v301 = vpack.c.b16 %v285, %v284
    %v302 = vpack.c.b16 %v287, %v286
    %v303 = vpack.c.b16 %v289, %v288
    %v304 = vpack.c.b16 %v291, %v290
    %v305 = vpack.c.b16 %v293, %v292
    %v307 = vsel %vm156, %v218, 0
    %v310 = vsel %vm156, %v294, 0
    %v313 = vsel %vm156, %v295, 0
    %v316 = vsel %vm156, %v296, 0
    %v319 = vsel %vm156, %v297, 0
    %v322 = vsel %vm156, %v298, 0
    %v325 = vsel %vm156, %v299, 0
    %v328 = vsel %vm156, %v300, 0
    %v331 = vsel %vm156, %v301, 0
    %v334 = vsel %vm156, %v302, 0
    %v337 = vsel %vm156, %v303, 0
    %v340 = vsel %vm156, %v304, 0
    %v343 = vsel %vm156, %v305, 0
    %345 = vmatprep.subr.bf16.mxu0 0
    %346 = vmatpush1.bf16.xpose.msra.mxu0 %v331
    %347 = vmatprep.subr.bf16.mxu0 0
    %348 = vmatpush1.bf16.xpose.msra.mxu0 %v328
    %349 = vmatprep.subr.bf16.mxu0 0
    %350 = vmatpush1.bf16.xpose.msra.mxu0 %v325
    %351 = vmatprep.subr.bf16.mxu0 0
    %352 = vmatpush1.bf16.xpose.msra.mxu0 %v322
    %353 = vmatprep.subr.bf16.mxu0 0
    %354 = vmatpush1.bf16.xpose.msra.mxu0 %v319
    %355 = vmatprep.subr.bf16.mxu0 0
    %356 = vmatpush1.bf16.xpose.msra.mxu0 %v316
    %357 = vmatprep.subr.bf16.mxu0 0
    %358 = vmatpush1.bf16.xpose.msra.mxu0 %v313
    %359 = vmatprep.subr.bf16.mxu0 0
    %360 = vmatpush1.bf16.xpose.msra.mxu0 %v310
    %361 = vmatprep.subr.bf16.mxu0 0
    %362 = vmatpush2.bf16.xpose.msra.mxu0 0
    %363 = vmatprep.subr.bf16.mxu0 0
    %364 = vmatpush2.bf16.xpose.msra.mxu0 0
    %365 = vmatprep.subr.bf16.mxu0 0
    %366 = vmatpush2.bf16.xpose.msra.mxu0 0
    %367 = vmatprep.subr.bf16.mxu0 0
    %368 = vmatpush2.bf16.xpose.msra.mxu0 0
    %369 = vmatprep.subr.bf16.mxu0 0
    %370 = vmatpush2.bf16.xpose.msra.mxu0 %v343
    %371 = vmatprep.subr.bf16.mxu0 0
    %372 = vmatpush2.bf16.xpose.msra.mxu0 %v340
    %373 = vmatprep.subr.bf16.mxu0 0
    %374 = vmatpush2.bf16.xpose.msra.mxu0 %v337
    %375 = vmatprep.subr.bf16.mxu0 0
    %376 = vmatpush2.bf16.xpose.msra.mxu0 %v334
    %377 = vmatprep.mubr.bf16.mxu0 0
    %378 = vmatmul.mubr.bf16.gmra.mxu0 %v307
    %v379 = vpop.f32.mrf.mxu0
    %v380 = vadd.f32 0.0, %v379
    %v381 = vpop.f32.mrf.mxu0
    %v382 = vadd.f32 0.0, %v381
    %v383 = vpop.f32.mrf.mxu0
    %v384 = vadd.f32 0.0, %v383
    %v385 = vpop.f32.mrf.mxu0
    %v386 = vadd.f32 0.0, %v385
    %387 = vdwg.mxu0
    %v388 = vmul.f32 %v380, %v219
    %v389 = vmul.f32 %v382, %v219
    %v390 = vmul.f32 %v384, %v220
    %v391 = vmul.f32 %v386, %v220
    %v393 = vlaneseq
    %v394 = vshrl.u32 %v393, 7
    %v395 = vsub.s32 0, %v394
    %v396 = vrot.slane %v221, %v395
    %v397 = vlaneseq
    %v398 = vshrl.u32 %v397, 7
    %v399 = vsub.s32 2, %v398
    %v400 = vrot.slane %v221, %v399
    %v403 = vlaneseq
    %v404 = vshrl.u32 %v403, 7
    %v405 = vsub.s32 0, %v404
    %v406 = vrot.slane %v396, %v405
    %v407 = vlaneseq
    %v408 = vshrl.u32 %v407, 7
    %v409 = vsub.s32 0, %v408
    %v410 = vrot.slane %v400, %v409
    %v411 = vmul.f32 %v388, %v406
    %v412 = vmul.f32 %v389, %v410
    %v413 = vmul.f32 %v390, %v406
    %v414 = vmul.f32 %v391, %v410
    %v415 = vlaneseq
    %v416 = vshrl.u32 %v415, 7
    %v417 = vsub.s32 1, %v416
    %v418 = vrot.slane %v221, %v417
    %v419 = vlaneseq
    %v420 = vshrl.u32 %v419, 7
    %v421 = vsub.s32 3, %v420
    %v422 = vrot.slane %v221, %v421
    %v425 = vlaneseq
    %v426 = vshrl.u32 %v425, 7
    %v427 = vsub.s32 1, %v426
    %v428 = vrot.slane %v418, %v427
    %v429 = vlaneseq
    %v430 = vshrl.u32 %v429, 7
    %v431 = vsub.s32 1, %v430
    %v432 = vrot.slane %v422, %v431
    %v433 = vadd.f32 %v411, %v428
    %v434 = vadd.f32 %v412, %v432
    %v435 = vadd.f32 %v413, %v428
    %v436 = vadd.f32 %v414, %v432
    %vm437 = vcmask 195584
    %438 = vst.msk [vmem:[#allocation2] sm:$0xff] %vm437, %v433
    %440 = vrot.lane.b32.xlu0 %v433, 104
    %v441 = vpop.permute.xlu0 %440
    %443 = vst.msk [vmem:[#allocation2 + $0x8] sm:$0xff] %vm437, %v441
    %444 = vrot.lane.b32.xlu0 %v433, 80
    %v445 = vpop.permute.xlu0 %444
    %447 = vst.msk [vmem:[#allocation2 + $0x10] sm:$0xff] %vm437, %v445
    %448 = vrot.lane.b32.xlu0 %v433, 56
    %v449 = vpop.permute.xlu0 %448
    %451 = vst.msk [vmem:[#allocation2 + $0x18] sm:$0xff] %vm437, %v449
    %452 = vrot.lane.b32.xlu0 %v433, 32
    %v453 = vpop.permute.xlu0 %452
    %455 = vst.msk [vmem:[#allocation2 + $0x20] sm:$0xff] %vm437, %v453
    %457 = vrot.lane.b32.xlu0 %v433, 8
    %v458 = vpop.permute.xlu0 %457
    %459 = vrot.lane.b32.xlu0 %v434, 8
    %v460 = vpop.permute.xlu0 %459
    %vm461 = vcmask 64512
    %v462 = vsel %vm461, %v458, %v460
    %464 = vst.msk [vmem:[#allocation2 + $0x28] sm:$0xff] %vm437, %v462
    %465 = vrot.lane.b32.xlu0 %v434, 112
    %v466 = vpop.permute.xlu0 %465
    %468 = vst.msk [vmem:[#allocation2 + $0x30] sm:$0xff] %vm437, %v466
    %469 = vrot.lane.b32.xlu0 %v434, 88
    %v470 = vpop.permute.xlu0 %469
    %472 = vst.msk [vmem:[#allocation2 + $0x38] sm:$0xff] %vm437, %v470
    %s473 = scalar_lea.vmem [#allocation2], 64
    %474 = vst.msk [vmem:[%s473] sm:$0xff] %vm437, %v435
    %476 = vrot.lane.b32.xlu0 %v435, 104
    %v477 = vpop.permute.xlu0 %476
    %479 = vst.msk [vmem:[%s473 + $0x8] sm:$0xff] %vm437, %v477
    %480 = vrot.lane.b32.xlu0 %v435, 80
    %v481 = vpop.permute.xlu0 %480
    %483 = vst.msk [vmem:[%s473 + $0x10] sm:$0xff] %vm437, %v481
    %484 = vrot.lane.b32.xlu0 %v435, 56
    %v485 = vpop.permute.xlu0 %484
    %487 = vst.msk [vmem:[%s473 + $0x18] sm:$0xff] %vm437, %v485
    %488 = vrot.lane.b32.xlu0 %v435, 32
    %v489 = vpop.permute.xlu0 %488
    %491 = vst.msk [vmem:[%s473 + $0x20] sm:$0xff] %vm437, %v489
    %493 = vrot.lane.b32.xlu0 %v435, 8
    %v494 = vpop.permute.xlu0 %493
    %495 = vrot.lane.b32.xlu0 %v436, 8
    %v496 = vpop.permute.xlu0 %495
    %v497 = vsel %vm461, %v494, %v496
    %499 = vst.msk [vmem:[%s473 + $0x28] sm:$0xff] %vm437, %v497
    %500 = vrot.lane.b32.xlu0 %v436, 112
    %v501 = vpop.permute.xlu0 %500
    %503 = vst.msk [vmem:[%s473 + $0x30] sm:$0xff] %vm437, %v501
    %504 = vrot.lane.b32.xlu0 %v436, 88
    %v505 = vpop.permute.xlu0 %504
    %507 = vst.msk [vmem:[%s473 + $0x38] sm:$0xff] %vm437, %v505
    %v508 = vld [vmem:[%s1] sm:$0xff]
    %s509 = scalar_lea.vmem %s1, 8
    %v510 = vld [vmem:[%s509] sm:$0xff]
    %512 = vrot.lane.b32.xlu0 %v510, 8
    %v513 = vpop.permute.xlu0 %512
    %v515 = vsel %vm461, %v508, %v513
    %v516 = vld [vmem:[%s2] sm:$0xff]
    %v517 = vld [vmem:[%s2 + $0x8] sm:$0xff]
    %v518 = vld [vmem:[%s2 + $0x10] sm:$0xff]
    %v519 = vld [vmem:[%s2 + $0x18] sm:$0xff]
    %v520 = vld [vmem:[%s2 + $0x20] sm:$0xff]
    %v521 = vld [vmem:[%s2 + $0x28] sm:$0xff]
    %v522 = vld [vmem:[%s2 + $0x30] sm:$0xff]
    %v523 = vld [vmem:[%s2 + $0x38] sm:$0xff]
    %v525 = vsel %vm461, %v516, 0
    %v528 = vsel %vm461, %v517, 0
    %v531 = vsel %vm461, %v518, 0
    %v534 = vsel %vm461, %v519, 0
    %v537 = vsel %vm461, %v520, 0
    %v540 = vsel %vm461, %v521, 0
    %v543 = vsel %vm461, %v522, 0
    %v546 = vsel %vm461, %v523, 0
    %548 = vmatprep.subr.mxu0 0.0
    %549 = vmatpush1.msra.mxu0 0.0
    %550 = vmatprep.subr.mxu0 0.0
    %551 = vmatpush1.msra.mxu0 0.0
    %552 = vmatprep.subr.mxu0 0.0
    %553 = vmatpush1.msra.mxu0 0.0
    %554 = vmatprep.subr.mxu0 0.0
    %555 = vmatpush1.msra.mxu0 0.0
    %556 = vmatprep.subr.mxu0 0.0
    %557 = vmatpush1.msra.mxu0 0.0
    %558 = vmatprep.subr.mxu0 0.0
    %559 = vmatpush1.msra.mxu0 0.0
    %560 = vmatprep.subr.mxu0 0.0
    %561 = vmatpush1.msra.mxu0 0.0
    %562 = vmatprep.subr.mxu0 0.0
    %563 = vmatpush1.msra.mxu0 0.0
    %564 = vmatprep.subr.mxu0 0.0
    %565 = vmatpush1.msra.mxu0 0.0
    %566 = vmatprep.subr.mxu0 0.0
    %567 = vmatpush1.msra.mxu0 0.0
    %568 = vmatprep.subr.mxu0 0.0
    %569 = vmatpush1.msra.mxu0 0.0
    %570 = vmatprep.subr.mxu0 0.0
    %571 = vmatpush1.msra.mxu0 0.0
    %572 = vmatprep.subr.mxu0 0.0
    %573 = vmatpush1.msra.mxu0 0.0
    %574 = vmatprep.subr.mxu0 0.0
    %575 = vmatpush1.msra.mxu0 0.0
    %576 = vmatprep.subr.mxu0 0.0
    %577 = vmatpush1.msra.mxu0 0.0
    %578 = vmatprep.subr.mxu0 0.0
    %579 = vmatpush1.msra.mxu0 %v515
    %580 = vmatprep.subr.mxu0 0.0
    %581 = vmatpush2.msra.mxu0 0.0
    %582 = vmatprep.subr.mxu0 0.0
    %583 = vmatpush2.msra.mxu0 0.0
    %584 = vmatprep.subr.mxu0 0.0
    %585 = vmatpush2.msra.mxu0 0.0
    %586 = vmatprep.subr.mxu0 0.0
    %587 = vmatpush2.msra.mxu0 0.0
    %588 = vmatprep.subr.mxu0 0.0
    %589 = vmatpush2.msra.mxu0 0.0
    %590 = vmatprep.subr.mxu0 0.0
    %591 = vmatpush2.msra.mxu0 0.0
    %592 = vmatprep.subr.mxu0 0.0
    %593 = vmatpush2.msra.mxu0 0.0
    %594 = vmatprep.subr.mxu0 0.0
    %595 = vmatpush2.msra.mxu0 0.0
    %596 = vmatprep.subr.mxu0 0.0
    %597 = vmatpush2.msra.mxu0 0.0
    %598 = vmatprep.subr.mxu0 0.0
    %599 = vmatpush2.msra.mxu0 0.0
    %600 = vmatprep.subr.mxu0 0.0
    %601 = vmatpush2.msra.mxu0 0.0
    %602 = vmatprep.subr.mxu0 0.0
    %603 = vmatpush2.msra.mxu0 0.0
    %604 = vmatprep.subr.mxu0 0.0
    %605 = vmatpush2.msra.mxu0 0.0
    %606 = vmatprep.subr.mxu0 0.0
    %607 = vmatpush2.msra.mxu0 0.0
    %608 = vmatprep.subr.mxu0 0.0
    %609 = vmatpush2.msra.mxu0 0.0
    %610 = vmatprep.subr.mxu0 0.0
    %611 = vmatpush2.msra.mxu0 0.0
    %612 = vmatprep.mubr.f32.mxu0 0.0
    %613 = vmatmul.mubr.f32.gmra.mxu0 %v525
    %v614 = vpop.f32.mrf.mxu0
    %v615 = vadd.f32 0.0, %v614
    %v616 = vpop.f32.mrf.mxu0
    %617 = vmatprep.mubr.f32.mxu0 0.0
    %618 = vmatmul.mubr.f32.gmra.mxu0 %v528
    %v619 = vpop.f32.mrf.mxu0
    %v620 = vadd.f32 0.0, %v619
    %v621 = vpop.f32.mrf.mxu0
    %622 = vmatprep.mubr.f32.mxu0 0.0
    %623 = vmatmul.mubr.f32.gmra.mxu0 %v531
    %v624 = vpop.f32.mrf.mxu0
    %v625 = vadd.f32 0.0, %v624
    %v626 = vpop.f32.mrf.mxu0
    %627 = vmatprep.mubr.f32.mxu0 0.0
    %628 = vmatmul.mubr.f32.gmra.mxu0 %v534
    %v629 = vpop.f32.mrf.mxu0
    %v630 = vadd.f32 0.0, %v629
    %v631 = vpop.f32.mrf.mxu0
    %632 = vmatprep.mubr.f32.mxu0 0.0
    %633 = vmatmul.mubr.f32.gmra.mxu0 %v537
    %v634 = vpop.f32.mrf.mxu0
    %v635 = vadd.f32 0.0, %v634
    %v636 = vpop.f32.mrf.mxu0
    %637 = vmatprep.mubr.f32.mxu0 0.0
    %638 = vmatmul.mubr.f32.gmra.mxu0 %v540
    %v639 = vpop.f32.mrf.mxu0
    %v640 = vadd.f32 0.0, %v639
    %v641 = vpop.f32.mrf.mxu0
    %642 = vmatprep.mubr.f32.mxu0 0.0
    %643 = vmatmul.mubr.f32.gmra.mxu0 %v543
    %v644 = vpop.f32.mrf.mxu0
    %v645 = vadd.f32 0.0, %v644
    %v646 = vpop.f32.mrf.mxu0
    %647 = vmatprep.mubr.f32.mxu0 0.0
    %648 = vmatmul.mubr.f32.gmra.mxu0 %v546
    %v649 = vpop.f32.mrf.mxu0
    %v650 = vadd.f32 0.0, %v649
    %v651 = vpop.f32.mrf.mxu0
    %652 = vdwg.mxu0
    %v653 = vld [vmem:[%s3] sm:$0xff]
    %v654 = vld [vmem:[%s3 + $0x8] sm:$0xff]
    %vm655 = vcmask 130048
    %v657 = vsel %vm655, %v615, 0
    %v660 = vsel %vm655, %v620, 0
    %v663 = vsel %vm655, %v625, 0
    %v666 = vsel %vm655, %v630, 0
    %v669 = vsel %vm655, %v635, 0
    %v672 = vsel %vm655, %v640, 0
    %v675 = vsel %vm655, %v645, 0
    %v678 = vsel %vm655, %v650, 0
    %680 = vmatprep.subr.mxu0 0.0
    %681 = vmatpush1.msra.mxu0 0.0
    %682 = vmatprep.subr.mxu0 0.0
    %683 = vmatpush1.msra.mxu0 0.0
    %684 = vmatprep.subr.mxu0 0.0
    %685 = vmatpush1.msra.mxu0 0.0
    %686 = vmatprep.subr.mxu0 0.0
    %687 = vmatpush1.msra.mxu0 0.0
    %688 = vmatprep.subr.mxu0 0.0
    %689 = vmatpush1.msra.mxu0 0.0
    %690 = vmatprep.subr.mxu0 0.0
    %691 = vmatpush1.msra.mxu0 0.0
    %692 = vmatprep.subr.mxu0 0.0
    %693 = vmatpush1.msra.mxu0 0.0
    %694 = vmatprep.subr.mxu0 0.0
    %695 = vmatpush1.msra.mxu0 0.0
    %696 = vmatprep.subr.mxu0 0.0
    %697 = vmatpush1.msra.mxu0 0.0
    %698 = vmatprep.subr.mxu0 0.0
    %699 = vmatpush1.msra.mxu0 0.0
    %700 = vmatprep.subr.mxu0 0.0
    %701 = vmatpush1.msra.mxu0 0.0
    %702 = vmatprep.subr.mxu0 0.0
    %703 = vmatpush1.msra.mxu0 0.0
    %704 = vmatprep.subr.mxu0 0.0
    %705 = vmatpush1.msra.mxu0 0.0
    %706 = vmatprep.subr.mxu0 0.0
    %707 = vmatpush1.msra.mxu0 0.0
    %708 = vmatprep.subr.mxu0 0.0
    %709 = vmatpush1.msra.mxu0 %v654
    %710 = vmatprep.subr.mxu0 0.0
    %711 = vmatpush1.msra.mxu0 %v653
    %712 = vmatprep.subr.mxu0 0.0
    %713 = vmatpush2.msra.mxu0 0.0
    %714 = vmatprep.subr.mxu0 0.0
    %715 = vmatpush2.msra.mxu0 0.0
    %716 = vmatprep.subr.mxu0 0.0
    %717 = vmatpush2.msra.mxu0 0.0
    %718 = vmatprep.subr.mxu0 0.0
    %719 = vmatpush2.msra.mxu0 0.0
    %720 = vmatprep.subr.mxu0 0.0
    %721 = vmatpush2.msra.mxu0 0.0
    %722 = vmatprep.subr.mxu0 0.0
    %723 = vmatpush2.msra.mxu0 0.0
    %724 = vmatprep.subr.mxu0 0.0
    %725 = vmatpush2.msra.mxu0 0.0
    %726 = vmatprep.subr.mxu0 0.0
    %727 = vmatpush2.msra.mxu0 0.0
    %728 = vmatprep.subr.mxu0 0.0
    %729 = vmatpush2.msra.mxu0 0.0
    %730 = vmatprep.subr.mxu0 0.0
    %731 = vmatpush2.msra.mxu0 0.0
    %732 = vmatprep.subr.mxu0 0.0
    %733 = vmatpush2.msra.mxu0 0.0
    %734 = vmatprep.subr.mxu0 0.0
    %735 = vmatpush2.msra.mxu0 0.0
    %736 = vmatprep.subr.mxu0 0.0
    %737 = vmatpush2.msra.mxu0 0.0
    %738 = vmatprep.subr.mxu0 0.0
    %739 = vmatpush2.msra.mxu0 0.0
    %740 = vmatprep.subr.mxu0 0.0
    %741 = vmatpush2.msra.mxu0 0.0
    %742 = vmatprep.subr.mxu0 0.0
    %743 = vmatpush2.msra.mxu0 0.0
    %744 = vmatprep.mubr.f32.mxu0 0.0
    %745 = vmatmul.mubr.f32.gmra.mxu0 %v657
    %v746 = vpop.f32.mrf.mxu0
    %v747 = vadd.f32 0.0, %v746
    %v748 = vpop.f32.mrf.mxu0
    %749 = vmatprep.mubr.f32.mxu0 0.0
    %750 = vmatmul.mubr.f32.gmra.mxu0 %v660
    %v751 = vpop.f32.mrf.mxu0
    %v752 = vadd.f32 0.0, %v751
    %v753 = vpop.f32.mrf.mxu0
    %754 = vmatprep.mubr.f32.mxu0 0.0
    %755 = vmatmul.mubr.f32.gmra.mxu0 %v663
    %v756 = vpop.f32.mrf.mxu0
    %v757 = vadd.f32 0.0, %v756
    %v758 = vpop.f32.mrf.mxu0
    %759 = vmatprep.mubr.f32.mxu0 0.0
    %760 = vmatmul.mubr.f32.gmra.mxu0 %v666
    %v761 = vpop.f32.mrf.mxu0
    %v762 = vadd.f32 0.0, %v761
    %v763 = vpop.f32.mrf.mxu0
    %764 = vmatprep.mubr.f32.mxu0 0.0
    %765 = vmatmul.mubr.f32.gmra.mxu0 %v669
    %v766 = vpop.f32.mrf.mxu0
    %v767 = vadd.f32 0.0, %v766
    %v768 = vpop.f32.mrf.mxu0
    %769 = vmatprep.mubr.f32.mxu0 0.0
    %770 = vmatmul.mubr.f32.gmra.mxu0 %v672
    %v771 = vpop.f32.mrf.mxu0
    %v772 = vadd.f32 0.0, %v771
    %v773 = vpop.f32.mrf.mxu0
    %774 = vmatprep.mubr.f32.mxu0 0.0
    %775 = vmatmul.mubr.f32.gmra.mxu0 %v675
    %v776 = vpop.f32.mrf.mxu0
    %v777 = vadd.f32 0.0, %v776
    %v778 = vpop.f32.mrf.mxu0
    %779 = vmatprep.mubr.f32.mxu0 0.0
    %780 = vmatmul.mubr.f32.gmra.mxu0 %v678
    %v781 = vpop.f32.mrf.mxu0
    %v782 = vadd.f32 0.0, %v781
    %v783 = vpop.f32.mrf.mxu0
    %784 = vdwg.mxu0
    %v785 = vld [vmem:[#allocation14] sm:$0xff]
    %v786 = vld [vmem:[#allocation14 + $0x8] sm:$0xff]
    %v787 = vld [vmem:[#allocation14 + $0x10] sm:$0xff]
    %v788 = vld [vmem:[#allocation14 + $0x18] sm:$0xff]
    %v789 = vld [vmem:[#allocation14 + $0x20] sm:$0xff]
    %v790 = vld [vmem:[#allocation14 + $0x28] sm:$0xff]
    %v791 = vld [vmem:[#allocation14 + $0x30] sm:$0xff]
    %v792 = vld [vmem:[#allocation14 + $0x38] sm:$0xff]
    %s793 = scalar_lea.vmem [#allocation14], 64
    %v794 = vld [vmem:[%s793] sm:$0xff]
    %v795 = vld [vmem:[%s793 + $0x8] sm:$0xff]
    %v796 = vld [vmem:[%s793 + $0x10] sm:$0xff]
    %v797 = vld [vmem:[%s793 + $0x18] sm:$0xff]
    %v798 = vld [vmem:[%s793 + $0x20] sm:$0xff]
    %v799 = vld [vmem:[%s793 + $0x28] sm:$0xff]
    %v800 = vld [vmem:[%s793 + $0x30] sm:$0xff]
    %v801 = vld [vmem:[%s793 + $0x38] sm:$0xff]
    %v802 = vld [vmem:[#allocation13] sm:$0xff]
    %v803 = vld [vmem:[#allocation13 + $0x8] sm:$0xff]
    %v804 = vld [vmem:[#allocation13 + $0x10] sm:$0xff]
    %v805 = vld [vmem:[#allocation13 + $0x18] sm:$0xff]
    %v806 = vld [vmem:[#allocation13 + $0x20] sm:$0xff]
    %v807 = vld [vmem:[#allocation13 + $0x28] sm:$0xff]
    %v808 = vld [vmem:[#allocation13 + $0x30] sm:$0xff]
    %v809 = vld [vmem:[#allocation13 + $0x38] sm:$0xff]
    %v810 = vld [vmem:[#allocation13 + $0x40] sm:$0xff]
    %v811 = vld [vmem:[#allocation13 + $0x48] sm:$0xff]
    %v812 = vld [vmem:[#allocation13 + $0x50] sm:$0xff]
    %v813 = vld [vmem:[#allocation13 + $0x58] sm:$0xff]
    %v814 = vld [vmem:[#allocation13 + $0x60] sm:$0xff]
    %v815 = vld [vmem:[#allocation13 + $0x68] sm:$0xff]
    %v816 = vld [vmem:[#allocation13 + $0x70] sm:$0xff]
    %v817 = vld [vmem:[#allocation13 + $0x78] sm:$0xff]
    %818 = vmatprep.subr.mxu0 0.0
    %819 = vmatpush1.msra.mxu0 %v817
    %820 = vmatprep.subr.mxu0 0.0
    %821 = vmatpush1.msra.mxu0 %v816
    %822 = vmatprep.subr.mxu0 0.0
    %823 = vmatpush1.msra.mxu0 %v815
    %824 = vmatprep.subr.mxu0 0.0
    %825 = vmatpush1.msra.mxu0 %v814
    %826 = vmatprep.subr.mxu0 0.0
    %827 = vmatpush1.msra.mxu0 %v813
    %828 = vmatprep.subr.mxu0 0.0
    %829 = vmatpush1.msra.mxu0 %v812
    %830 = vmatprep.subr.mxu0 0.0
    %831 = vmatpush1.msra.mxu0 %v811
    %832 = vmatprep.subr.mxu0 0.0
    %833 = vmatpush1.msra.mxu0 %v810
    %834 = vmatprep.subr.mxu0 0.0
    %835 = vmatpush1.msra.mxu0 %v809
    %836 = vmatprep.subr.mxu0 0.0
    %837 = vmatpush1.msra.mxu0 %v808
    %838 = vmatprep.subr.mxu0 0.0
    %839 = vmatpush1.msra.mxu0 %v807
    %840 = vmatprep.subr.mxu0 0.0
    %841 = vmatpush1.msra.mxu0 %v806
    %842 = vmatprep.subr.mxu0 0.0
    %843 = vmatpush1.msra.mxu0 %v805
    %844 = vmatprep.subr.mxu0 0.0
    %845 = vmatpush1.msra.mxu0 %v804
    %846 = vmatprep.subr.mxu0 0.0
    %847 = vmatpush1.msra.mxu0 %v803
    %848 = vmatprep.subr.mxu0 0.0
    %849 = vmatpush1.msra.mxu0 %v802
    %850 = vmatprep.subr.mxu0 0.0
    %851 = vmatpush2.msra.mxu0 0.0
    %852 = vmatprep.subr.mxu0 0.0
    %853 = vmatpush2.msra.mxu0 0.0
    %854 = vmatprep.subr.mxu0 0.0
    %855 = vmatpush2.msra.mxu0 0.0
    %856 = vmatprep.subr.mxu0 0.0
    %857 = vmatpush2.msra.mxu0 0.0
    %858 = vmatprep.subr.mxu0 0.0
    %859 = vmatpush2.msra.mxu0 0.0
    %860 = vmatprep.subr.mxu0 0.0
    %861 = vmatpush2.msra.mxu0 0.0
    %862 = vmatprep.subr.mxu0 0.0
    %863 = vmatpush2.msra.mxu0 0.0
    %864 = vmatprep.subr.mxu0 0.0
    %865 = vmatpush2.msra.mxu0 0.0
    %866 = vmatprep.subr.mxu0 0.0
    %867 = vmatpush2.msra.mxu0 0.0
    %868 = vmatprep.subr.mxu0 0.0
    %869 = vmatpush2.msra.mxu0 0.0
    %870 = vmatprep.subr.mxu0 0.0
    %871 = vmatpush2.msra.mxu0 0.0
    %872 = vmatprep.subr.mxu0 0.0
    %873 = vmatpush2.msra.mxu0 0.0
    %874 = vmatprep.subr.mxu0 0.0
    %875 = vmatpush2.msra.mxu0 0.0
    %876 = vmatprep.subr.mxu0 0.0
    %877 = vmatpush2.msra.mxu0 0.0
    %878 = vmatprep.subr.mxu0 0.0
    %879 = vmatpush2.msra.mxu0 0.0
    %880 = vmatprep.subr.mxu0 0.0
    %881 = vmatpush2.msra.mxu0 0.0
    %882 = vmatprep.mubr.f32.mxu0 0.0
    %883 = vmatmul.mubr.f32.gmra.mxu0 %v747
    %v884 = vpop.f32.mrf.mxu0
    %v885 = vadd.f32 0.0, %v884
    %v886 = vpop.f32.mrf.mxu0
    %887 = vmatprep.mubr.f32.mxu0 0.0
    %888 = vmatmul.mubr.f32.gmra.mxu0 %v752
    %v889 = vpop.f32.mrf.mxu0
    %v890 = vadd.f32 0.0, %v889
    %v891 = vpop.f32.mrf.mxu0
    %892 = vmatprep.mubr.f32.mxu0 0.0
    %893 = vmatmul.mubr.f32.gmra.mxu0 %v757
    %v894 = vpop.f32.mrf.mxu0
    %v895 = vadd.f32 0.0, %v894
    %v896 = vpop.f32.mrf.mxu0
    %897 = vmatprep.mubr.f32.mxu0 0.0
    %898 = vmatmul.mubr.f32.gmra.mxu0 %v762
    %v899 = vpop.f32.mrf.mxu0
    %v900 = vadd.f32 0.0, %v899
    %v901 = vpop.f32.mrf.mxu0
    %902 = vmatprep.mubr.f32.mxu0 0.0
    %903 = vmatmul.mubr.f32.gmra.mxu0 %v767
    %v904 = vpop.f32.mrf.mxu0
    %v905 = vadd.f32 0.0, %v904
    %v906 = vpop.f32.mrf.mxu0
    %907 = vmatprep.mubr.f32.mxu0 0.0
    %908 = vmatmul.mubr.f32.gmra.mxu0 %v772
    %v909 = vpop.f32.mrf.mxu0
    %v910 = vadd.f32 0.0, %v909
    %v911 = vpop.f32.mrf.mxu0
    %912 = vmatprep.mubr.f32.mxu0 0.0
    %913 = vmatmul.mubr.f32.gmra.mxu0 %v777
    %v914 = vpop.f32.mrf.mxu0
    %v915 = vadd.f32 0.0, %v914
    %v916 = vpop.f32.mrf.mxu0
    %917 = vmatprep.mubr.f32.mxu0 0.0
    %918 = vmatmul.mubr.f32.gmra.mxu0 %v782
    %v919 = vpop.f32.mrf.mxu0
    %v920 = vadd.f32 0.0, %v919
    %v921 = vpop.f32.mrf.mxu0
    %922 = vdwg.mxu0
    %s923 = scalar_lea.vmem [#allocation13], 128
    %v924 = vld [vmem:[%s923] sm:$0xff]
    %v925 = vld [vmem:[%s923 + $0x8] sm:$0xff]
    %v926 = vld [vmem:[%s923 + $0x10] sm:$0xff]
    %v927 = vld [vmem:[%s923 + $0x18] sm:$0xff]
    %v928 = vld [vmem:[%s923 + $0x20] sm:$0xff]
    %v929 = vld [vmem:[%s923 + $0x28] sm:$0xff]
    %v930 = vld [vmem:[%s923 + $0x30] sm:$0xff]
    %v931 = vld [vmem:[%s923 + $0x38] sm:$0xff]
    %v932 = vld [vmem:[%s923 + $0x40] sm:$0xff]
    %v933 = vld [vmem:[%s923 + $0x48] sm:$0xff]
    %v934 = vld [vmem:[%s923 + $0x50] sm:$0xff]
    %v935 = vld [vmem:[%s923 + $0x58] sm:$0xff]
    %v936 = vld [vmem:[%s923 + $0x60] sm:$0xff]
    %v937 = vld [vmem:[%s923 + $0x68] sm:$0xff]
    %v938 = vld [vmem:[%s923 + $0x70] sm:$0xff]
    %v939 = vld [vmem:[%s923 + $0x78] sm:$0xff]
    %940 = vmatprep.subr.mxu0 0.0
    %941 = vmatpush1.msra.mxu0 %v939
    %942 = vmatprep.subr.mxu0 0.0
    %943 = vmatpush1.msra.mxu0 %v938
    %944 = vmatprep.subr.mxu0 0.0
    %945 = vmatpush1.msra.mxu0 %v937
    %946 = vmatprep.subr.mxu0 0.0
    %947 = vmatpush1.msra.mxu0 %v936
    %948 = vmatprep.subr.mxu0 0.0
    %949 = vmatpush1.msra.mxu0 %v935
    %950 = vmatprep.subr.mxu0 0.0
    %951 = vmatpush1.msra.mxu0 %v934
    %952 = vmatprep.subr.mxu0 0.0
    %953 = vmatpush1.msra.mxu0 %v933
    %954 = vmatprep.subr.mxu0 0.0
    %955 = vmatpush1.msra.mxu0 %v932
    %956 = vmatprep.subr.mxu0 0.0
    %957 = vmatpush1.msra.mxu0 %v931
    %958 = vmatprep.subr.mxu0 0.0
    %959 = vmatpush1.msra.mxu0 %v930
    %960 = vmatprep.subr.mxu0 0.0
    %961 = vmatpush1.msra.mxu0 %v929
    %962 = vmatprep.subr.mxu0 0.0
    %963 = vmatpush1.msra.mxu0 %v928
    %964 = vmatprep.subr.mxu0 0.0
    %965 = vmatpush1.msra.mxu0 %v927
    %966 = vmatprep.subr.mxu0 0.0
    %967 = vmatpush1.msra.mxu0 %v926
    %968 = vmatprep.subr.mxu0 0.0
    %969 = vmatpush1.msra.mxu0 %v925
    %970 = vmatprep.subr.mxu0 0.0
    %971 = vmatpush1.msra.mxu0 %v924
    %972 = vmatprep.subr.mxu0 0.0
    %973 = vmatpush2.msra.mxu0 0.0
    %974 = vmatprep.subr.mxu0 0.0
    %975 = vmatpush2.msra.mxu0 0.0
    %976 = vmatprep.subr.mxu0 0.0
    %977 = vmatpush2.msra.mxu0 0.0
    %978 = vmatprep.subr.mxu0 0.0
    %979 = vmatpush2.msra.mxu0 0.0
    %980 = vmatprep.subr.mxu0 0.0
    %981 = vmatpush2.msra.mxu0 0.0
    %982 = vmatprep.subr.mxu0 0.0
    %983 = vmatpush2.msra.mxu0 0.0
    %984 = vmatprep.subr.mxu0 0.0
    %985 = vmatpush2.msra.mxu0 0.0
    %986 = vmatprep.subr.mxu0 0.0
    %987 = vmatpush2.msra.mxu0 0.0
    %988 = vmatprep.subr.mxu0 0.0
    %989 = vmatpush2.msra.mxu0 0.0
    %990 = vmatprep.subr.mxu0 0.0
    %991 = vmatpush2.msra.mxu0 0.0
    %992 = vmatprep.subr.mxu0 0.0
    %993 = vmatpush2.msra.mxu0 0.0
    %994 = vmatprep.subr.mxu0 0.0
    %995 = vmatpush2.msra.mxu0 0.0
    %996 = vmatprep.subr.mxu0 0.0
    %997 = vmatpush2.msra.mxu0 0.0
    %998 = vmatprep.subr.mxu0 0.0
    %999 = vmatpush2.msra.mxu0 0.0
    %1000 = vmatprep.subr.mxu0 0.0
    %1001 = vmatpush2.msra.mxu0 0.0
    %1002 = vmatprep.subr.mxu0 0.0
    %1003 = vmatpush2.msra.mxu0 0.0
    %1004 = vmatprep.mubr.f32.mxu0 0.0
    %1005 = vmatmul.mubr.f32.gmra.mxu0 %v747
    %v1006 = vpop.f32.mrf.mxu0
    %v1007 = vadd.f32 0.0, %v1006
    %v1008 = vpop.f32.mrf.mxu0
    %1009 = vmatprep.mubr.f32.mxu0 0.0
    %1010 = vmatmul.mubr.f32.gmra.mxu0 %v752
    %v1011 = vpop.f32.mrf.mxu0
    %v1012 = vadd.f32 0.0, %v1011
    %v1013 = vpop.f32.mrf.mxu0
    %1014 = vmatprep.mubr.f32.mxu0 0.0
    %1015 = vmatmul.mubr.f32.gmra.mxu0 %v757
    %v1016 = vpop.f32.mrf.mxu0
    %v1017 = vadd.f32 0.0, %v1016
    %v1018 = vpop.f32.mrf.mxu0
    %1019 = vmatprep.mubr.f32.mxu0 0.0
    %1020 = vmatmul.mubr.f32.gmra.mxu0 %v762
    %v1021 = vpop.f32.mrf.mxu0
    %v1022 = vadd.f32 0.0, %v1021
    %v1023 = vpop.f32.mrf.mxu0
    %1024 = vmatprep.mubr.f32.mxu0 0.0
    %1025 = vmatmul.mubr.f32.gmra.mxu0 %v767
    %v1026 = vpop.f32.mrf.mxu0
    %v1027 = vadd.f32 0.0, %v1026
    %v1028 = vpop.f32.mrf.mxu0
    %1029 = vmatprep.mubr.f32.mxu0 0.0
    %1030 = vmatmul.mubr.f32.gmra.mxu0 %v772
    %v1031 = vpop.f32.mrf.mxu0
    %v1032 = vadd.f32 0.0, %v1031
    %v1033 = vpop.f32.mrf.mxu0
    %1034 = vmatprep.mubr.f32.mxu0 0.0
    %1035 = vmatmul.mubr.f32.gmra.mxu0 %v777
    %v1036 = vpop.f32.mrf.mxu0
    %v1037 = vadd.f32 0.0, %v1036
    %v1038 = vpop.f32.mrf.mxu0
    %1039 = vmatprep.mubr.f32.mxu0 0.0
    %1040 = vmatmul.mubr.f32.gmra.mxu0 %v782
    %v1041 = vpop.f32.mrf.mxu0
    %v1042 = vadd.f32 0.0, %v1041
    %v1043 = vpop.f32.mrf.mxu0
    %1044 = vdwg.mxu0
    %s1045 = scalar_lea.vmem [#allocation13], 256
    %v1046 = vld [vmem:[%s1045] sm:$0xff]
    %v1047 = vld [vmem:[%s1045 + $0x8] sm:$0xff]
    %v1048 = vld [vmem:[%s1045 + $0x10] sm:$0xff]
    %v1049 = vld [vmem:[%s1045 + $0x18] sm:$0xff]
    %v1050 = vld [vmem:[%s1045 + $0x20] sm:$0xff]
    %v1051 = vld [vmem:[%s1045 + $0x28] sm:$0xff]
    %v1052 = vld [vmem:[%s1045 + $0x30] sm:$0xff]
    %v1053 = vld [vmem:[%s1045 + $0x38] sm:$0xff]
    %v1054 = vld [vmem:[%s1045 + $0x40] sm:$0xff]
    %v1055 = vld [vmem:[%s1045 + $0x48] sm:$0xff]
    %v1056 = vld [vmem:[%s1045 + $0x50] sm:$0xff]
    %v1057 = vld [vmem:[%s1045 + $0x58] sm:$0xff]
    %v1058 = vld [vmem:[%s1045 + $0x60] sm:$0xff]
    %v1059 = vld [vmem:[%s1045 + $0x68] sm:$0xff]
    %v1060 = vld [vmem:[%s1045 + $0x70] sm:$0xff]
    %v1061 = vld [vmem:[%s1045 + $0x78] sm:$0xff]
    %1062 = vmatprep.subr.mxu0 0.0
    %1063 = vmatpush1.msra.mxu0 %v1061
    %1064 = vmatprep.subr.mxu0 0.0
    %1065 = vmatpush1.msra.mxu0 %v1060
    %1066 = vmatprep.subr.mxu0 0.0
    %1067 = vmatpush1.msra.mxu0 %v1059
    %1068 = vmatprep.subr.mxu0 0.0
    %1069 = vmatpush1.msra.mxu0 %v1058
    %1070 = vmatprep.subr.mxu0 0.0
    %1071 = vmatpush1.msra.mxu0 %v1057
    %1072 = vmatprep.subr.mxu0 0.0
    %1073 = vmatpush1.msra.mxu0 %v1056
    %1074 = vmatprep.subr.mxu0 0.0
    %1075 = vmatpush1.msra.mxu0 %v1055
    %1076 = vmatprep.subr.mxu0 0.0
    %1077 = vmatpush1.msra.mxu0 %v1054
    %1078 = vmatprep.subr.mxu0 0.0
    %1079 = vmatpush1.msra.mxu0 %v1053
    %1080 = vmatprep.subr.mxu0 0.0
    %1081 = vmatpush1.msra.mxu0 %v1052
    %1082 = vmatprep.subr.mxu0 0.0
    %1083 = vmatpush1.msra.mxu0 %v1051
    %1084 = vmatprep.subr.mxu0 0.0
    %1085 = vmatpush1.msra.mxu0 %v1050
    %1086 = vmatprep.subr.mxu0 0.0
    %1087 = vmatpush1.msra.mxu0 %v1049
    %1088 = vmatprep.subr.mxu0 0.0
    %1089 = vmatpush1.msra.mxu0 %v1048
    %1090 = vmatprep.subr.mxu0 0.0
    %1091 = vmatpush1.msra.mxu0 %v1047
    %1092 = vmatprep.subr.mxu0 0.0
    %1093 = vmatpush1.msra.mxu0 %v1046
    %1094 = vmatprep.subr.mxu0 0.0
    %1095 = vmatpush2.msra.mxu0 0.0
    %1096 = vmatprep.subr.mxu0 0.0
    %1097 = vmatpush2.msra.mxu0 0.0
    %1098 = vmatprep.subr.mxu0 0.0
    %1099 = vmatpush2.msra.mxu0 0.0
    %1100 = vmatprep.subr.mxu0 0.0
    %1101 = vmatpush2.msra.mxu0 0.0
    %1102 = vmatprep.subr.mxu0 0.0
    %1103 = vmatpush2.msra.mxu0 0.0
    %1104 = vmatprep.subr.mxu0 0.0
    %1105 = vmatpush2.msra.mxu0 0.0
    %1106 = vmatprep.subr.mxu0 0.0
    %1107 = vmatpush2.msra.mxu0 0.0
    %1108 = vmatprep.subr.mxu0 0.0
    %1109 = vmatpush2.msra.mxu0 0.0
    %1110 = vmatprep.subr.mxu0 0.0
    %1111 = vmatpush2.msra.mxu0 0.0
    %1112 = vmatprep.subr.mxu0 0.0
    %1113 = vmatpush2.msra.mxu0 0.0
    %1114 = vmatprep.subr.mxu0 0.0
    %1115 = vmatpush2.msra.mxu0 0.0
    %1116 = vmatprep.subr.mxu0 0.0
    %1117 = vmatpush2.msra.mxu0 0.0
    %1118 = vmatprep.subr.mxu0 0.0
    %1119 = vmatpush2.msra.mxu0 0.0
    %1120 = vmatprep.subr.mxu0 0.0
    %1121 = vmatpush2.msra.mxu0 0.0
    %1122 = vmatprep.subr.mxu0 0.0
    %1123 = vmatpush2.msra.mxu0 0.0
    %1124 = vmatprep.subr.mxu0 0.0
    %1125 = vmatpush2.msra.mxu0 0.0
    %1126 = vmatprep.mubr.f32.mxu0 0.0
    %1127 = vmatmul.mubr.f32.gmra.mxu0 %v747
    %v1128 = vpop.f32.mrf.mxu0
    %v1129 = vadd.f32 0.0, %v1128
    %v1130 = vpop.f32.mrf.mxu0
    %1131 = vmatprep.mubr.f32.mxu0 0.0
    %1132 = vmatmul.mubr.f32.gmra.mxu0 %v752
    %v1133 = vpop.f32.mrf.mxu0
    %v1134 = vadd.f32 0.0, %v1133
    %v1135 = vpop.f32.mrf.mxu0
    %1136 = vmatprep.mubr.f32.mxu0 0.0
    %1137 = vmatmul.mubr.f32.gmra.mxu0 %v757
    %v1138 = vpop.f32.mrf.mxu0
    %v1139 = vadd.f32 0.0, %v1138
    %v1140 = vpop.f32.mrf.mxu0
    %1141 = vmatprep.mubr.f32.mxu0 0.0
    %1142 = vmatmul.mubr.f32.gmra.mxu0 %v762
    %v1143 = vpop.f32.mrf.mxu0
    %v1144 = vadd.f32 0.0, %v1143
    %v1145 = vpop.f32.mrf.mxu0
    %1146 = vmatprep.mubr.f32.mxu0 0.0
    %1147 = vmatmul.mubr.f32.gmra.mxu0 %v767
    %v1148 = vpop.f32.mrf.mxu0
    %v1149 = vadd.f32 0.0, %v1148
    %v1150 = vpop.f32.mrf.mxu0
    %1151 = vmatprep.mubr.f32.mxu0 0.0
    %1152 = vmatmul.mubr.f32.gmra.mxu0 %v772
    %v1153 = vpop.f32.mrf.mxu0
    %v1154 = vadd.f32 0.0, %v1153
    %v1155 = vpop.f32.mrf.mxu0
    %1156 = vmatprep.mubr.f32.mxu0 0.0
    %1157 = vmatmul.mubr.f32.gmra.mxu0 %v777
    %v1158 = vpop.f32.mrf.mxu0
    %v1159 = vadd.f32 0.0, %v1158
    %v1160 = vpop.f32.mrf.mxu0
    %1161 = vmatprep.mubr.f32.mxu0 0.0
    %1162 = vmatmul.mubr.f32.gmra.mxu0 %v782
    %v1163 = vpop.f32.mrf.mxu0
    %v1164 = vadd.f32 0.0, %v1163
    %v1165 = vpop.f32.mrf.mxu0
    %1166 = vdwg.mxu0
    %v1168 = vsel %vm156, %v785, 0
    %v1171 = vsel %vm156, %v786, 0
    %v1174 = vsel %vm156, %v787, 0
    %v1177 = vsel %vm156, %v788, 0
    %v1180 = vsel %vm156, %v789, 0
    %v1183 = vsel %vm156, %v790, 0
    %v1186 = vsel %vm156, %v791, 0
    %v1189 = vsel %vm156, %v792, 0
    %1191 = vmatprep.subr.mxu0 0.0
    %1192 = vmatpush1.msra.mxu0 0.0
    %1193 = vmatprep.subr.mxu0 0.0
    %1194 = vmatpush1.msra.mxu0 0.0
    %1195 = vmatprep.subr.mxu0 0.0
    %1196 = vmatpush1.msra.mxu0 0.0
    %1197 = vmatprep.subr.mxu0 0.0
    %1198 = vmatpush1.msra.mxu0 0.0
    %1199 = vmatprep.subr.mxu0 0.0
    %1200 = vmatpush1.msra.mxu0 0.0
    %1201 = vmatprep.subr.mxu0 0.0
    %1202 = vmatpush1.msra.mxu0 0.0
    %1203 = vmatprep.subr.mxu0 0.0
    %1204 = vmatpush1.msra.mxu0 0.0
    %1205 = vmatprep.subr.mxu0 0.0
    %1206 = vmatpush1.msra.mxu0 0.0
    %1207 = vmatprep.subr.mxu0 0.0
    %1208 = vmatpush1.msra.mxu0 %v920
    %1209 = vmatprep.subr.mxu0 0.0
    %1210 = vmatpush1.msra.mxu0 %v915
    %1211 = vmatprep.subr.mxu0 0.0
    %1212 = vmatpush1.msra.mxu0 %v910
    %1213 = vmatprep.subr.mxu0 0.0
    %1214 = vmatpush1.msra.mxu0 %v905
    %1215 = vmatprep.subr.mxu0 0.0
    %1216 = vmatpush1.msra.mxu0 %v900
    %1217 = vmatprep.subr.mxu0 0.0
    %1218 = vmatpush1.msra.mxu0 %v895
    %1219 = vmatprep.subr.mxu0 0.0
    %1220 = vmatpush1.msra.mxu0 %v890
    %1221 = vmatprep.subr.mxu0 0.0
    %1222 = vmatpush1.msra.mxu0 %v885
    %1223 = vmatprep.subr.mxu0 0.0
    %1224 = vmatpush2.msra.mxu0 0.0
    %1225 = vmatprep.subr.mxu0 0.0
    %1226 = vmatpush2.msra.mxu0 0.0
    %1227 = vmatprep.subr.mxu0 0.0
    %1228 = vmatpush2.msra.mxu0 0.0
    %1229 = vmatprep.subr.mxu0 0.0
    %1230 = vmatpush2.msra.mxu0 0.0
    %1231 = vmatprep.subr.mxu0 0.0
    %1232 = vmatpush2.msra.mxu0 0.0
    %1233 = vmatprep.subr.mxu0 0.0
    %1234 = vmatpush2.msra.mxu0 0.0
    %1235 = vmatprep.subr.mxu0 0.0
    %1236 = vmatpush2.msra.mxu0 0.0
    %1237 = vmatprep.subr.mxu0 0.0
    %1238 = vmatpush2.msra.mxu0 0.0
    %1239 = vmatprep.subr.mxu0 0.0
    %1240 = vmatpush2.msra.mxu0 0.0
    %1241 = vmatprep.subr.mxu0 0.0
    %1242 = vmatpush2.msra.mxu0 0.0
    %1243 = vmatprep.subr.mxu0 0.0
    %1244 = vmatpush2.msra.mxu0 0.0
    %1245 = vmatprep.subr.mxu0 0.0
    %1246 = vmatpush2.msra.mxu0 0.0
    %1247 = vmatprep.subr.mxu0 0.0
    %1248 = vmatpush2.msra.mxu0 0.0
    %1249 = vmatprep.subr.mxu0 0.0
    %1250 = vmatpush2.msra.mxu0 0.0
    %1251 = vmatprep.subr.mxu0 0.0
    %1252 = vmatpush2.msra.mxu0 0.0
    %1253 = vmatprep.subr.mxu0 0.0
    %1254 = vmatpush2.msra.mxu0 0.0
    %1255 = vmatprep.mubr.f32.mxu0 0.0
    %1256 = vmatmul.mubr.f32.gmra.mxu0 %v1168
    %v1257 = vpop.f32.mrf.mxu0
    %v1258 = vadd.f32 %v1007, %v1257
    %v1259 = vpop.f32.mrf.mxu0
    %1260 = vmatprep.mubr.f32.mxu0 0.0
    %1261 = vmatmul.mubr.f32.gmra.mxu0 %v1171
    %v1262 = vpop.f32.mrf.mxu0
    %v1263 = vadd.f32 %v1012, %v1262
    %v1264 = vpop.f32.mrf.mxu0
    %1265 = vmatprep.mubr.f32.mxu0 0.0
    %1266 = vmatmul.mubr.f32.gmra.mxu0 %v1174
    %v1267 = vpop.f32.mrf.mxu0
    %v1268 = vadd.f32 %v1017, %v1267
    %v1269 = vpop.f32.mrf.mxu0
    %1270 = vmatprep.mubr.f32.mxu0 0.0
    %1271 = vmatmul.mubr.f32.gmra.mxu0 %v1177
    %v1272 = vpop.f32.mrf.mxu0
    %v1273 = vadd.f32 %v1022, %v1272
    %v1274 = vpop.f32.mrf.mxu0
    %1275 = vmatprep.mubr.f32.mxu0 0.0
    %1276 = vmatmul.mubr.f32.gmra.mxu0 %v1180
    %v1277 = vpop.f32.mrf.mxu0
    %v1278 = vadd.f32 %v1027, %v1277
    %v1279 = vpop.f32.mrf.mxu0
    %1280 = vmatprep.mubr.f32.mxu0 0.0
    %1281 = vmatmul.mubr.f32.gmra.mxu0 %v1183
    %v1282 = vpop.f32.mrf.mxu0
    %v1283 = vadd.f32 %v1032, %v1282
    %v1284 = vpop.f32.mrf.mxu0
    %1285 = vmatprep.mubr.f32.mxu0 0.0
    %1286 = vmatmul.mubr.f32.gmra.mxu0 %v1186
    %v1287 = vpop.f32.mrf.mxu0
    %v1288 = vadd.f32 %v1037, %v1287
    %v1289 = vpop.f32.mrf.mxu0
    %1290 = vmatprep.mubr.f32.mxu0 0.0
    %1291 = vmatmul.mubr.f32.gmra.mxu0 %v1189
    %v1292 = vpop.f32.mrf.mxu0
    %v1293 = vadd.f32 %v1042, %v1292
    %v1294 = vpop.f32.mrf.mxu0
    %1295 = vdwg.mxu0
    %v1297 = vsel %vm156, %v794, 0
    %v1300 = vsel %vm156, %v795, 0
    %v1303 = vsel %vm156, %v796, 0
    %v1306 = vsel %vm156, %v797, 0
    %v1309 = vsel %vm156, %v798, 0
    %v1312 = vsel %vm156, %v799, 0
    %v1315 = vsel %vm156, %v800, 0
    %v1318 = vsel %vm156, %v801, 0
    %1320 = vmatprep.subr.mxu0 0.0
    %1321 = vmatpush1.msra.mxu0 0.0
    %1322 = vmatprep.subr.mxu0 0.0
    %1323 = vmatpush1.msra.mxu0 0.0
    %1324 = vmatprep.subr.mxu0 0.0
    %1325 = vmatpush1.msra.mxu0 0.0
    %1326 = vmatprep.subr.mxu0 0.0
    %1327 = vmatpush1.msra.mxu0 0.0
    %1328 = vmatprep.subr.mxu0 0.0
    %1329 = vmatpush1.msra.mxu0 0.0
    %1330 = vmatprep.subr.mxu0 0.0
    %1331 = vmatpush1.msra.mxu0 0.0
    %1332 = vmatprep.subr.mxu0 0.0
    %1333 = vmatpush1.msra.mxu0 0.0
    %1334 = vmatprep.subr.mxu0 0.0
    %1335 = vmatpush1.msra.mxu0 0.0
    %1336 = vmatprep.subr.mxu0 0.0
    %1337 = vmatpush1.msra.mxu0 %v1164
    %1338 = vmatprep.subr.mxu0 0.0
    %1339 = vmatpush1.msra.mxu0 %v1159
    %1340 = vmatprep.subr.mxu0 0.0
    %1341 = vmatpush1.msra.mxu0 %v1154
    %1342 = vmatprep.subr.mxu0 0.0
    %1343 = vmatpush1.msra.mxu0 %v1149
    %1344 = vmatprep.subr.mxu0 0.0
    %1345 = vmatpush1.msra.mxu0 %v1144
    %1346 = vmatprep.subr.mxu0 0.0
    %1347 = vmatpush1.msra.mxu0 %v1139
    %1348 = vmatprep.subr.mxu0 0.0
    %1349 = vmatpush1.msra.mxu0 %v1134
    %1350 = vmatprep.subr.mxu0 0.0
    %1351 = vmatpush1.msra.mxu0 %v1129
    %1352 = vmatprep.subr.mxu0 0.0
    %1353 = vmatpush2.msra.mxu0 0.0
    %1354 = vmatprep.subr.mxu0 0.0
    %1355 = vmatpush2.msra.mxu0 0.0
    %1356 = vmatprep.subr.mxu0 0.0
    %1357 = vmatpush2.msra.mxu0 0.0
    %1358 = vmatprep.subr.mxu0 0.0
    %1359 = vmatpush2.msra.mxu0 0.0
    %1360 = vmatprep.subr.mxu0 0.0
    %1361 = vmatpush2.msra.mxu0 0.0
    %1362 = vmatprep.subr.mxu0 0.0
    %1363 = vmatpush2.msra.mxu0 0.0
    %1364 = vmatprep.subr.mxu0 0.0
    %1365 = vmatpush2.msra.mxu0 0.0
    %1366 = vmatprep.subr.mxu0 0.0
    %1367 = vmatpush2.msra.mxu0 0.0
    %1368 = vmatprep.subr.mxu0 0.0
    %1369 = vmatpush2.msra.mxu0 0.0
    %1370 = vmatprep.subr.mxu0 0.0
    %1371 = vmatpush2.msra.mxu0 0.0
    %1372 = vmatprep.subr.mxu0 0.0
    %1373 = vmatpush2.msra.mxu0 0.0
    %1374 = vmatprep.subr.mxu0 0.0
    %1375 = vmatpush2.msra.mxu0 0.0
    %1376 = vmatprep.subr.mxu0 0.0
    %1377 = vmatpush2.msra.mxu0 0.0
    %1378 = vmatprep.subr.mxu0 0.0
    %1379 = vmatpush2.msra.mxu0 0.0
    %1380 = vmatprep.subr.mxu0 0.0
    %1381 = vmatpush2.msra.mxu0 0.0
    %1382 = vmatprep.subr.mxu0 0.0
    %1383 = vmatpush2.msra.mxu0 0.0
    %1384 = vmatprep.mubr.f32.mxu0 0.0
    %1385 = vmatmul.mubr.f32.gmra.mxu0 %v1297
    %v1386 = vpop.f32.mrf.mxu0
    %v1387 = vadd.f32 0.0, %v1386
    %v1388 = vpop.f32.mrf.mxu0
    %1389 = vmatprep.mubr.f32.mxu0 0.0
    %1390 = vmatmul.mubr.f32.gmra.mxu0 %v1300
    %v1391 = vpop.f32.mrf.mxu0
    %v1392 = vadd.f32 0.0, %v1391
    %v1393 = vpop.f32.mrf.mxu0
    %1394 = vmatprep.mubr.f32.mxu0 0.0
    %1395 = vmatmul.mubr.f32.gmra.mxu0 %v1303
    %v1396 = vpop.f32.mrf.mxu0
    %v1397 = vadd.f32 0.0, %v1396
    %v1398 = vpop.f32.mrf.mxu0
    %1399 = vmatprep.mubr.f32.mxu0 0.0
    %1400 = vmatmul.mubr.f32.gmra.mxu0 %v1306
    %v1401 = vpop.f32.mrf.mxu0
    %v1402 = vadd.f32 0.0, %v1401
    %v1403 = vpop.f32.mrf.mxu0
    %1404 = vmatprep.mubr.f32.mxu0 0.0
    %1405 = vmatmul.mubr.f32.gmra.mxu0 %v1309
    %v1406 = vpop.f32.mrf.mxu0
    %v1407 = vadd.f32 0.0, %v1406
    %v1408 = vpop.f32.mrf.mxu0
    %1409 = vmatprep.mubr.f32.mxu0 0.0
    %1410 = vmatmul.mubr.f32.gmra.mxu0 %v1312
    %v1411 = vpop.f32.mrf.mxu0
    %v1412 = vadd.f32 0.0, %v1411
    %v1413 = vpop.f32.mrf.mxu0
    %1414 = vmatprep.mubr.f32.mxu0 0.0
    %1415 = vmatmul.mubr.f32.gmra.mxu0 %v1315
    %v1416 = vpop.f32.mrf.mxu0
    %v1417 = vadd.f32 0.0, %v1416
    %v1418 = vpop.f32.mrf.mxu0
    %1419 = vmatprep.mubr.f32.mxu0 0.0
    %1420 = vmatmul.mubr.f32.gmra.mxu0 %v1318
    %v1421 = vpop.f32.mrf.mxu0
    %v1422 = vadd.f32 0.0, %v1421
    %v1423 = vpop.f32.mrf.mxu0
    %1424 = vdwg.mxu0
    %v1425 = vadd.f32 %v1258, %v1387
    %v1426 = vadd.f32 %v1263, %v1392
    %v1427 = vadd.f32 %v1268, %v1397
    %v1428 = vadd.f32 %v1273, %v1402
    %v1429 = vadd.f32 %v1278, %v1407
    %v1430 = vadd.f32 %v1283, %v1412
    %v1431 = vadd.f32 %v1288, %v1417
    %v1432 = vadd.f32 %v1293, %v1422
    %s1433 = sld [smem:[#allocation16]]
    %v1434 = vstv %s1433
    %v1435 = vadd.f32 %v1425, %v1434
    %v1436 = vadd.f32 %v1426, %v1434
    %v1437 = vadd.f32 %v1427, %v1434
    %v1438 = vadd.f32 %v1428, %v1434
    %v1439 = vadd.f32 %v1429, %v1434
    %v1440 = vadd.f32 %v1430, %v1434
    %v1441 = vadd.f32 %v1431, %v1434
    %v1442 = vadd.f32 %v1432, %v1434
    %v1443 = vmul.f32 %v1435, 0.5
    %v1444 = vmul.f32 %v1436, 0.5
    %v1445 = vmul.f32 %v1437, 0.5
    %v1446 = vmul.f32 %v1438, 0.5
    %v1447 = vmul.f32 %v1439, 0.5
    %v1448 = vmul.f32 %v1440, 0.5
    %v1449 = vmul.f32 %v1441, 0.5
    %v1450 = vmul.f32 %v1442, 0.5
    %v1451 = vmul.f32 %v1435, 0.044715
    %v1452 = vmul.f32 %v1436, 0.044715
    %v1453 = vmul.f32 %v1437, 0.044715
    %v1454 = vmul.f32 %v1438, 0.044715
    %v1455 = vmul.f32 %v1439, 0.044715
    %v1456 = vmul.f32 %v1440, 0.044715
    %v1457 = vmul.f32 %v1441, 0.044715
    %v1458 = vmul.f32 %v1442, 0.044715
    %v1459 = vmul.f32 %v1451, %v1435
    %v1460 = vmul.f32 %v1452, %v1436
    %v1461 = vmul.f32 %v1453, %v1437
    %v1462 = vmul.f32 %v1454, %v1438
    %v1463 = vmul.f32 %v1455, %v1439
    %v1464 = vmul.f32 %v1456, %v1440
    %v1465 = vmul.f32 %v1457, %v1441
    %v1466 = vmul.f32 %v1458, %v1442
    %v1467 = vmul.f32 %v1459, %v1435
    %v1468 = vmul.f32 %v1460, %v1436
    %v1469 = vmul.f32 %v1461, %v1437
    %v1470 = vmul.f32 %v1462, %v1438
    %v1471 = vmul.f32 %v1463, %v1439
    %v1472 = vmul.f32 %v1464, %v1440
    %v1473 = vmul.f32 %v1465, %v1441
    %v1474 = vmul.f32 %v1466, %v1442
    %v1475 = vadd.f32 %v1435, %v1467
    %v1476 = vadd.f32 %v1436, %v1468
    %v1477 = vadd.f32 %v1437, %v1469
    %v1478 = vadd.f32 %v1438, %v1470
    %v1479 = vadd.f32 %v1439, %v1471
    %v1480 = vadd.f32 %v1440, %v1472
    %v1481 = vadd.f32 %v1441, %v1473
    %v1482 = vadd.f32 %v1442, %v1474
    %v1483 = vmul.f32 %v1475, 0.7978846
    %v1484 = vmul.f32 %v1476, 0.7978846
    %v1485 = vmul.f32 %v1477, 0.7978846
    %v1486 = vmul.f32 %v1478, 0.7978846
    %v1487 = vmul.f32 %v1479, 0.7978846
    %v1488 = vmul.f32 %v1480, 0.7978846
    %v1489 = vmul.f32 %v1481, 0.7978846
    %v1490 = vmul.f32 %v1482, 0.7978846
    %v1491 = vtanh.pop %v1483
    %v1492 = vtanh.pop %v1484
    %v1493 = vtanh.pop %v1485
    %v1494 = vtanh.pop %v1486
    %v1495 = vtanh.pop %v1487
    %v1496 = vtanh.pop %v1488
    %v1497 = vtanh.pop %v1489
    %v1498 = vtanh.pop %v1490
    %v1499 = vadd.f32 %v1491, 1.0
    %v1500 = vadd.f32 %v1492, 1.0
    %v1501 = vadd.f32 %v1493, 1.0
    %v1502 = vadd.f32 %v1494, 1.0
    %v1503 = vadd.f32 %v1495, 1.0
    %v1504 = vadd.f32 %v1496, 1.0
    %v1505 = vadd.f32 %v1497, 1.0
    %v1506 = vadd.f32 %v1498, 1.0
    %v1507 = vmul.f32 %v1443, %v1499
    %v1508 = vmul.f32 %v1444, %v1500
    %v1509 = vmul.f32 %v1445, %v1501
    %v1510 = vmul.f32 %v1446, %v1502
    %v1511 = vmul.f32 %v1447, %v1503
    %v1512 = vmul.f32 %v1448, %v1504
    %v1513 = vmul.f32 %v1449, %v1505
    %v1514 = vmul.f32 %v1450, %v1506
    %s1515 = scalar_lea.vmem [#allocation13], 384
    %v1516 = vld [vmem:[%s1515] sm:$0xff]
    %v1517 = vld [vmem:[%s1515 + $0x8] sm:$0xff]
    %v1518 = vld [vmem:[%s1515 + $0x10] sm:$0xff]
    %v1519 = vld [vmem:[%s1515 + $0x18] sm:$0xff]
    %v1520 = vld [vmem:[%s1515 + $0x20] sm:$0xff]
    %v1521 = vld [vmem:[%s1515 + $0x28] sm:$0xff]
    %v1522 = vld [vmem:[%s1515 + $0x30] sm:$0xff]
    %v1523 = vld [vmem:[%s1515 + $0x38] sm:$0xff]
    %v1524 = vld [vmem:[%s1515 + $0x40] sm:$0xff]
    %v1525 = vld [vmem:[%s1515 + $0x48] sm:$0xff]
    %v1526 = vld [vmem:[%s1515 + $0x50] sm:$0xff]
    %v1527 = vld [vmem:[%s1515 + $0x58] sm:$0xff]
    %v1528 = vld [vmem:[%s1515 + $0x60] sm:$0xff]
    %v1529 = vld [vmem:[%s1515 + $0x68] sm:$0xff]
    %v1530 = vld [vmem:[%s1515 + $0x70] sm:$0xff]
    %v1531 = vld [vmem:[%s1515 + $0x78] sm:$0xff]
    %1532 = vmatprep.subr.mxu0 0.0
    %1533 = vmatpush1.msra.mxu0 %v1531
    %1534 = vmatprep.subr.mxu0 0.0
    %1535 = vmatpush1.msra.mxu0 %v1530
    %1536 = vmatprep.subr.mxu0 0.0
    %1537 = vmatpush1.msra.mxu0 %v1529
    %1538 = vmatprep.subr.mxu0 0.0
    %1539 = vmatpush1.msra.mxu0 %v1528
    %1540 = vmatprep.subr.mxu0 0.0
    %1541 = vmatpush1.msra.mxu0 %v1527
    %1542 = vmatprep.subr.mxu0 0.0
    %1543 = vmatpush1.msra.mxu0 %v1526
    %1544 = vmatprep.subr.mxu0 0.0
    %1545 = vmatpush1.msra.mxu0 %v1525
    %1546 = vmatprep.subr.mxu0 0.0
    %1547 = vmatpush1.msra.mxu0 %v1524
    %1548 = vmatprep.subr.mxu0 0.0
    %1549 = vmatpush1.msra.mxu0 %v1523
    %1550 = vmatprep.subr.mxu0 0.0
    %1551 = vmatpush1.msra.mxu0 %v1522
    %1552 = vmatprep.subr.mxu0 0.0
    %1553 = vmatpush1.msra.mxu0 %v1521
    %1554 = vmatprep.subr.mxu0 0.0
    %1555 = vmatpush1.msra.mxu0 %v1520
    %1556 = vmatprep.subr.mxu0 0.0
    %1557 = vmatpush1.msra.mxu0 %v1519
    %1558 = vmatprep.subr.mxu0 0.0
    %1559 = vmatpush1.msra.mxu0 %v1518
    %1560 = vmatprep.subr.mxu0 0.0
    %1561 = vmatpush1.msra.mxu0 %v1517
    %1562 = vmatprep.subr.mxu0 0.0
    %1563 = vmatpush1.msra.mxu0 %v1516
    %1564 = vmatprep.subr.mxu0 0.0
    %1565 = vmatpush2.msra.mxu0 0.0
    %1566 = vmatprep.subr.mxu0 0.0
    %1567 = vmatpush2.msra.mxu0 0.0
    %1568 = vmatprep.subr.mxu0 0.0
    %1569 = vmatpush2.msra.mxu0 0.0
    %1570 = vmatprep.subr.mxu0 0.0
    %1571 = vmatpush2.msra.mxu0 0.0
    %1572 = vmatprep.subr.mxu0 0.0
    %1573 = vmatpush2.msra.mxu0 0.0
    %1574 = vmatprep.subr.mxu0 0.0
    %1575 = vmatpush2.msra.mxu0 0.0
    %1576 = vmatprep.subr.mxu0 0.0
    %1577 = vmatpush2.msra.mxu0 0.0
    %1578 = vmatprep.subr.mxu0 0.0
    %1579 = vmatpush2.msra.mxu0 0.0
    %1580 = vmatprep.subr.mxu0 0.0
    %1581 = vmatpush2.msra.mxu0 0.0
    %1582 = vmatprep.subr.mxu0 0.0
    %1583 = vmatpush2.msra.mxu0 0.0
    %1584 = vmatprep.subr.mxu0 0.0
    %1585 = vmatpush2.msra.mxu0 0.0
    %1586 = vmatprep.subr.mxu0 0.0
    %1587 = vmatpush2.msra.mxu0 0.0
    %1588 = vmatprep.subr.mxu0 0.0
    %1589 = vmatpush2.msra.mxu0 0.0
    %1590 = vmatprep.subr.mxu0 0.0
    %1591 = vmatpush2.msra.mxu0 0.0
    %1592 = vmatprep.subr.mxu0 0.0
    %1593 = vmatpush2.msra.mxu0 0.0
    %1594 = vmatprep.subr.mxu0 0.0
    %1595 = vmatpush2.msra.mxu0 0.0
    %1596 = vmatprep.mubr.f32.mxu0 0.0
    %1597 = vmatmul.mubr.f32.gmra.mxu0 %v1507
    %v1598 = vpop.f32.mrf.mxu0
    %v1599 = vadd.f32 0.0, %v1598
    %v1600 = vpop.f32.mrf.mxu0
    %1601 = vmatprep.mubr.f32.mxu0 0.0
    %1602 = vmatmul.mubr.f32.gmra.mxu0 %v1508
    %v1603 = vpop.f32.mrf.mxu0
    %v1604 = vadd.f32 0.0, %v1603
    %v1605 = vpop.f32.mrf.mxu0
    %1606 = vmatprep.mubr.f32.mxu0 0.0
    %1607 = vmatmul.mubr.f32.gmra.mxu0 %v1509
    %v1608 = vpop.f32.mrf.mxu0
    %v1609 = vadd.f32 0.0, %v1608
    %v1610 = vpop.f32.mrf.mxu0
    %1611 = vmatprep.mubr.f32.mxu0 0.0
    %1612 = vmatmul.mubr.f32.gmra.mxu0 %v1510
    %v1613 = vpop.f32.mrf.mxu0
    %v1614 = vadd.f32 0.0, %v1613
    %v1615 = vpop.f32.mrf.mxu0
    %1616 = vmatprep.mubr.f32.mxu0 0.0
    %1617 = vmatmul.mubr.f32.gmra.mxu0 %v1511
    %v1618 = vpop.f32.mrf.mxu0
    %v1619 = vadd.f32 0.0, %v1618
    %v1620 = vpop.f32.mrf.mxu0
    %1621 = vmatprep.mubr.f32.mxu0 0.0
    %1622 = vmatmul.mubr.f32.gmra.mxu0 %v1512
    %v1623 = vpop.f32.mrf.mxu0
    %v1624 = vadd.f32 0.0, %v1623
    %v1625 = vpop.f32.mrf.mxu0
    %1626 = vmatprep.mubr.f32.mxu0 0.0
    %1627 = vmatmul.mubr.f32.gmra.mxu0 %v1513
    %v1628 = vpop.f32.mrf.mxu0
    %v1629 = vadd.f32 0.0, %v1628
    %v1630 = vpop.f32.mrf.mxu0
    %1631 = vmatprep.mubr.f32.mxu0 0.0
    %1632 = vmatmul.mubr.f32.gmra.mxu0 %v1514
    %v1633 = vpop.f32.mrf.mxu0
    %v1634 = vadd.f32 0.0, %v1633
    %v1635 = vpop.f32.mrf.mxu0
    %1636 = vdwg.mxu0
    %s1637 = scalar_lea.vmem [#allocation13], 512
    %v1638 = vld [vmem:[%s1637] sm:$0xff]
    %v1639 = vld [vmem:[%s1637 + $0x8] sm:$0xff]
    %v1640 = vld [vmem:[%s1637 + $0x10] sm:$0xff]
    %v1641 = vld [vmem:[%s1637 + $0x18] sm:$0xff]
    %v1642 = vld [vmem:[%s1637 + $0x20] sm:$0xff]
    %v1643 = vld [vmem:[%s1637 + $0x28] sm:$0xff]
    %v1644 = vld [vmem:[%s1637 + $0x30] sm:$0xff]
    %v1645 = vld [vmem:[%s1637 + $0x38] sm:$0xff]
    %v1646 = vld [vmem:[%s1637 + $0x40] sm:$0xff]
    %v1647 = vld [vmem:[%s1637 + $0x48] sm:$0xff]
    %v1648 = vld [vmem:[%s1637 + $0x50] sm:$0xff]
    %v1649 = vld [vmem:[%s1637 + $0x58] sm:$0xff]
    %v1650 = vld [vmem:[%s1637 + $0x60] sm:$0xff]
    %v1651 = vld [vmem:[%s1637 + $0x68] sm:$0xff]
    %v1652 = vld [vmem:[%s1637 + $0x70] sm:$0xff]
    %v1653 = vld [vmem:[%s1637 + $0x78] sm:$0xff]
    %1654 = vmatprep.subr.mxu0 0.0
    %1655 = vmatpush1.msra.mxu0 %v1653
    %1656 = vmatprep.subr.mxu0 0.0
    %1657 = vmatpush1.msra.mxu0 %v1652
    %1658 = vmatprep.subr.mxu0 0.0
    %1659 = vmatpush1.msra.mxu0 %v1651
    %1660 = vmatprep.subr.mxu0 0.0
    %1661 = vmatpush1.msra.mxu0 %v1650
    %1662 = vmatprep.subr.mxu0 0.0
    %1663 = vmatpush1.msra.mxu0 %v1649
    %1664 = vmatprep.subr.mxu0 0.0
    %1665 = vmatpush1.msra.mxu0 %v1648
    %1666 = vmatprep.subr.mxu0 0.0
    %1667 = vmatpush1.msra.mxu0 %v1647
    %1668 = vmatprep.subr.mxu0 0.0
    %1669 = vmatpush1.msra.mxu0 %v1646
    %1670 = vmatprep.subr.mxu0 0.0
    %1671 = vmatpush1.msra.mxu0 %v1645
    %1672 = vmatprep.subr.mxu0 0.0
    %1673 = vmatpush1.msra.mxu0 %v1644
    %1674 = vmatprep.subr.mxu0 0.0
    %1675 = vmatpush1.msra.mxu0 %v1643
    %1676 = vmatprep.subr.mxu0 0.0
    %1677 = vmatpush1.msra.mxu0 %v1642
    %1678 = vmatprep.subr.mxu0 0.0
    %1679 = vmatpush1.msra.mxu0 %v1641
    %1680 = vmatprep.subr.mxu0 0.0
    %1681 = vmatpush1.msra.mxu0 %v1640
    %1682 = vmatprep.subr.mxu0 0.0
    %1683 = vmatpush1.msra.mxu0 %v1639
    %1684 = vmatprep.subr.mxu0 0.0
    %1685 = vmatpush1.msra.mxu0 %v1638
    %1686 = vmatprep.subr.mxu0 0.0
    %1687 = vmatpush2.msra.mxu0 0.0
    %1688 = vmatprep.subr.mxu0 0.0
    %1689 = vmatpush2.msra.mxu0 0.0
    %1690 = vmatprep.subr.mxu0 0.0
    %1691 = vmatpush2.msra.mxu0 0.0
    %1692 = vmatprep.subr.mxu0 0.0
    %1693 = vmatpush2.msra.mxu0 0.0
    %1694 = vmatprep.subr.mxu0 0.0
    %1695 = vmatpush2.msra.mxu0 0.0
    %1696 = vmatprep.subr.mxu0 0.0
    %1697 = vmatpush2.msra.mxu0 0.0
    %1698 = vmatprep.subr.mxu0 0.0
    %1699 = vmatpush2.msra.mxu0 0.0
    %1700 = vmatprep.subr.mxu0 0.0
    %1701 = vmatpush2.msra.mxu0 0.0
    %1702 = vmatprep.subr.mxu0 0.0
    %1703 = vmatpush2.msra.mxu0 0.0
    %1704 = vmatprep.subr.mxu0 0.0
    %1705 = vmatpush2.msra.mxu0 0.0
    %1706 = vmatprep.subr.mxu0 0.0
    %1707 = vmatpush2.msra.mxu0 0.0
    %1708 = vmatprep.subr.mxu0 0.0
    %1709 = vmatpush2.msra.mxu0 0.0
    %1710 = vmatprep.subr.mxu0 0.0
    %1711 = vmatpush2.msra.mxu0 0.0
    %1712 = vmatprep.subr.mxu0 0.0
    %1713 = vmatpush2.msra.mxu0 0.0
    %1714 = vmatprep.subr.mxu0 0.0
    %1715 = vmatpush2.msra.mxu0 0.0
    %1716 = vmatprep.subr.mxu0 0.0
    %1717 = vmatpush2.msra.mxu0 0.0
    %1718 = vmatprep.mubr.f32.mxu0 0.0
    %1719 = vmatmul.mubr.f32.gmra.mxu0 %v1507
    %v1720 = vpop.f32.mrf.mxu0
    %v1721 = vadd.f32 0.0, %v1720
    %v1722 = vpop.f32.mrf.mxu0
    %1723 = vmatprep.mubr.f32.mxu0 0.0
    %1724 = vmatmul.mubr.f32.gmra.mxu0 %v1508
    %v1725 = vpop.f32.mrf.mxu0
    %v1726 = vadd.f32 0.0, %v1725
    %v1727 = vpop.f32.mrf.mxu0
    %1728 = vmatprep.mubr.f32.mxu0 0.0
    %1729 = vmatmul.mubr.f32.gmra.mxu0 %v1509
    %v1730 = vpop.f32.mrf.mxu0
    %v1731 = vadd.f32 0.0, %v1730
    %v1732 = vpop.f32.mrf.mxu0
    %1733 = vmatprep.mubr.f32.mxu0 0.0
    %1734 = vmatmul.mubr.f32.gmra.mxu0 %v1510
    %v1735 = vpop.f32.mrf.mxu0
    %v1736 = vadd.f32 0.0, %v1735
    %v1737 = vpop.f32.mrf.mxu0
    %1738 = vmatprep.mubr.f32.mxu0 0.0
    %1739 = vmatmul.mubr.f32.gmra.mxu0 %v1511
    %v1740 = vpop.f32.mrf.mxu0
    %v1741 = vadd.f32 0.0, %v1740
    %v1742 = vpop.f32.mrf.mxu0
    %1743 = vmatprep.mubr.f32.mxu0 0.0
    %1744 = vmatmul.mubr.f32.gmra.mxu0 %v1512
    %v1745 = vpop.f32.mrf.mxu0
    %v1746 = vadd.f32 0.0, %v1745
    %v1747 = vpop.f32.mrf.mxu0
    %1748 = vmatprep.mubr.f32.mxu0 0.0
    %1749 = vmatmul.mubr.f32.gmra.mxu0 %v1513
    %v1750 = vpop.f32.mrf.mxu0
    %v1751 = vadd.f32 0.0, %v1750
    %v1752 = vpop.f32.mrf.mxu0
    %1753 = vmatprep.mubr.f32.mxu0 0.0
    %1754 = vmatmul.mubr.f32.gmra.mxu0 %v1514
    %v1755 = vpop.f32.mrf.mxu0
    %v1756 = vadd.f32 0.0, %v1755
    %v1757 = vpop.f32.mrf.mxu0
    %1758 = vdwg.mxu0
    %s1759 = scalar_lea.vmem [#allocation13], 640
    %v1760 = vld [vmem:[%s1759] sm:$0xff]
    %v1761 = vld [vmem:[%s1759 + $0x8] sm:$0xff]
    %v1762 = vld [vmem:[%s1759 + $0x10] sm:$0xff]
    %v1763 = vld [vmem:[%s1759 + $0x18] sm:$0xff]
    %v1764 = vld [vmem:[%s1759 + $0x20] sm:$0xff]
    %v1765 = vld [vmem:[%s1759 + $0x28] sm:$0xff]
    %v1766 = vld [vmem:[%s1759 + $0x30] sm:$0xff]
    %v1767 = vld [vmem:[%s1759 + $0x38] sm:$0xff]
    %v1768 = vld [vmem:[%s1759 + $0x40] sm:$0xff]
    %v1769 = vld [vmem:[%s1759 + $0x48] sm:$0xff]
    %v1770 = vld [vmem:[%s1759 + $0x50] sm:$0xff]
    %v1771 = vld [vmem:[%s1759 + $0x58] sm:$0xff]
    %v1772 = vld [vmem:[%s1759 + $0x60] sm:$0xff]
    %v1773 = vld [vmem:[%s1759 + $0x68] sm:$0xff]
    %v1774 = vld [vmem:[%s1759 + $0x70] sm:$0xff]
    %v1775 = vld [vmem:[%s1759 + $0x78] sm:$0xff]
    %1776 = vmatprep.subr.mxu0 0.0
    %1777 = vmatpush1.msra.mxu0 %v1775
    %1778 = vmatprep.subr.mxu0 0.0
    %1779 = vmatpush1.msra.mxu0 %v1774
    %1780 = vmatprep.subr.mxu0 0.0
    %1781 = vmatpush1.msra.mxu0 %v1773
    %1782 = vmatprep.subr.mxu0 0.0
    %1783 = vmatpush1.msra.mxu0 %v1772
    %1784 = vmatprep.subr.mxu0 0.0
    %1785 = vmatpush1.msra.mxu0 %v1771
    %1786 = vmatprep.subr.mxu0 0.0
    %1787 = vmatpush1.msra.mxu0 %v1770
    %1788 = vmatprep.subr.mxu0 0.0
    %1789 = vmatpush1.msra.mxu0 %v1769
    %1790 = vmatprep.subr.mxu0 0.0
    %1791 = vmatpush1.msra.mxu0 %v1768
    %1792 = vmatprep.subr.mxu0 0.0
    %1793 = vmatpush1.msra.mxu0 %v1767
    %1794 = vmatprep.subr.mxu0 0.0
    %1795 = vmatpush1.msra.mxu0 %v1766
    %1796 = vmatprep.subr.mxu0 0.0
    %1797 = vmatpush1.msra.mxu0 %v1765
    %1798 = vmatprep.subr.mxu0 0.0
    %1799 = vmatpush1.msra.mxu0 %v1764
    %1800 = vmatprep.subr.mxu0 0.0
    %1801 = vmatpush1.msra.mxu0 %v1763
    %1802 = vmatprep.subr.mxu0 0.0
    %1803 = vmatpush1.msra.mxu0 %v1762
    %1804 = vmatprep.subr.mxu0 0.0
    %1805 = vmatpush1.msra.mxu0 %v1761
    %1806 = vmatprep.subr.mxu0 0.0
    %1807 = vmatpush1.msra.mxu0 %v1760
    %1808 = vmatprep.subr.mxu0 0.0
    %1809 = vmatpush2.msra.mxu0 0.0
    %1810 = vmatprep.subr.mxu0 0.0
    %1811 = vmatpush2.msra.mxu0 0.0
    %1812 = vmatprep.subr.mxu0 0.0
    %1813 = vmatpush2.msra.mxu0 0.0
    %1814 = vmatprep.subr.mxu0 0.0
    %1815 = vmatpush2.msra.mxu0 0.0
    %1816 = vmatprep.subr.mxu0 0.0
    %1817 = vmatpush2.msra.mxu0 0.0
    %1818 = vmatprep.subr.mxu0 0.0
    %1819 = vmatpush2.msra.mxu0 0.0
    %1820 = vmatprep.subr.mxu0 0.0
    %1821 = vmatpush2.msra.mxu0 0.0
    %1822 = vmatprep.subr.mxu0 0.0
    %1823 = vmatpush2.msra.mxu0 0.0
    %1824 = vmatprep.subr.mxu0 0.0
    %1825 = vmatpush2.msra.mxu0 0.0
    %1826 = vmatprep.subr.mxu0 0.0
    %1827 = vmatpush2.msra.mxu0 0.0
    %1828 = vmatprep.subr.mxu0 0.0
    %1829 = vmatpush2.msra.mxu0 0.0
    %1830 = vmatprep.subr.mxu0 0.0
    %1831 = vmatpush2.msra.mxu0 0.0
    %1832 = vmatprep.subr.mxu0 0.0
    %1833 = vmatpush2.msra.mxu0 0.0
    %1834 = vmatprep.subr.mxu0 0.0
    %1835 = vmatpush2.msra.mxu0 0.0
    %1836 = vmatprep.subr.mxu0 0.0
    %1837 = vmatpush2.msra.mxu0 0.0
    %1838 = vmatprep.subr.mxu0 0.0
    %1839 = vmatpush2.msra.mxu0 0.0
    %1840 = vmatprep.mubr.f32.mxu0 0.0
    %1841 = vmatmul.mubr.f32.gmra.mxu0 %v1507
    %v1842 = vpop.f32.mrf.mxu0
    %v1843 = vadd.f32 0.0, %v1842
    %v1844 = vpop.f32.mrf.mxu0
    %1845 = vmatprep.mubr.f32.mxu0 0.0
    %1846 = vmatmul.mubr.f32.gmra.mxu0 %v1508
    %v1847 = vpop.f32.mrf.mxu0
    %v1848 = vadd.f32 0.0, %v1847
    %v1849 = vpop.f32.mrf.mxu0
    %1850 = vmatprep.mubr.f32.mxu0 0.0
    %1851 = vmatmul.mubr.f32.gmra.mxu0 %v1509
    %v1852 = vpop.f32.mrf.mxu0
    %v1853 = vadd.f32 0.0, %v1852
    %v1854 = vpop.f32.mrf.mxu0
    %1855 = vmatprep.mubr.f32.mxu0 0.0
    %1856 = vmatmul.mubr.f32.gmra.mxu0 %v1510
    %v1857 = vpop.f32.mrf.mxu0
    %v1858 = vadd.f32 0.0, %v1857
    %v1859 = vpop.f32.mrf.mxu0
    %1860 = vmatprep.mubr.f32.mxu0 0.0
    %1861 = vmatmul.mubr.f32.gmra.mxu0 %v1511
    %v1862 = vpop.f32.mrf.mxu0
    %v1863 = vadd.f32 0.0, %v1862
    %v1864 = vpop.f32.mrf.mxu0
    %1865 = vmatprep.mubr.f32.mxu0 0.0
    %1866 = vmatmul.mubr.f32.gmra.mxu0 %v1512
    %v1867 = vpop.f32.mrf.mxu0
    %v1868 = vadd.f32 0.0, %v1867
    %v1869 = vpop.f32.mrf.mxu0
    %1870 = vmatprep.mubr.f32.mxu0 0.0
    %1871 = vmatmul.mubr.f32.gmra.mxu0 %v1513
    %v1872 = vpop.f32.mrf.mxu0
    %v1873 = vadd.f32 0.0, %v1872
    %v1874 = vpop.f32.mrf.mxu0
    %1875 = vmatprep.mubr.f32.mxu0 0.0
    %1876 = vmatmul.mubr.f32.gmra.mxu0 %v1514
    %v1877 = vpop.f32.mrf.mxu0
    %v1878 = vadd.f32 0.0, %v1877
    %v1879 = vpop.f32.mrf.mxu0
    %1880 = vdwg.mxu0
    %1881 = vmatprep.subr.mxu0 0.0
    %1882 = vmatpush1.msra.mxu0 0.0
    %1883 = vmatprep.subr.mxu0 0.0
    %1884 = vmatpush1.msra.mxu0 0.0
    %1885 = vmatprep.subr.mxu0 0.0
    %1886 = vmatpush1.msra.mxu0 0.0
    %1887 = vmatprep.subr.mxu0 0.0
    %1888 = vmatpush1.msra.mxu0 0.0
    %1889 = vmatprep.subr.mxu0 0.0
    %1890 = vmatpush1.msra.mxu0 0.0
    %1891 = vmatprep.subr.mxu0 0.0
    %1892 = vmatpush1.msra.mxu0 0.0
    %1893 = vmatprep.subr.mxu0 0.0
    %1894 = vmatpush1.msra.mxu0 0.0
    %1895 = vmatprep.subr.mxu0 0.0
    %1896 = vmatpush1.msra.mxu0 0.0
    %1897 = vmatprep.subr.mxu0 0.0
    %1898 = vmatpush1.msra.mxu0 %v1634
    %1899 = vmatprep.subr.mxu0 0.0
    %1900 = vmatpush1.msra.mxu0 %v1629
    %1901 = vmatprep.subr.mxu0 0.0
    %1902 = vmatpush1.msra.mxu0 %v1624
    %1903 = vmatprep.subr.mxu0 0.0
    %1904 = vmatpush1.msra.mxu0 %v1619
    %1905 = vmatprep.subr.mxu0 0.0
    %1906 = vmatpush1.msra.mxu0 %v1614
    %1907 = vmatprep.subr.mxu0 0.0
    %1908 = vmatpush1.msra.mxu0 %v1609
    %1909 = vmatprep.subr.mxu0 0.0
    %1910 = vmatpush1.msra.mxu0 %v1604
    %1911 = vmatprep.subr.mxu0 0.0
    %1912 = vmatpush1.msra.mxu0 %v1599
    %1913 = vmatprep.subr.mxu0 0.0
    %1914 = vmatpush2.msra.mxu0 0.0
    %1915 = vmatprep.subr.mxu0 0.0
    %1916 = vmatpush2.msra.mxu0 0.0
    %1917 = vmatprep.subr.mxu0 0.0
    %1918 = vmatpush2.msra.mxu0 0.0
    %1919 = vmatprep.subr.mxu0 0.0
    %1920 = vmatpush2.msra.mxu0 0.0
    %1921 = vmatprep.subr.mxu0 0.0
    %1922 = vmatpush2.msra.mxu0 0.0
    %1923 = vmatprep.subr.mxu0 0.0
    %1924 = vmatpush2.msra.mxu0 0.0
    %1925 = vmatprep.subr.mxu0 0.0
    %1926 = vmatpush2.msra.mxu0 0.0
    %1927 = vmatprep.subr.mxu0 0.0
    %1928 = vmatpush2.msra.mxu0 0.0
    %1929 = vmatprep.subr.mxu0 0.0
    %1930 = vmatpush2.msra.mxu0 0.0
    %1931 = vmatprep.subr.mxu0 0.0
    %1932 = vmatpush2.msra.mxu0 0.0
    %1933 = vmatprep.subr.mxu0 0.0
    %1934 = vmatpush2.msra.mxu0 0.0
    %1935 = vmatprep.subr.mxu0 0.0
    %1936 = vmatpush2.msra.mxu0 0.0
    %1937 = vmatprep.subr.mxu0 0.0
    %1938 = vmatpush2.msra.mxu0 0.0
    %1939 = vmatprep.subr.mxu0 0.0
    %1940 = vmatpush2.msra.mxu0 0.0
    %1941 = vmatprep.subr.mxu0 0.0
    %1942 = vmatpush2.msra.mxu0 0.0
    %1943 = vmatprep.subr.mxu0 0.0
    %1944 = vmatpush2.msra.mxu0 0.0
    %1945 = vmatprep.mubr.f32.mxu0 0.0
    %1946 = vmatmul.mubr.f32.gmra.mxu0 %v1168
    %v1947 = vpop.f32.mrf.mxu0
    %v1948 = vadd.f32 %v1721, %v1947
    %v1949 = vpop.f32.mrf.mxu0
    %1950 = vmatprep.mubr.f32.mxu0 0.0
    %1951 = vmatmul.mubr.f32.gmra.mxu0 %v1171
    %v1952 = vpop.f32.mrf.mxu0
    %v1953 = vadd.f32 %v1726, %v1952
    %v1954 = vpop.f32.mrf.mxu0
    %1955 = vmatprep.mubr.f32.mxu0 0.0
    %1956 = vmatmul.mubr.f32.gmra.mxu0 %v1174
    %v1957 = vpop.f32.mrf.mxu0
    %v1958 = vadd.f32 %v1731, %v1957
    %v1959 = vpop.f32.mrf.mxu0
    %1960 = vmatprep.mubr.f32.mxu0 0.0
    %1961 = vmatmul.mubr.f32.gmra.mxu0 %v1177
    %v1962 = vpop.f32.mrf.mxu0
    %v1963 = vadd.f32 %v1736, %v1962
    %v1964 = vpop.f32.mrf.mxu0
    %1965 = vmatprep.mubr.f32.mxu0 0.0
    %1966 = vmatmul.mubr.f32.gmra.mxu0 %v1180
    %v1967 = vpop.f32.mrf.mxu0
    %v1968 = vadd.f32 %v1741, %v1967
    %v1969 = vpop.f32.mrf.mxu0
    %1970 = vmatprep.mubr.f32.mxu0 0.0
    %1971 = vmatmul.mubr.f32.gmra.mxu0 %v1183
    %v1972 = vpop.f32.mrf.mxu0
    %v1973 = vadd.f32 %v1746, %v1972
    %v1974 = vpop.f32.mrf.mxu0
    %1975 = vmatprep.mubr.f32.mxu0 0.0
    %1976 = vmatmul.mubr.f32.gmra.mxu0 %v1186
    %v1977 = vpop.f32.mrf.mxu0
    %v1978 = vadd.f32 %v1751, %v1977
    %v1979 = vpop.f32.mrf.mxu0
    %1980 = vmatprep.mubr.f32.mxu0 0.0
    %1981 = vmatmul.mubr.f32.gmra.mxu0 %v1189
    %v1982 = vpop.f32.mrf.mxu0
    %v1983 = vadd.f32 %v1756, %v1982
    %v1984 = vpop.f32.mrf.mxu0
    %1985 = vdwg.mxu0
    %1986 = vmatprep.subr.mxu0 0.0
    %1987 = vmatpush1.msra.mxu0 0.0
    %1988 = vmatprep.subr.mxu0 0.0
    %1989 = vmatpush1.msra.mxu0 0.0
    %1990 = vmatprep.subr.mxu0 0.0
    %1991 = vmatpush1.msra.mxu0 0.0
    %1992 = vmatprep.subr.mxu0 0.0
    %1993 = vmatpush1.msra.mxu0 0.0
    %1994 = vmatprep.subr.mxu0 0.0
    %1995 = vmatpush1.msra.mxu0 0.0
    %1996 = vmatprep.subr.mxu0 0.0
    %1997 = vmatpush1.msra.mxu0 0.0
    %1998 = vmatprep.subr.mxu0 0.0
    %1999 = vmatpush1.msra.mxu0 0.0
    %2000 = vmatprep.subr.mxu0 0.0
    %2001 = vmatpush1.msra.mxu0 0.0
    %2002 = vmatprep.subr.mxu0 0.0
    %2003 = vmatpush1.msra.mxu0 %v1878
    %2004 = vmatprep.subr.mxu0 0.0
    %2005 = vmatpush1.msra.mxu0 %v1873
    %2006 = vmatprep.subr.mxu0 0.0
    %2007 = vmatpush1.msra.mxu0 %v1868
    %2008 = vmatprep.subr.mxu0 0.0
    %2009 = vmatpush1.msra.mxu0 %v1863
    %2010 = vmatprep.subr.mxu0 0.0
    %2011 = vmatpush1.msra.mxu0 %v1858
    %2012 = vmatprep.subr.mxu0 0.0
    %2013 = vmatpush1.msra.mxu0 %v1853
    %2014 = vmatprep.subr.mxu0 0.0
    %2015 = vmatpush1.msra.mxu0 %v1848
    %2016 = vmatprep.subr.mxu0 0.0
    %2017 = vmatpush1.msra.mxu0 %v1843
    %2018 = vmatprep.subr.mxu0 0.0
    %2019 = vmatpush2.msra.mxu0 0.0
    %2020 = vmatprep.subr.mxu0 0.0
    %2021 = vmatpush2.msra.mxu0 0.0
    %2022 = vmatprep.subr.mxu0 0.0
    %2023 = vmatpush2.msra.mxu0 0.0
    %2024 = vmatprep.subr.mxu0 0.0
    %2025 = vmatpush2.msra.mxu0 0.0
    %2026 = vmatprep.subr.mxu0 0.0
    %2027 = vmatpush2.msra.mxu0 0.0
    %2028 = vmatprep.subr.mxu0 0.0
    %2029 = vmatpush2.msra.mxu0 0.0
    %2030 = vmatprep.subr.mxu0 0.0
    %2031 = vmatpush2.msra.mxu0 0.0
    %2032 = vmatprep.subr.mxu0 0.0
    %2033 = vmatpush2.msra.mxu0 0.0
    %2034 = vmatprep.subr.mxu0 0.0
    %2035 = vmatpush2.msra.mxu0 0.0
    %2036 = vmatprep.subr.mxu0 0.0
    %2037 = vmatpush2.msra.mxu0 0.0
    %2038 = vmatprep.subr.mxu0 0.0
    %2039 = vmatpush2.msra.mxu0 0.0
    %2040 = vmatprep.subr.mxu0 0.0
    %2041 = vmatpush2.msra.mxu0 0.0
    %2042 = vmatprep.subr.mxu0 0.0
    %2043 = vmatpush2.msra.mxu0 0.0
    %2044 = vmatprep.subr.mxu0 0.0
    %2045 = vmatpush2.msra.mxu0 0.0
    %2046 = vmatprep.subr.mxu0 0.0
    %2047 = vmatpush2.msra.mxu0 0.0
    %2048 = vmatprep.subr.mxu0 0.0
    %2049 = vmatpush2.msra.mxu0 0.0
    %2050 = vmatprep.mubr.f32.mxu0 0.0
    %2051 = vmatmul.mubr.f32.gmra.mxu0 %v1297
    %v2052 = vpop.f32.mrf.mxu0
    %v2053 = vadd.f32 0.0, %v2052
    %v2054 = vpop.f32.mrf.mxu0
    %2055 = vmatprep.mubr.f32.mxu0 0.0
    %2056 = vmatmul.mubr.f32.gmra.mxu0 %v1300
    %v2057 = vpop.f32.mrf.mxu0
    %v2058 = vadd.f32 0.0, %v2057
    %v2059 = vpop.f32.mrf.mxu0
    %2060 = vmatprep.mubr.f32.mxu0 0.0
    %2061 = vmatmul.mubr.f32.gmra.mxu0 %v1303
    %v2062 = vpop.f32.mrf.mxu0
    %v2063 = vadd.f32 0.0, %v2062
    %v2064 = vpop.f32.mrf.mxu0
    %2065 = vmatprep.mubr.f32.mxu0 0.0
    %2066 = vmatmul.mubr.f32.gmra.mxu0 %v1306
    %v2067 = vpop.f32.mrf.mxu0
    %v2068 = vadd.f32 0.0, %v2067
    %v2069 = vpop.f32.mrf.mxu0
    %2070 = vmatprep.mubr.f32.mxu0 0.0
    %2071 = vmatmul.mubr.f32.gmra.mxu0 %v1309
    %v2072 = vpop.f32.mrf.mxu0
    %v2073 = vadd.f32 0.0, %v2072
    %v2074 = vpop.f32.mrf.mxu0
    %2075 = vmatprep.mubr.f32.mxu0 0.0
    %2076 = vmatmul.mubr.f32.gmra.mxu0 %v1312
    %v2077 = vpop.f32.mrf.mxu0
    %v2078 = vadd.f32 0.0, %v2077
    %v2079 = vpop.f32.mrf.mxu0
    %2080 = vmatprep.mubr.f32.mxu0 0.0
    %2081 = vmatmul.mubr.f32.gmra.mxu0 %v1315
    %v2082 = vpop.f32.mrf.mxu0
    %v2083 = vadd.f32 0.0, %v2082
    %v2084 = vpop.f32.mrf.mxu0
    %2085 = vmatprep.mubr.f32.mxu0 0.0
    %2086 = vmatmul.mubr.f32.gmra.mxu0 %v1318
    %v2087 = vpop.f32.mrf.mxu0
    %v2088 = vadd.f32 0.0, %v2087
    %v2089 = vpop.f32.mrf.mxu0
    %2090 = vdwg.mxu0
    %v2091 = vadd.f32 %v1948, %v2053
    %v2092 = vadd.f32 %v1953, %v2058
    %v2093 = vadd.f32 %v1958, %v2063
    %v2094 = vadd.f32 %v1963, %v2068
    %v2095 = vadd.f32 %v1968, %v2073
    %v2096 = vadd.f32 %v1973, %v2078
    %v2097 = vadd.f32 %v1978, %v2083
    %v2098 = vadd.f32 %v1983, %v2088
    %s2099 = sld [smem:[#allocation16 + $0x1]]
    %v2100 = vstv %s2099
    %v2101 = vadd.f32 %v2091, %v2100
    %v2102 = vadd.f32 %v2092, %v2100
    %v2103 = vadd.f32 %v2093, %v2100
    %v2104 = vadd.f32 %v2094, %v2100
    %v2105 = vadd.f32 %v2095, %v2100
    %v2106 = vadd.f32 %v2096, %v2100
    %v2107 = vadd.f32 %v2097, %v2100
    %v2108 = vadd.f32 %v2098, %v2100
    %v2109 = vmul.f32 %v2101, 0.5
    %v2110 = vmul.f32 %v2102, 0.5
    %v2111 = vmul.f32 %v2103, 0.5
    %v2112 = vmul.f32 %v2104, 0.5
    %v2113 = vmul.f32 %v2105, 0.5
    %v2114 = vmul.f32 %v2106, 0.5
    %v2115 = vmul.f32 %v2107, 0.5
    %v2116 = vmul.f32 %v2108, 0.5
    %v2117 = vmul.f32 %v2101, 0.044715
    %v2118 = vmul.f32 %v2102, 0.044715
    %v2119 = vmul.f32 %v2103, 0.044715
    %v2120 = vmul.f32 %v2104, 0.044715
    %v2121 = vmul.f32 %v2105, 0.044715
    %v2122 = vmul.f32 %v2106, 0.044715
    %v2123 = vmul.f32 %v2107, 0.044715
    %v2124 = vmul.f32 %v2108, 0.044715
    %v2125 = vmul.f32 %v2117, %v2101
    %v2126 = vmul.f32 %v2118, %v2102
    %v2127 = vmul.f32 %v2119, %v2103
    %v2128 = vmul.f32 %v2120, %v2104
    %v2129 = vmul.f32 %v2121, %v2105
    %v2130 = vmul.f32 %v2122, %v2106
    %v2131 = vmul.f32 %v2123, %v2107
    %v2132 = vmul.f32 %v2124, %v2108
    %v2133 = vmul.f32 %v2125, %v2101
    %v2134 = vmul.f32 %v2126, %v2102
    %v2135 = vmul.f32 %v2127, %v2103
    %v2136 = vmul.f32 %v2128, %v2104
    %v2137 = vmul.f32 %v2129, %v2105
    %v2138 = vmul.f32 %v2130, %v2106
    %v2139 = vmul.f32 %v2131, %v2107
    %v2140 = vmul.f32 %v2132, %v2108
    %v2141 = vadd.f32 %v2101, %v2133
    %v2142 = vadd.f32 %v2102, %v2134
    %v2143 = vadd.f32 %v2103, %v2135
    %v2144 = vadd.f32 %v2104, %v2136
    %v2145 = vadd.f32 %v2105, %v2137
    %v2146 = vadd.f32 %v2106, %v2138
    %v2147 = vadd.f32 %v2107, %v2139
    %v2148 = vadd.f32 %v2108, %v2140
    %v2149 = vmul.f32 %v2141, 0.7978846
    %v2150 = vmul.f32 %v2142, 0.7978846
    %v2151 = vmul.f32 %v2143, 0.7978846
    %v2152 = vmul.f32 %v2144, 0.7978846
    %v2153 = vmul.f32 %v2145, 0.7978846
    %v2154 = vmul.f32 %v2146, 0.7978846
    %v2155 = vmul.f32 %v2147, 0.7978846
    %v2156 = vmul.f32 %v2148, 0.7978846
    %v2157 = vtanh.pop %v2149
    %v2158 = vtanh.pop %v2150
    %v2159 = vtanh.pop %v2151
    %v2160 = vtanh.pop %v2152
    %v2161 = vtanh.pop %v2153
    %v2162 = vtanh.pop %v2154
    %v2163 = vtanh.pop %v2155
    %v2164 = vtanh.pop %v2156
    %v2165 = vadd.f32 %v2157, 1.0
    %v2166 = vadd.f32 %v2158, 1.0
    %v2167 = vadd.f32 %v2159, 1.0
    %v2168 = vadd.f32 %v2160, 1.0
    %v2169 = vadd.f32 %v2161, 1.0
    %v2170 = vadd.f32 %v2162, 1.0
    %v2171 = vadd.f32 %v2163, 1.0
    %v2172 = vadd.f32 %v2164, 1.0
    %v2173 = vmul.f32 %v2109, %v2165
    %v2174 = vmul.f32 %v2110, %v2166
    %v2175 = vmul.f32 %v2111, %v2167
    %v2176 = vmul.f32 %v2112, %v2168
    %v2177 = vmul.f32 %v2113, %v2169
    %v2178 = vmul.f32 %v2114, %v2170
    %v2179 = vmul.f32 %v2115, %v2171
    %v2180 = vmul.f32 %v2116, %v2172
    %s2181 = scalar_lea.vmem [#allocation13], 768
    %v2182 = vld [vmem:[%s2181] sm:$0xff]
    %v2183 = vld [vmem:[%s2181 + $0x8] sm:$0xff]
    %v2184 = vld [vmem:[%s2181 + $0x10] sm:$0xff]
    %v2185 = vld [vmem:[%s2181 + $0x18] sm:$0xff]
    %v2186 = vld [vmem:[%s2181 + $0x20] sm:$0xff]
    %v2187 = vld [vmem:[%s2181 + $0x28] sm:$0xff]
    %v2188 = vld [vmem:[%s2181 + $0x30] sm:$0xff]
    %v2189 = vld [vmem:[%s2181 + $0x38] sm:$0xff]
    %v2190 = vld [vmem:[%s2181 + $0x40] sm:$0xff]
    %v2191 = vld [vmem:[%s2181 + $0x48] sm:$0xff]
    %v2192 = vld [vmem:[%s2181 + $0x50] sm:$0xff]
    %v2193 = vld [vmem:[%s2181 + $0x58] sm:$0xff]
    %v2194 = vld [vmem:[%s2181 + $0x60] sm:$0xff]
    %v2195 = vld [vmem:[%s2181 + $0x68] sm:$0xff]
    %v2196 = vld [vmem:[%s2181 + $0x70] sm:$0xff]
    %v2197 = vld [vmem:[%s2181 + $0x78] sm:$0xff]
    %2198 = vmatprep.subr.mxu0 0.0
    %2199 = vmatpush1.msra.mxu0 %v2197
    %2200 = vmatprep.subr.mxu0 0.0
    %2201 = vmatpush1.msra.mxu0 %v2196
    %2202 = vmatprep.subr.mxu0 0.0
    %2203 = vmatpush1.msra.mxu0 %v2195
    %2204 = vmatprep.subr.mxu0 0.0
    %2205 = vmatpush1.msra.mxu0 %v2194
    %2206 = vmatprep.subr.mxu0 0.0
    %2207 = vmatpush1.msra.mxu0 %v2193
    %2208 = vmatprep.subr.mxu0 0.0
    %2209 = vmatpush1.msra.mxu0 %v2192
    %2210 = vmatprep.subr.mxu0 0.0
    %2211 = vmatpush1.msra.mxu0 %v2191
    %2212 = vmatprep.subr.mxu0 0.0
    %2213 = vmatpush1.msra.mxu0 %v2190
    %2214 = vmatprep.subr.mxu0 0.0
    %2215 = vmatpush1.msra.mxu0 %v2189
    %2216 = vmatprep.subr.mxu0 0.0
    %2217 = vmatpush1.msra.mxu0 %v2188
    %2218 = vmatprep.subr.mxu0 0.0
    %2219 = vmatpush1.msra.mxu0 %v2187
    %2220 = vmatprep.subr.mxu0 0.0
    %2221 = vmatpush1.msra.mxu0 %v2186
    %2222 = vmatprep.subr.mxu0 0.0
    %2223 = vmatpush1.msra.mxu0 %v2185
    %2224 = vmatprep.subr.mxu0 0.0
    %2225 = vmatpush1.msra.mxu0 %v2184
    %2226 = vmatprep.subr.mxu0 0.0
    %2227 = vmatpush1.msra.mxu0 %v2183
    %2228 = vmatprep.subr.mxu0 0.0
    %2229 = vmatpush1.msra.mxu0 %v2182
    %2230 = vmatprep.subr.mxu0 0.0
    %2231 = vmatpush2.msra.mxu0 0.0
    %2232 = vmatprep.subr.mxu0 0.0
    %2233 = vmatpush2.msra.mxu0 0.0
    %2234 = vmatprep.subr.mxu0 0.0
    %2235 = vmatpush2.msra.mxu0 0.0
    %2236 = vmatprep.subr.mxu0 0.0
    %2237 = vmatpush2.msra.mxu0 0.0
    %2238 = vmatprep.subr.mxu0 0.0
    %2239 = vmatpush2.msra.mxu0 0.0
    %2240 = vmatprep.subr.mxu0 0.0
    %2241 = vmatpush2.msra.mxu0 0.0
    %2242 = vmatprep.subr.mxu0 0.0
    %2243 = vmatpush2.msra.mxu0 0.0
    %2244 = vmatprep.subr.mxu0 0.0
    %2245 = vmatpush2.msra.mxu0 0.0
    %2246 = vmatprep.subr.mxu0 0.0
    %2247 = vmatpush2.msra.mxu0 0.0
    %2248 = vmatprep.subr.mxu0 0.0
    %2249 = vmatpush2.msra.mxu0 0.0
    %2250 = vmatprep.subr.mxu0 0.0
    %2251 = vmatpush2.msra.mxu0 0.0
    %2252 = vmatprep.subr.mxu0 0.0
    %2253 = vmatpush2.msra.mxu0 0.0
    %2254 = vmatprep.subr.mxu0 0.0
    %2255 = vmatpush2.msra.mxu0 0.0
    %2256 = vmatprep.subr.mxu0 0.0
    %2257 = vmatpush2.msra.mxu0 0.0
    %2258 = vmatprep.subr.mxu0 0.0
    %2259 = vmatpush2.msra.mxu0 0.0
    %2260 = vmatprep.subr.mxu0 0.0
    %2261 = vmatpush2.msra.mxu0 0.0
    %2262 = vmatprep.mubr.f32.mxu0 0.0
    %2263 = vmatmul.mubr.f32.gmra.mxu0 %v2173
    %v2264 = vpop.f32.mrf.mxu0
    %v2265 = vadd.f32 0.0, %v2264
    %v2266 = vpop.f32.mrf.mxu0
    %2267 = vmatprep.mubr.f32.mxu0 0.0
    %2268 = vmatmul.mubr.f32.gmra.mxu0 %v2174
    %v2269 = vpop.f32.mrf.mxu0
    %v2270 = vadd.f32 0.0, %v2269
    %v2271 = vpop.f32.mrf.mxu0
    %2272 = vmatprep.mubr.f32.mxu0 0.0
    %2273 = vmatmul.mubr.f32.gmra.mxu0 %v2175
    %v2274 = vpop.f32.mrf.mxu0
    %v2275 = vadd.f32 0.0, %v2274
    %v2276 = vpop.f32.mrf.mxu0
    %2277 = vmatprep.mubr.f32.mxu0 0.0
    %2278 = vmatmul.mubr.f32.gmra.mxu0 %v2176
    %v2279 = vpop.f32.mrf.mxu0
    %v2280 = vadd.f32 0.0, %v2279
    %v2281 = vpop.f32.mrf.mxu0
    %2282 = vmatprep.mubr.f32.mxu0 0.0
    %2283 = vmatmul.mubr.f32.gmra.mxu0 %v2177
    %v2284 = vpop.f32.mrf.mxu0
    %v2285 = vadd.f32 0.0, %v2284
    %v2286 = vpop.f32.mrf.mxu0
    %2287 = vmatprep.mubr.f32.mxu0 0.0
    %2288 = vmatmul.mubr.f32.gmra.mxu0 %v2178
    %v2289 = vpop.f32.mrf.mxu0
    %v2290 = vadd.f32 0.0, %v2289
    %v2291 = vpop.f32.mrf.mxu0
    %2292 = vmatprep.mubr.f32.mxu0 0.0
    %2293 = vmatmul.mubr.f32.gmra.mxu0 %v2179
    %v2294 = vpop.f32.mrf.mxu0
    %v2295 = vadd.f32 0.0, %v2294
    %v2296 = vpop.f32.mrf.mxu0
    %2297 = vmatprep.mubr.f32.mxu0 0.0
    %2298 = vmatmul.mubr.f32.gmra.mxu0 %v2180
    %v2299 = vpop.f32.mrf.mxu0
    %v2300 = vadd.f32 0.0, %v2299
    %v2301 = vpop.f32.mrf.mxu0
    %2302 = vdwg.mxu0
    %s2303 = scalar_lea.vmem [#allocation13], 896
    %v2304 = vld [vmem:[%s2303] sm:$0xff]
    %v2305 = vld [vmem:[%s2303 + $0x8] sm:$0xff]
    %v2306 = vld [vmem:[%s2303 + $0x10] sm:$0xff]
    %v2307 = vld [vmem:[%s2303 + $0x18] sm:$0xff]
    %v2308 = vld [vmem:[%s2303 + $0x20] sm:$0xff]
    %v2309 = vld [vmem:[%s2303 + $0x28] sm:$0xff]
    %v2310 = vld [vmem:[%s2303 + $0x30] sm:$0xff]
    %v2311 = vld [vmem:[%s2303 + $0x38] sm:$0xff]
    %v2312 = vld [vmem:[%s2303 + $0x40] sm:$0xff]
    %v2313 = vld [vmem:[%s2303 + $0x48] sm:$0xff]
    %v2314 = vld [vmem:[%s2303 + $0x50] sm:$0xff]
    %v2315 = vld [vmem:[%s2303 + $0x58] sm:$0xff]
    %v2316 = vld [vmem:[%s2303 + $0x60] sm:$0xff]
    %v2317 = vld [vmem:[%s2303 + $0x68] sm:$0xff]
    %v2318 = vld [vmem:[%s2303 + $0x70] sm:$0xff]
    %v2319 = vld [vmem:[%s2303 + $0x78] sm:$0xff]
    %2320 = vmatprep.subr.mxu0 0.0
    %2321 = vmatpush1.msra.mxu0 %v2319
    %2322 = vmatprep.subr.mxu0 0.0
    %2323 = vmatpush1.msra.mxu0 %v2318
    %2324 = vmatprep.subr.mxu0 0.0
    %2325 = vmatpush1.msra.mxu0 %v2317
    %2326 = vmatprep.subr.mxu0 0.0
    %2327 = vmatpush1.msra.mxu0 %v2316
    %2328 = vmatprep.subr.mxu0 0.0
    %2329 = vmatpush1.msra.mxu0 %v2315
    %2330 = vmatprep.subr.mxu0 0.0
    %2331 = vmatpush1.msra.mxu0 %v2314
    %2332 = vmatprep.subr.mxu0 0.0
    %2333 = vmatpush1.msra.mxu0 %v2313
    %2334 = vmatprep.subr.mxu0 0.0
    %2335 = vmatpush1.msra.mxu0 %v2312
    %2336 = vmatprep.subr.mxu0 0.0
    %2337 = vmatpush1.msra.mxu0 %v2311
    %2338 = vmatprep.subr.mxu0 0.0
    %2339 = vmatpush1.msra.mxu0 %v2310
    %2340 = vmatprep.subr.mxu0 0.0
    %2341 = vmatpush1.msra.mxu0 %v2309
    %2342 = vmatprep.subr.mxu0 0.0
    %2343 = vmatpush1.msra.mxu0 %v2308
    %2344 = vmatprep.subr.mxu0 0.0
    %2345 = vmatpush1.msra.mxu0 %v2307
    %2346 = vmatprep.subr.mxu0 0.0
    %2347 = vmatpush1.msra.mxu0 %v2306
    %2348 = vmatprep.subr.mxu0 0.0
    %2349 = vmatpush1.msra.mxu0 %v2305
    %2350 = vmatprep.subr.mxu0 0.0
    %2351 = vmatpush1.msra.mxu0 %v2304
    %2352 = vmatprep.subr.mxu0 0.0
    %2353 = vmatpush2.msra.mxu0 0.0
    %2354 = vmatprep.subr.mxu0 0.0
    %2355 = vmatpush2.msra.mxu0 0.0
    %2356 = vmatprep.subr.mxu0 0.0
    %2357 = vmatpush2.msra.mxu0 0.0
    %2358 = vmatprep.subr.mxu0 0.0
    %2359 = vmatpush2.msra.mxu0 0.0
    %2360 = vmatprep.subr.mxu0 0.0
    %2361 = vmatpush2.msra.mxu0 0.0
    %2362 = vmatprep.subr.mxu0 0.0
    %2363 = vmatpush2.msra.mxu0 0.0
    %2364 = vmatprep.subr.mxu0 0.0
    %2365 = vmatpush2.msra.mxu0 0.0
    %2366 = vmatprep.subr.mxu0 0.0
    %2367 = vmatpush2.msra.mxu0 0.0
    %2368 = vmatprep.subr.mxu0 0.0
    %2369 = vmatpush2.msra.mxu0 0.0
    %2370 = vmatprep.subr.mxu0 0.0
    %2371 = vmatpush2.msra.mxu0 0.0
    %2372 = vmatprep.subr.mxu0 0.0
    %2373 = vmatpush2.msra.mxu0 0.0
    %2374 = vmatprep.subr.mxu0 0.0
    %2375 = vmatpush2.msra.mxu0 0.0
    %2376 = vmatprep.subr.mxu0 0.0
    %2377 = vmatpush2.msra.mxu0 0.0
    %2378 = vmatprep.subr.mxu0 0.0
    %2379 = vmatpush2.msra.mxu0 0.0
    %2380 = vmatprep.subr.mxu0 0.0
    %2381 = vmatpush2.msra.mxu0 0.0
    %2382 = vmatprep.subr.mxu0 0.0
    %2383 = vmatpush2.msra.mxu0 0.0
    %2384 = vmatprep.mubr.f32.mxu0 0.0
    %2385 = vmatmul.mubr.f32.gmra.mxu0 %v2173
    %v2386 = vpop.f32.mrf.mxu0
    %v2387 = vadd.f32 0.0, %v2386
    %v2388 = vpop.f32.mrf.mxu0
    %2389 = vmatprep.mubr.f32.mxu0 0.0
    %2390 = vmatmul.mubr.f32.gmra.mxu0 %v2174
    %v2391 = vpop.f32.mrf.mxu0
    %v2392 = vadd.f32 0.0, %v2391
    %v2393 = vpop.f32.mrf.mxu0
    %2394 = vmatprep.mubr.f32.mxu0 0.0
    %2395 = vmatmul.mubr.f32.gmra.mxu0 %v2175
    %v2396 = vpop.f32.mrf.mxu0
    %v2397 = vadd.f32 0.0, %v2396
    %v2398 = vpop.f32.mrf.mxu0
    %2399 = vmatprep.mubr.f32.mxu0 0.0
    %2400 = vmatmul.mubr.f32.gmra.mxu0 %v2176
    %v2401 = vpop.f32.mrf.mxu0
    %v2402 = vadd.f32 0.0, %v2401
    %v2403 = vpop.f32.mrf.mxu0
    %2404 = vmatprep.mubr.f32.mxu0 0.0
    %2405 = vmatmul.mubr.f32.gmra.mxu0 %v2177
    %v2406 = vpop.f32.mrf.mxu0
    %v2407 = vadd.f32 0.0, %v2406
    %v2408 = vpop.f32.mrf.mxu0
    %2409 = vmatprep.mubr.f32.mxu0 0.0
    %2410 = vmatmul.mubr.f32.gmra.mxu0 %v2178
    %v2411 = vpop.f32.mrf.mxu0
    %v2412 = vadd.f32 0.0, %v2411
    %v2413 = vpop.f32.mrf.mxu0
    %2414 = vmatprep.mubr.f32.mxu0 0.0
    %2415 = vmatmul.mubr.f32.gmra.mxu0 %v2179
    %v2416 = vpop.f32.mrf.mxu0
    %v2417 = vadd.f32 0.0, %v2416
    %v2418 = vpop.f32.mrf.mxu0
    %2419 = vmatprep.mubr.f32.mxu0 0.0
    %2420 = vmatmul.mubr.f32.gmra.mxu0 %v2180
    %v2421 = vpop.f32.mrf.mxu0
    %v2422 = vadd.f32 0.0, %v2421
    %v2423 = vpop.f32.mrf.mxu0
    %2424 = vdwg.mxu0
    %s2425 = scalar_lea.vmem [#allocation13], 1024
    %v2426 = vld [vmem:[%s2425] sm:$0xff]
    %v2427 = vld [vmem:[%s2425 + $0x8] sm:$0xff]
    %v2428 = vld [vmem:[%s2425 + $0x10] sm:$0xff]
    %v2429 = vld [vmem:[%s2425 + $0x18] sm:$0xff]
    %v2430 = vld [vmem:[%s2425 + $0x20] sm:$0xff]
    %v2431 = vld [vmem:[%s2425 + $0x28] sm:$0xff]
    %v2432 = vld [vmem:[%s2425 + $0x30] sm:$0xff]
    %v2433 = vld [vmem:[%s2425 + $0x38] sm:$0xff]
    %v2434 = vld [vmem:[%s2425 + $0x40] sm:$0xff]
    %v2435 = vld [vmem:[%s2425 + $0x48] sm:$0xff]
    %v2436 = vld [vmem:[%s2425 + $0x50] sm:$0xff]
    %v2437 = vld [vmem:[%s2425 + $0x58] sm:$0xff]
    %v2438 = vld [vmem:[%s2425 + $0x60] sm:$0xff]
    %v2439 = vld [vmem:[%s2425 + $0x68] sm:$0xff]
    %v2440 = vld [vmem:[%s2425 + $0x70] sm:$0xff]
    %v2441 = vld [vmem:[%s2425 + $0x78] sm:$0xff]
    %2442 = vmatprep.subr.mxu0 0.0
    %2443 = vmatpush1.msra.mxu0 %v2441
    %2444 = vmatprep.subr.mxu0 0.0
    %2445 = vmatpush1.msra.mxu0 %v2440
    %2446 = vmatprep.subr.mxu0 0.0
    %2447 = vmatpush1.msra.mxu0 %v2439
    %2448 = vmatprep.subr.mxu0 0.0
    %2449 = vmatpush1.msra.mxu0 %v2438
    %2450 = vmatprep.subr.mxu0 0.0
    %2451 = vmatpush1.msra.mxu0 %v2437
    %2452 = vmatprep.subr.mxu0 0.0
    %2453 = vmatpush1.msra.mxu0 %v2436
    %2454 = vmatprep.subr.mxu0 0.0
    %2455 = vmatpush1.msra.mxu0 %v2435
    %2456 = vmatprep.subr.mxu0 0.0
    %2457 = vmatpush1.msra.mxu0 %v2434
    %2458 = vmatprep.subr.mxu0 0.0
    %2459 = vmatpush1.msra.mxu0 %v2433
    %2460 = vmatprep.subr.mxu0 0.0
    %2461 = vmatpush1.msra.mxu0 %v2432
    %2462 = vmatprep.subr.mxu0 0.0
    %2463 = vmatpush1.msra.mxu0 %v2431
    %2464 = vmatprep.subr.mxu0 0.0
    %2465 = vmatpush1.msra.mxu0 %v2430
    %2466 = vmatprep.subr.mxu0 0.0
    %2467 = vmatpush1.msra.mxu0 %v2429
    %2468 = vmatprep.subr.mxu0 0.0
    %2469 = vmatpush1.msra.mxu0 %v2428
    %2470 = vmatprep.subr.mxu0 0.0
    %2471 = vmatpush1.msra.mxu0 %v2427
    %2472 = vmatprep.subr.mxu0 0.0
    %2473 = vmatpush1.msra.mxu0 %v2426
    %2474 = vmatprep.subr.mxu0 0.0
    %2475 = vmatpush2.msra.mxu0 0.0
    %2476 = vmatprep.subr.mxu0 0.0
    %2477 = vmatpush2.msra.mxu0 0.0
    %2478 = vmatprep.subr.mxu0 0.0
    %2479 = vmatpush2.msra.mxu0 0.0
    %2480 = vmatprep.subr.mxu0 0.0
    %2481 = vmatpush2.msra.mxu0 0.0
    %2482 = vmatprep.subr.mxu0 0.0
    %2483 = vmatpush2.msra.mxu0 0.0
    %2484 = vmatprep.subr.mxu0 0.0
    %2485 = vmatpush2.msra.mxu0 0.0
    %2486 = vmatprep.subr.mxu0 0.0
    %2487 = vmatpush2.msra.mxu0 0.0
    %2488 = vmatprep.subr.mxu0 0.0
    %2489 = vmatpush2.msra.mxu0 0.0
    %2490 = vmatprep.subr.mxu0 0.0
    %2491 = vmatpush2.msra.mxu0 0.0
    %2492 = vmatprep.subr.mxu0 0.0
    %2493 = vmatpush2.msra.mxu0 0.0
    %2494 = vmatprep.subr.mxu0 0.0
    %2495 = vmatpush2.msra.mxu0 0.0
    %2496 = vmatprep.subr.mxu0 0.0
    %2497 = vmatpush2.msra.mxu0 0.0
    %2498 = vmatprep.subr.mxu0 0.0
    %2499 = vmatpush2.msra.mxu0 0.0
    %2500 = vmatprep.subr.mxu0 0.0
    %2501 = vmatpush2.msra.mxu0 0.0
    %2502 = vmatprep.subr.mxu0 0.0
    %2503 = vmatpush2.msra.mxu0 0.0
    %2504 = vmatprep.subr.mxu0 0.0
    %2505 = vmatpush2.msra.mxu0 0.0
    %2506 = vmatprep.mubr.f32.mxu0 0.0
    %2507 = vmatmul.mubr.f32.gmra.mxu0 %v2173
    %v2508 = vpop.f32.mrf.mxu0
    %v2509 = vadd.f32 0.0, %v2508
    %v2510 = vpop.f32.mrf.mxu0
    %2511 = vmatprep.mubr.f32.mxu0 0.0
    %2512 = vmatmul.mubr.f32.gmra.mxu0 %v2174
    %v2513 = vpop.f32.mrf.mxu0
    %v2514 = vadd.f32 0.0, %v2513
    %v2515 = vpop.f32.mrf.mxu0
    %2516 = vmatprep.mubr.f32.mxu0 0.0
    %2517 = vmatmul.mubr.f32.gmra.mxu0 %v2175
    %v2518 = vpop.f32.mrf.mxu0
    %v2519 = vadd.f32 0.0, %v2518
    %v2520 = vpop.f32.mrf.mxu0
    %2521 = vmatprep.mubr.f32.mxu0 0.0
    %2522 = vmatmul.mubr.f32.gmra.mxu0 %v2176
    %v2523 = vpop.f32.mrf.mxu0
    %v2524 = vadd.f32 0.0, %v2523
    %v2525 = vpop.f32.mrf.mxu0
    %2526 = vmatprep.mubr.f32.mxu0 0.0
    %2527 = vmatmul.mubr.f32.gmra.mxu0 %v2177
    %v2528 = vpop.f32.mrf.mxu0
    %v2529 = vadd.f32 0.0, %v2528
    %v2530 = vpop.f32.mrf.mxu0
    %2531 = vmatprep.mubr.f32.mxu0 0.0
    %2532 = vmatmul.mubr.f32.gmra.mxu0 %v2178
    %v2533 = vpop.f32.mrf.mxu0
    %v2534 = vadd.f32 0.0, %v2533
    %v2535 = vpop.f32.mrf.mxu0
    %2536 = vmatprep.mubr.f32.mxu0 0.0
    %2537 = vmatmul.mubr.f32.gmra.mxu0 %v2179
    %v2538 = vpop.f32.mrf.mxu0
    %v2539 = vadd.f32 0.0, %v2538
    %v2540 = vpop.f32.mrf.mxu0
    %2541 = vmatprep.mubr.f32.mxu0 0.0
    %2542 = vmatmul.mubr.f32.gmra.mxu0 %v2180
    %v2543 = vpop.f32.mrf.mxu0
    %v2544 = vadd.f32 0.0, %v2543
    %v2545 = vpop.f32.mrf.mxu0
    %2546 = vdwg.mxu0
    %2547 = vmatprep.subr.mxu0 0.0
    %2548 = vmatpush1.msra.mxu0 0.0
    %2549 = vmatprep.subr.mxu0 0.0
    %2550 = vmatpush1.msra.mxu0 0.0
    %2551 = vmatprep.subr.mxu0 0.0
    %2552 = vmatpush1.msra.mxu0 0.0
    %2553 = vmatprep.subr.mxu0 0.0
    %2554 = vmatpush1.msra.mxu0 0.0
    %2555 = vmatprep.subr.mxu0 0.0
    %2556 = vmatpush1.msra.mxu0 0.0
    %2557 = vmatprep.subr.mxu0 0.0
    %2558 = vmatpush1.msra.mxu0 0.0
    %2559 = vmatprep.subr.mxu0 0.0
    %2560 = vmatpush1.msra.mxu0 0.0
    %2561 = vmatprep.subr.mxu0 0.0
    %2562 = vmatpush1.msra.mxu0 0.0
    %2563 = vmatprep.subr.mxu0 0.0
    %2564 = vmatpush1.msra.mxu0 %v2300
    %2565 = vmatprep.subr.mxu0 0.0
    %2566 = vmatpush1.msra.mxu0 %v2295
    %2567 = vmatprep.subr.mxu0 0.0
    %2568 = vmatpush1.msra.mxu0 %v2290
    %2569 = vmatprep.subr.mxu0 0.0
    %2570 = vmatpush1.msra.mxu0 %v2285
    %2571 = vmatprep.subr.mxu0 0.0
    %2572 = vmatpush1.msra.mxu0 %v2280
    %2573 = vmatprep.subr.mxu0 0.0
    %2574 = vmatpush1.msra.mxu0 %v2275
    %2575 = vmatprep.subr.mxu0 0.0
    %2576 = vmatpush1.msra.mxu0 %v2270
    %2577 = vmatprep.subr.mxu0 0.0
    %2578 = vmatpush1.msra.mxu0 %v2265
    %2579 = vmatprep.subr.mxu0 0.0
    %2580 = vmatpush2.msra.mxu0 0.0
    %2581 = vmatprep.subr.mxu0 0.0
    %2582 = vmatpush2.msra.mxu0 0.0
    %2583 = vmatprep.subr.mxu0 0.0
    %2584 = vmatpush2.msra.mxu0 0.0
    %2585 = vmatprep.subr.mxu0 0.0
    %2586 = vmatpush2.msra.mxu0 0.0
    %2587 = vmatprep.subr.mxu0 0.0
    %2588 = vmatpush2.msra.mxu0 0.0
    %2589 = vmatprep.subr.mxu0 0.0
    %2590 = vmatpush2.msra.mxu0 0.0
    %2591 = vmatprep.subr.mxu0 0.0
    %2592 = vmatpush2.msra.mxu0 0.0
    %2593 = vmatprep.subr.mxu0 0.0
    %2594 = vmatpush2.msra.mxu0 0.0
    %2595 = vmatprep.subr.mxu0 0.0
    %2596 = vmatpush2.msra.mxu0 0.0
    %2597 = vmatprep.subr.mxu0 0.0
    %2598 = vmatpush2.msra.mxu0 0.0
    %2599 = vmatprep.subr.mxu0 0.0
    %2600 = vmatpush2.msra.mxu0 0.0
    %2601 = vmatprep.subr.mxu0 0.0
    %2602 = vmatpush2.msra.mxu0 0.0
    %2603 = vmatprep.subr.mxu0 0.0
    %2604 = vmatpush2.msra.mxu0 0.0
    %2605 = vmatprep.subr.mxu0 0.0
    %2606 = vmatpush2.msra.mxu0 0.0
    %2607 = vmatprep.subr.mxu0 0.0
    %2608 = vmatpush2.msra.mxu0 0.0
    %2609 = vmatprep.subr.mxu0 0.0
    %2610 = vmatpush2.msra.mxu0 0.0
    %2611 = vmatprep.mubr.f32.mxu0 0.0
    %2612 = vmatmul.mubr.f32.gmra.mxu0 %v1168
    %v2613 = vpop.f32.mrf.mxu0
    %v2614 = vadd.f32 %v2387, %v2613
    %v2615 = vpop.f32.mrf.mxu0
    %2616 = vmatprep.mubr.f32.mxu0 0.0
    %2617 = vmatmul.mubr.f32.gmra.mxu0 %v1171
    %v2618 = vpop.f32.mrf.mxu0
    %v2619 = vadd.f32 %v2392, %v2618
    %v2620 = vpop.f32.mrf.mxu0
    %2621 = vmatprep.mubr.f32.mxu0 0.0
    %2622 = vmatmul.mubr.f32.gmra.mxu0 %v1174
    %v2623 = vpop.f32.mrf.mxu0
    %v2624 = vadd.f32 %v2397, %v2623
    %v2625 = vpop.f32.mrf.mxu0
    %2626 = vmatprep.mubr.f32.mxu0 0.0
    %2627 = vmatmul.mubr.f32.gmra.mxu0 %v1177
    %v2628 = vpop.f32.mrf.mxu0
    %v2629 = vadd.f32 %v2402, %v2628
    %v2630 = vpop.f32.mrf.mxu0
    %2631 = vmatprep.mubr.f32.mxu0 0.0
    %2632 = vmatmul.mubr.f32.gmra.mxu0 %v1180
    %v2633 = vpop.f32.mrf.mxu0
    %v2634 = vadd.f32 %v2407, %v2633
    %v2635 = vpop.f32.mrf.mxu0
    %2636 = vmatprep.mubr.f32.mxu0 0.0
    %2637 = vmatmul.mubr.f32.gmra.mxu0 %v1183
    %v2638 = vpop.f32.mrf.mxu0
    %v2639 = vadd.f32 %v2412, %v2638
    %v2640 = vpop.f32.mrf.mxu0
    %2641 = vmatprep.mubr.f32.mxu0 0.0
    %2642 = vmatmul.mubr.f32.gmra.mxu0 %v1186
    %v2643 = vpop.f32.mrf.mxu0
    %v2644 = vadd.f32 %v2417, %v2643
    %v2645 = vpop.f32.mrf.mxu0
    %2646 = vmatprep.mubr.f32.mxu0 0.0
    %2647 = vmatmul.mubr.f32.gmra.mxu0 %v1189
    %v2648 = vpop.f32.mrf.mxu0
    %v2649 = vadd.f32 %v2422, %v2648
    %v2650 = vpop.f32.mrf.mxu0
    %2651 = vdwg.mxu0
    %2652 = vmatprep.subr.mxu0 0.0
    %2653 = vmatpush1.msra.mxu0 0.0
    %2654 = vmatprep.subr.mxu0 0.0
    %2655 = vmatpush1.msra.mxu0 0.0
    %2656 = vmatprep.subr.mxu0 0.0
    %2657 = vmatpush1.msra.mxu0 0.0
    %2658 = vmatprep.subr.mxu0 0.0
    %2659 = vmatpush1.msra.mxu0 0.0
    %2660 = vmatprep.subr.mxu0 0.0
    %2661 = vmatpush1.msra.mxu0 0.0
    %2662 = vmatprep.subr.mxu0 0.0
    %2663 = vmatpush1.msra.mxu0 0.0
    %2664 = vmatprep.subr.mxu0 0.0
    %2665 = vmatpush1.msra.mxu0 0.0
    %2666 = vmatprep.subr.mxu0 0.0
    %2667 = vmatpush1.msra.mxu0 0.0
    %2668 = vmatprep.subr.mxu0 0.0
    %2669 = vmatpush1.msra.mxu0 %v2544
    %2670 = vmatprep.subr.mxu0 0.0
    %2671 = vmatpush1.msra.mxu0 %v2539
    %2672 = vmatprep.subr.mxu0 0.0
    %2673 = vmatpush1.msra.mxu0 %v2534
    %2674 = vmatprep.subr.mxu0 0.0
    %2675 = vmatpush1.msra.mxu0 %v2529
    %2676 = vmatprep.subr.mxu0 0.0
    %2677 = vmatpush1.msra.mxu0 %v2524
    %2678 = vmatprep.subr.mxu0 0.0
    %2679 = vmatpush1.msra.mxu0 %v2519
    %2680 = vmatprep.subr.mxu0 0.0
    %2681 = vmatpush1.msra.mxu0 %v2514
    %2682 = vmatprep.subr.mxu0 0.0
    %2683 = vmatpush1.msra.mxu0 %v2509
    %2684 = vmatprep.subr.mxu0 0.0
    %2685 = vmatpush2.msra.mxu0 0.0
    %2686 = vmatprep.subr.mxu0 0.0
    %2687 = vmatpush2.msra.mxu0 0.0
    %2688 = vmatprep.subr.mxu0 0.0
    %2689 = vmatpush2.msra.mxu0 0.0
    %2690 = vmatprep.subr.mxu0 0.0
    %2691 = vmatpush2.msra.mxu0 0.0
    %2692 = vmatprep.subr.mxu0 0.0
    %2693 = vmatpush2.msra.mxu0 0.0
    %2694 = vmatprep.subr.mxu0 0.0
    %2695 = vmatpush2.msra.mxu0 0.0
    %2696 = vmatprep.subr.mxu0 0.0
    %2697 = vmatpush2.msra.mxu0 0.0
    %2698 = vmatprep.subr.mxu0 0.0
    %2699 = vmatpush2.msra.mxu0 0.0
    %2700 = vmatprep.subr.mxu0 0.0
    %2701 = vmatpush2.msra.mxu0 0.0
    %2702 = vmatprep.subr.mxu0 0.0
    %2703 = vmatpush2.msra.mxu0 0.0
    %2704 = vmatprep.subr.mxu0 0.0
    %2705 = vmatpush2.msra.mxu0 0.0
    %2706 = vmatprep.subr.mxu0 0.0
    %2707 = vmatpush2.msra.mxu0 0.0
    %2708 = vmatprep.subr.mxu0 0.0
    %2709 = vmatpush2.msra.mxu0 0.0
    %2710 = vmatprep.subr.mxu0 0.0
    %2711 = vmatpush2.msra.mxu0 0.0
    %2712 = vmatprep.subr.mxu0 0.0
    %2713 = vmatpush2.msra.mxu0 0.0
    %2714 = vmatprep.subr.mxu0 0.0
    %2715 = vmatpush2.msra.mxu0 0.0
    %2716 = vmatprep.mubr.f32.mxu0 0.0
    %2717 = vmatmul.mubr.f32.gmra.mxu0 %v1297
    %v2718 = vpop.f32.mrf.mxu0
    %v2719 = vadd.f32 0.0, %v2718
    %v2720 = vpop.f32.mrf.mxu0
    %2721 = vmatprep.mubr.f32.mxu0 0.0
    %2722 = vmatmul.mubr.f32.gmra.mxu0 %v1300
    %v2723 = vpop.f32.mrf.mxu0
    %v2724 = vadd.f32 0.0, %v2723
    %v2725 = vpop.f32.mrf.mxu0
    %2726 = vmatprep.mubr.f32.mxu0 0.0
    %2727 = vmatmul.mubr.f32.gmra.mxu0 %v1303
    %v2728 = vpop.f32.mrf.mxu0
    %v2729 = vadd.f32 0.0, %v2728
    %v2730 = vpop.f32.mrf.mxu0
    %2731 = vmatprep.mubr.f32.mxu0 0.0
    %2732 = vmatmul.mubr.f32.gmra.mxu0 %v1306
    %v2733 = vpop.f32.mrf.mxu0
    %v2734 = vadd.f32 0.0, %v2733
    %v2735 = vpop.f32.mrf.mxu0
    %2736 = vmatprep.mubr.f32.mxu0 0.0
    %2737 = vmatmul.mubr.f32.gmra.mxu0 %v1309
    %v2738 = vpop.f32.mrf.mxu0
    %v2739 = vadd.f32 0.0, %v2738
    %v2740 = vpop.f32.mrf.mxu0
    %2741 = vmatprep.mubr.f32.mxu0 0.0
    %2742 = vmatmul.mubr.f32.gmra.mxu0 %v1312
    %v2743 = vpop.f32.mrf.mxu0
    %v2744 = vadd.f32 0.0, %v2743
    %v2745 = vpop.f32.mrf.mxu0
    %2746 = vmatprep.mubr.f32.mxu0 0.0
    %2747 = vmatmul.mubr.f32.gmra.mxu0 %v1315
    %v2748 = vpop.f32.mrf.mxu0
    %v2749 = vadd.f32 0.0, %v2748
    %v2750 = vpop.f32.mrf.mxu0
    %2751 = vmatprep.mubr.f32.mxu0 0.0
    %2752 = vmatmul.mubr.f32.gmra.mxu0 %v1318
    %v2753 = vpop.f32.mrf.mxu0
    %v2754 = vadd.f32 0.0, %v2753
    %v2755 = vpop.f32.mrf.mxu0
    %2756 = vdwg.mxu0
    %v2757 = vadd.f32 %v2614, %v2719
    %v2758 = vadd.f32 %v2619, %v2724
    %v2759 = vadd.f32 %v2624, %v2729
    %v2760 = vadd.f32 %v2629, %v2734
    %v2761 = vadd.f32 %v2634, %v2739
    %v2762 = vadd.f32 %v2639, %v2744
    %v2763 = vadd.f32 %v2644, %v2749
    %v2764 = vadd.f32 %v2649, %v2754
    %s2765 = sld [smem:[#allocation16 + $0x2]]
    %v2766 = vstv %s2765
    %v2767 = vadd.f32 %v2757, %v2766
    %v2768 = vadd.f32 %v2758, %v2766
    %v2769 = vadd.f32 %v2759, %v2766
    %v2770 = vadd.f32 %v2760, %v2766
    %v2771 = vadd.f32 %v2761, %v2766
    %v2772 = vadd.f32 %v2762, %v2766
    %v2773 = vadd.f32 %v2763, %v2766
    %v2774 = vadd.f32 %v2764, %v2766
    %v2775 = vmul.f32 %v2767, 0.5
    %v2776 = vmul.f32 %v2768, 0.5
    %v2777 = vmul.f32 %v2769, 0.5
    %v2778 = vmul.f32 %v2770, 0.5
    %v2779 = vmul.f32 %v2771, 0.5
    %v2780 = vmul.f32 %v2772, 0.5
    %v2781 = vmul.f32 %v2773, 0.5
    %v2782 = vmul.f32 %v2774, 0.5
    %v2783 = vmul.f32 %v2767, 0.044715
    %v2784 = vmul.f32 %v2768, 0.044715
    %v2785 = vmul.f32 %v2769, 0.044715
    %v2786 = vmul.f32 %v2770, 0.044715
    %v2787 = vmul.f32 %v2771, 0.044715
    %v2788 = vmul.f32 %v2772, 0.044715
    %v2789 = vmul.f32 %v2773, 0.044715
    %v2790 = vmul.f32 %v2774, 0.044715
    %v2791 = vmul.f32 %v2783, %v2767
    %v2792 = vmul.f32 %v2784, %v2768
    %v2793 = vmul.f32 %v2785, %v2769
    %v2794 = vmul.f32 %v2786, %v2770
    %v2795 = vmul.f32 %v2787, %v2771
    %v2796 = vmul.f32 %v2788, %v2772
    %v2797 = vmul.f32 %v2789, %v2773
    %v2798 = vmul.f32 %v2790, %v2774
    %v2799 = vmul.f32 %v2791, %v2767
    %v2800 = vmul.f32 %v2792, %v2768
    %v2801 = vmul.f32 %v2793, %v2769
    %v2802 = vmul.f32 %v2794, %v2770
    %v2803 = vmul.f32 %v2795, %v2771
    %v2804 = vmul.f32 %v2796, %v2772
    %v2805 = vmul.f32 %v2797, %v2773
    %v2806 = vmul.f32 %v2798, %v2774
    %v2807 = vadd.f32 %v2767, %v2799
    %v2808 = vadd.f32 %v2768, %v2800
    %v2809 = vadd.f32 %v2769, %v2801
    %v2810 = vadd.f32 %v2770, %v2802
    %v2811 = vadd.f32 %v2771, %v2803
    %v2812 = vadd.f32 %v2772, %v2804
    %v2813 = vadd.f32 %v2773, %v2805
    %v2814 = vadd.f32 %v2774, %v2806
    %v2815 = vmul.f32 %v2807, 0.7978846
    %v2816 = vmul.f32 %v2808, 0.7978846
    %v2817 = vmul.f32 %v2809, 0.7978846
    %v2818 = vmul.f32 %v2810, 0.7978846
    %v2819 = vmul.f32 %v2811, 0.7978846
    %v2820 = vmul.f32 %v2812, 0.7978846
    %v2821 = vmul.f32 %v2813, 0.7978846
    %v2822 = vmul.f32 %v2814, 0.7978846
    %v2823 = vtanh.pop %v2815
    %v2824 = vtanh.pop %v2816
    %v2825 = vtanh.pop %v2817
    %v2826 = vtanh.pop %v2818
    %v2827 = vtanh.pop %v2819
    %v2828 = vtanh.pop %v2820
    %v2829 = vtanh.pop %v2821
    %v2830 = vtanh.pop %v2822
    %v2831 = vadd.f32 %v2823, 1.0
    %v2832 = vadd.f32 %v2824, 1.0
    %v2833 = vadd.f32 %v2825, 1.0
    %v2834 = vadd.f32 %v2826, 1.0
    %v2835 = vadd.f32 %v2827, 1.0
    %v2836 = vadd.f32 %v2828, 1.0
    %v2837 = vadd.f32 %v2829, 1.0
    %v2838 = vadd.f32 %v2830, 1.0
    %v2839 = vmul.f32 %v2775, %v2831
    %v2840 = vmul.f32 %v2776, %v2832
    %v2841 = vmul.f32 %v2777, %v2833
    %v2842 = vmul.f32 %v2778, %v2834
    %v2843 = vmul.f32 %v2779, %v2835
    %v2844 = vmul.f32 %v2780, %v2836
    %v2845 = vmul.f32 %v2781, %v2837
    %v2846 = vmul.f32 %v2782, %v2838
    %v2847 = vld [vmem:[#allocation3] sm:$0xff]
    %v2848 = vld [vmem:[#allocation3 + $0x8] sm:$0xff]
    %v2849 = vld [vmem:[#allocation3 + $0x10] sm:$0xff]
    %v2850 = vld [vmem:[#allocation3 + $0x18] sm:$0xff]
    %v2851 = vld [vmem:[#allocation3 + $0x20] sm:$0xff]
    %v2852 = vld [vmem:[#allocation3 + $0x28] sm:$0xff]
    %v2853 = vld [vmem:[#allocation3 + $0x30] sm:$0xff]
    %v2854 = vld [vmem:[#allocation3 + $0x38] sm:$0xff]
    %v2856 = vsel %vm156, %v2847, 0
    %v2859 = vsel %vm156, %v2848, 0
    %v2862 = vsel %vm156, %v2849, 0
    %v2865 = vsel %vm156, %v2850, 0
    %v2868 = vsel %vm156, %v2851, 0
    %v2871 = vsel %vm156, %v2852, 0
    %v2874 = vsel %vm156, %v2853, 0
    %v2877 = vsel %vm156, %v2854, 0
    %2879 = vmatprep.subr.mxu0 0.0
    %2880 = vmatpush1.msra.mxu0 0.0
    %2881 = vmatprep.subr.mxu0 0.0
    %2882 = vmatpush1.msra.mxu0 0.0
    %2883 = vmatprep.subr.mxu0 0.0
    %2884 = vmatpush1.msra.mxu0 0.0
    %2885 = vmatprep.subr.mxu0 0.0
    %2886 = vmatpush1.msra.mxu0 0.0
    %2887 = vmatprep.subr.mxu0 0.0
    %2888 = vmatpush1.msra.mxu0 0.0
    %2889 = vmatprep.subr.mxu0 0.0
    %2890 = vmatpush1.msra.mxu0 0.0
    %2891 = vmatprep.subr.mxu0 0.0
    %2892 = vmatpush1.msra.mxu0 0.0
    %2893 = vmatprep.subr.mxu0 0.0
    %2894 = vmatpush1.msra.mxu0 0.0
    %2895 = vmatprep.subr.mxu0 0.0
    %2896 = vmatpush1.msra.mxu0 %v2846
    %2897 = vmatprep.subr.mxu0 0.0
    %2898 = vmatpush1.msra.mxu0 %v2845
    %2899 = vmatprep.subr.mxu0 0.0
    %2900 = vmatpush1.msra.mxu0 %v2844
    %2901 = vmatprep.subr.mxu0 0.0
    %2902 = vmatpush1.msra.mxu0 %v2843
    %2903 = vmatprep.subr.mxu0 0.0
    %2904 = vmatpush1.msra.mxu0 %v2842
    %2905 = vmatprep.subr.mxu0 0.0
    %2906 = vmatpush1.msra.mxu0 %v2841
    %2907 = vmatprep.subr.mxu0 0.0
    %2908 = vmatpush1.msra.mxu0 %v2840
    %2909 = vmatprep.subr.mxu0 0.0
    %2910 = vmatpush1.msra.mxu0 %v2839
    %2911 = vmatprep.subr.mxu0 0.0
    %2912 = vmatpush2.msra.mxu0 0.0
    %2913 = vmatprep.subr.mxu0 0.0
    %2914 = vmatpush2.msra.mxu0 0.0
    %2915 = vmatprep.subr.mxu0 0.0
    %2916 = vmatpush2.msra.mxu0 0.0
    %2917 = vmatprep.subr.mxu0 0.0
    %2918 = vmatpush2.msra.mxu0 0.0
    %2919 = vmatprep.subr.mxu0 0.0
    %2920 = vmatpush2.msra.mxu0 0.0
    %2921 = vmatprep.subr.mxu0 0.0
    %2922 = vmatpush2.msra.mxu0 0.0
    %2923 = vmatprep.subr.mxu0 0.0
    %2924 = vmatpush2.msra.mxu0 0.0
    %2925 = vmatprep.subr.mxu0 0.0
    %2926 = vmatpush2.msra.mxu0 0.0
    %2927 = vmatprep.subr.mxu0 0.0
    %2928 = vmatpush2.msra.mxu0 0.0
    %2929 = vmatprep.subr.mxu0 0.0
    %2930 = vmatpush2.msra.mxu0 0.0
    %2931 = vmatprep.subr.mxu0 0.0
    %2932 = vmatpush2.msra.mxu0 0.0
    %2933 = vmatprep.subr.mxu0 0.0
    %2934 = vmatpush2.msra.mxu0 0.0
    %2935 = vmatprep.subr.mxu0 0.0
    %2936 = vmatpush2.msra.mxu0 0.0
    %2937 = vmatprep.subr.mxu0 0.0
    %2938 = vmatpush2.msra.mxu0 0.0
    %2939 = vmatprep.subr.mxu0 0.0
    %2940 = vmatpush2.msra.mxu0 0.0
    %2941 = vmatprep.subr.mxu0 0.0
    %2942 = vmatpush2.msra.mxu0 0.0
    %2943 = vmatprep.mubr.f32.mxu0 0.0
    %2944 = vmatmul.mubr.f32.gmra.mxu0 %v2856
    %v2945 = vpop.f32.mrf.mxu0
    %v2946 = vadd.f32 0.0, %v2945
    %v2947 = vpop.f32.mrf.mxu0
    %2948 = vmatprep.mubr.f32.mxu0 0.0
    %2949 = vmatmul.mubr.f32.gmra.mxu0 %v2859
    %v2950 = vpop.f32.mrf.mxu0
    %v2951 = vadd.f32 0.0, %v2950
    %v2952 = vpop.f32.mrf.mxu0
    %2953 = vmatprep.mubr.f32.mxu0 0.0
    %2954 = vmatmul.mubr.f32.gmra.mxu0 %v2862
    %v2955 = vpop.f32.mrf.mxu0
    %v2956 = vadd.f32 0.0, %v2955
    %v2957 = vpop.f32.mrf.mxu0
    %2958 = vmatprep.mubr.f32.mxu0 0.0
    %2959 = vmatmul.mubr.f32.gmra.mxu0 %v2865
    %v2960 = vpop.f32.mrf.mxu0
    %v2961 = vadd.f32 0.0, %v2960
    %v2962 = vpop.f32.mrf.mxu0
    %2963 = vmatprep.mubr.f32.mxu0 0.0
    %2964 = vmatmul.mubr.f32.gmra.mxu0 %v2868
    %v2965 = vpop.f32.mrf.mxu0
    %v2966 = vadd.f32 0.0, %v2965
    %v2967 = vpop.f32.mrf.mxu0
    %2968 = vmatprep.mubr.f32.mxu0 0.0
    %2969 = vmatmul.mubr.f32.gmra.mxu0 %v2871
    %v2970 = vpop.f32.mrf.mxu0
    %v2971 = vadd.f32 0.0, %v2970
    %v2972 = vpop.f32.mrf.mxu0
    %2973 = vmatprep.mubr.f32.mxu0 0.0
    %2974 = vmatmul.mubr.f32.gmra.mxu0 %v2874
    %v2975 = vpop.f32.mrf.mxu0
    %v2976 = vadd.f32 0.0, %v2975
    %v2977 = vpop.f32.mrf.mxu0
    %2978 = vmatprep.mubr.f32.mxu0 0.0
    %2979 = vmatmul.mubr.f32.gmra.mxu0 %v2877
    %v2980 = vpop.f32.mrf.mxu0
    %v2981 = vadd.f32 0.0, %v2980
    %v2982 = vpop.f32.mrf.mxu0
    %2983 = vdwg.mxu0
    %v2984 = vld [vmem:[%s5] sm:$0xff]
    %v2985 = vld [vmem:[%s5 + $0x8] sm:$0xff]
    %v2986 = vld [vmem:[%s5 + $0x10] sm:$0xff]
    %v2987 = vld [vmem:[%s5 + $0x18] sm:$0xff]
    %v2988 = vld [vmem:[%s5 + $0x20] sm:$0xff]
    %v2989 = vld [vmem:[%s5 + $0x28] sm:$0xff]
    %v2990 = vld [vmem:[%s5 + $0x30] sm:$0xff]
    %v2991 = vld [vmem:[%s5 + $0x38] sm:$0xff]
    %v2992 = vld [vmem:[%s5 + $0x40] sm:$0xff]
    %v2993 = vld [vmem:[%s5 + $0x48] sm:$0xff]
    %v2994 = vld [vmem:[%s5 + $0x50] sm:$0xff]
    %v2995 = vld [vmem:[%s5 + $0x58] sm:$0xff]
    %v2996 = vld [vmem:[%s5 + $0x60] sm:$0xff]
    %v2997 = vld [vmem:[%s5 + $0x68] sm:$0xff]
    %v2998 = vld [vmem:[%s5 + $0x70] sm:$0xff]
    %v2999 = vld [vmem:[%s5 + $0x78] sm:$0xff]
    %3000 = vmatprep.subr.mxu0 0.0
    %3001 = vmatpush1.msra.mxu0 %v2999
    %3002 = vmatprep.subr.mxu0 0.0
    %3003 = vmatpush1.msra.mxu0 %v2998
    %3004 = vmatprep.subr.mxu0 0.0
    %3005 = vmatpush1.msra.mxu0 %v2997
    %3006 = vmatprep.subr.mxu0 0.0
    %3007 = vmatpush1.msra.mxu0 %v2996
    %3008 = vmatprep.subr.mxu0 0.0
    %3009 = vmatpush1.msra.mxu0 %v2995
    %3010 = vmatprep.subr.mxu0 0.0
    %3011 = vmatpush1.msra.mxu0 %v2994
    %3012 = vmatprep.subr.mxu0 0.0
    %3013 = vmatpush1.msra.mxu0 %v2993
    %3014 = vmatprep.subr.mxu0 0.0
    %3015 = vmatpush1.msra.mxu0 %v2992
    %3016 = vmatprep.subr.mxu0 0.0
    %3017 = vmatpush1.msra.mxu0 %v2991
    %3018 = vmatprep.subr.mxu0 0.0
    %3019 = vmatpush1.msra.mxu0 %v2990
    %3020 = vmatprep.subr.mxu0 0.0
    %3021 = vmatpush1.msra.mxu0 %v2989
    %3022 = vmatprep.subr.mxu0 0.0
    %3023 = vmatpush1.msra.mxu0 %v2988
    %3024 = vmatprep.subr.mxu0 0.0
    %3025 = vmatpush1.msra.mxu0 %v2987
    %3026 = vmatprep.subr.mxu0 0.0
    %3027 = vmatpush1.msra.mxu0 %v2986
    %3028 = vmatprep.subr.mxu0 0.0
    %3029 = vmatpush1.msra.mxu0 %v2985
    %3030 = vmatprep.subr.mxu0 0.0
    %3031 = vmatpush1.msra.mxu0 %v2984
    %3032 = vmatprep.subr.mxu0 0.0
    %3033 = vmatpush2.msra.mxu0 0.0
    %3034 = vmatprep.subr.mxu0 0.0
    %3035 = vmatpush2.msra.mxu0 0.0
    %3036 = vmatprep.subr.mxu0 0.0
    %3037 = vmatpush2.msra.mxu0 0.0
    %3038 = vmatprep.subr.mxu0 0.0
    %3039 = vmatpush2.msra.mxu0 0.0
    %3040 = vmatprep.subr.mxu0 0.0
    %3041 = vmatpush2.msra.mxu0 0.0
    %3042 = vmatprep.subr.mxu0 0.0
    %3043 = vmatpush2.msra.mxu0 0.0
    %3044 = vmatprep.subr.mxu0 0.0
    %3045 = vmatpush2.msra.mxu0 0.0
    %3046 = vmatprep.subr.mxu0 0.0
    %3047 = vmatpush2.msra.mxu0 0.0
    %3048 = vmatprep.subr.mxu0 0.0
    %3049 = vmatpush2.msra.mxu0 0.0
    %3050 = vmatprep.subr.mxu0 0.0
    %3051 = vmatpush2.msra.mxu0 0.0
    %3052 = vmatprep.subr.mxu0 0.0
    %3053 = vmatpush2.msra.mxu0 0.0
    %3054 = vmatprep.subr.mxu0 0.0
    %3055 = vmatpush2.msra.mxu0 0.0
    %3056 = vmatprep.subr.mxu0 0.0
    %3057 = vmatpush2.msra.mxu0 0.0
    %3058 = vmatprep.subr.mxu0 0.0
    %3059 = vmatpush2.msra.mxu0 0.0
    %3060 = vmatprep.subr.mxu0 0.0
    %3061 = vmatpush2.msra.mxu0 0.0
    %3062 = vmatprep.subr.mxu0 0.0
    %3063 = vmatpush2.msra.mxu0 0.0
    %3064 = vmatprep.mubr.f32.mxu0 0.0
    %3065 = vmatmul.mubr.f32.gmra.mxu0 %v2946
    %v3066 = vpop.f32.mrf.mxu0
    %v3067 = vadd.f32 0.0, %v3066
    %v3068 = vpop.f32.mrf.mxu0
    %3069 = vmatprep.mubr.f32.mxu0 0.0
    %3070 = vmatmul.mubr.f32.gmra.mxu0 %v2951
    %v3071 = vpop.f32.mrf.mxu0
    %v3072 = vadd.f32 0.0, %v3071
    %v3073 = vpop.f32.mrf.mxu0
    %3074 = vmatprep.mubr.f32.mxu0 0.0
    %3075 = vmatmul.mubr.f32.gmra.mxu0 %v2956
    %v3076 = vpop.f32.mrf.mxu0
    %v3077 = vadd.f32 0.0, %v3076
    %v3078 = vpop.f32.mrf.mxu0
    %3079 = vmatprep.mubr.f32.mxu0 0.0
    %3080 = vmatmul.mubr.f32.gmra.mxu0 %v2961
    %v3081 = vpop.f32.mrf.mxu0
    %v3082 = vadd.f32 0.0, %v3081
    %v3083 = vpop.f32.mrf.mxu0
    %3084 = vmatprep.mubr.f32.mxu0 0.0
    %3085 = vmatmul.mubr.f32.gmra.mxu0 %v2966
    %v3086 = vpop.f32.mrf.mxu0
    %v3087 = vadd.f32 0.0, %v3086
    %v3088 = vpop.f32.mrf.mxu0
    %3089 = vmatprep.mubr.f32.mxu0 0.0
    %3090 = vmatmul.mubr.f32.gmra.mxu0 %v2971
    %v3091 = vpop.f32.mrf.mxu0
    %v3092 = vadd.f32 0.0, %v3091
    %v3093 = vpop.f32.mrf.mxu0
    %3094 = vmatprep.mubr.f32.mxu0 0.0
    %3095 = vmatmul.mubr.f32.gmra.mxu0 %v2976
    %v3096 = vpop.f32.mrf.mxu0
    %v3097 = vadd.f32 0.0, %v3096
    %v3098 = vpop.f32.mrf.mxu0
    %3099 = vmatprep.mubr.f32.mxu0 0.0
    %3100 = vmatmul.mubr.f32.gmra.mxu0 %v2981
    %v3101 = vpop.f32.mrf.mxu0
    %v3102 = vadd.f32 0.0, %v3101
    %v3103 = vpop.f32.mrf.mxu0
    %3104 = vdwg.mxu0
    %v3105 = vld [vmem:[#allocation2] sm:$0xff]
    %v3106 = vld [vmem:[#allocation2 + $0x8] sm:$0xff]
    %v3107 = vld [vmem:[#allocation2 + $0x10] sm:$0xff]
    %v3108 = vld [vmem:[#allocation2 + $0x18] sm:$0xff]
    %v3109 = vld [vmem:[#allocation2 + $0x20] sm:$0xff]
    %v3110 = vld [vmem:[#allocation2 + $0x28] sm:$0xff]
    %v3111 = vld [vmem:[#allocation2 + $0x30] sm:$0xff]
    %v3112 = vld [vmem:[#allocation2 + $0x38] sm:$0xff]
    %3121 = vrot.lane.b32.xlu0 %v3105, 120
    %v3122 = vpop.permute.xlu0 %3121
    %3123 = vrot.lane.b32.xlu0 %v3106, 120
    %v3124 = vpop.permute.xlu0 %3123
    %3125 = vrot.lane.b32.xlu0 %v3107, 120
    %v3126 = vpop.permute.xlu0 %3125
    %3127 = vrot.lane.b32.xlu0 %v3108, 120
    %v3128 = vpop.permute.xlu0 %3127
    %3129 = vrot.lane.b32.xlu0 %v3109, 120
    %v3130 = vpop.permute.xlu0 %3129
    %3131 = vrot.lane.b32.xlu0 %v3110, 120
    %v3132 = vpop.permute.xlu0 %3131
    %3133 = vrot.lane.b32.xlu0 %v3111, 120
    %v3134 = vpop.permute.xlu0 %3133
    %3135 = vrot.lane.b32.xlu0 %v3112, 120
    %v3136 = vpop.permute.xlu0 %3135
    %v3137 = vsel %vm461, %v3105, 0
    %v3139 = vsel %vm461, %v3106, 0
    %v3141 = vsel %vm461, %v3107, 0
    %v3143 = vsel %vm461, %v3108, 0
    %v3145 = vsel %vm461, %v3109, 0
    %v3147 = vsel %vm461, %v3110, 0
    %v3149 = vsel %vm461, %v3111, 0
    %v3151 = vsel %vm461, %v3112, 0
    %v3153 = vsel %vm461, %v3122, 0
    %v3155 = vsel %vm461, %v3124, 0
    %v3157 = vsel %vm461, %v3126, 0
    %v3159 = vsel %vm461, %v3128, 0
    %v3161 = vsel %vm461, %v3130, 0
    %v3163 = vsel %vm461, %v3132, 0
    %v3165 = vsel %vm461, %v3134, 0
    %v3167 = vsel %vm461, %v3136, 0
    %3169 = vmatprep.subr.mxu0 0.0
    %3170 = vmatpush1.xpose.msra.mxu0 0.0
    %3171 = vmatprep.subr.mxu0 0.0
    %3172 = vmatpush1.xpose.msra.mxu0 0.0
    %3173 = vmatprep.subr.mxu0 0.0
    %3174 = vmatpush1.xpose.msra.mxu0 0.0
    %3175 = vmatprep.subr.mxu0 0.0
    %3176 = vmatpush1.xpose.msra.mxu0 0.0
    %3177 = vmatprep.subr.mxu0 0.0
    %3178 = vmatpush1.xpose.msra.mxu0 0.0
    %3179 = vmatprep.subr.mxu0 0.0
    %3180 = vmatpush1.xpose.msra.mxu0 0.0
    %3181 = vmatprep.subr.mxu0 0.0
    %3182 = vmatpush1.xpose.msra.mxu0 0.0
    %3183 = vmatprep.subr.mxu0 0.0
    %3184 = vmatpush1.xpose.msra.mxu0 0.0
    %3185 = vmatprep.subr.mxu0 0.0
    %3186 = vmatpush1.xpose.msra.mxu0 %v3167
    %3187 = vmatprep.subr.mxu0 0.0
    %3188 = vmatpush1.xpose.msra.mxu0 %v3165
    %3189 = vmatprep.subr.mxu0 0.0
    %3190 = vmatpush1.xpose.msra.mxu0 %v3163
    %3191 = vmatprep.subr.mxu0 0.0
    %3192 = vmatpush1.xpose.msra.mxu0 %v3161
    %3193 = vmatprep.subr.mxu0 0.0
    %3194 = vmatpush1.xpose.msra.mxu0 %v3159
    %3195 = vmatprep.subr.mxu0 0.0
    %3196 = vmatpush1.xpose.msra.mxu0 %v3157
    %3197 = vmatprep.subr.mxu0 0.0
    %3198 = vmatpush1.xpose.msra.mxu0 %v3155
    %3199 = vmatprep.subr.mxu0 0.0
    %3200 = vmatpush1.xpose.msra.mxu0 %v3153
    %3201 = vmatprep.subr.mxu0 0.0
    %3202 = vmatpush2.xpose.msra.mxu0 0.0
    %3203 = vmatprep.subr.mxu0 0.0
    %3204 = vmatpush2.xpose.msra.mxu0 0.0
    %3205 = vmatprep.subr.mxu0 0.0
    %3206 = vmatpush2.xpose.msra.mxu0 0.0
    %3207 = vmatprep.subr.mxu0 0.0
    %3208 = vmatpush2.xpose.msra.mxu0 0.0
    %3209 = vmatprep.subr.mxu0 0.0
    %3210 = vmatpush2.xpose.msra.mxu0 0.0
    %3211 = vmatprep.subr.mxu0 0.0
    %3212 = vmatpush2.xpose.msra.mxu0 0.0
    %3213 = vmatprep.subr.mxu0 0.0
    %3214 = vmatpush2.xpose.msra.mxu0 0.0
    %3215 = vmatprep.subr.mxu0 0.0
    %3216 = vmatpush2.xpose.msra.mxu0 0.0
    %3217 = vmatprep.subr.mxu0 0.0
    %3218 = vmatpush2.xpose.msra.mxu0 0.0
    %3219 = vmatprep.subr.mxu0 0.0
    %3220 = vmatpush2.xpose.msra.mxu0 0.0
    %3221 = vmatprep.subr.mxu0 0.0
    %3222 = vmatpush2.xpose.msra.mxu0 0.0
    %3223 = vmatprep.subr.mxu0 0.0
    %3224 = vmatpush2.xpose.msra.mxu0 0.0
    %3225 = vmatprep.subr.mxu0 0.0
    %3226 = vmatpush2.xpose.msra.mxu0 0.0
    %3227 = vmatprep.subr.mxu0 0.0
    %3228 = vmatpush2.xpose.msra.mxu0 0.0
    %3229 = vmatprep.subr.mxu0 0.0
    %3230 = vmatpush2.xpose.msra.mxu0 0.0
    %3231 = vmatprep.subr.mxu0 0.0
    %3232 = vmatpush2.xpose.msra.mxu0 0.0
    %3233 = vmatprep.mubr.f32.mxu0 0.0
    %3234 = vmatmul.mubr.f32.gmra.mxu0 %v3137
    %v3235 = vpop.f32.mrf.mxu0
    %v3236 = vadd.f32 0.0, %v3235
    %v3237 = vpop.f32.mrf.mxu0
    %3238 = vmatprep.mubr.f32.mxu0 0.0
    %3239 = vmatmul.mubr.f32.gmra.mxu0 %v3139
    %v3240 = vpop.f32.mrf.mxu0
    %v3241 = vadd.f32 0.0, %v3240
    %v3242 = vpop.f32.mrf.mxu0
    %3243 = vmatprep.mubr.f32.mxu0 0.0
    %3244 = vmatmul.mubr.f32.gmra.mxu0 %v3141
    %v3245 = vpop.f32.mrf.mxu0
    %v3246 = vadd.f32 0.0, %v3245
    %v3247 = vpop.f32.mrf.mxu0
    %3248 = vmatprep.mubr.f32.mxu0 0.0
    %3249 = vmatmul.mubr.f32.gmra.mxu0 %v3143
    %v3250 = vpop.f32.mrf.mxu0
    %v3251 = vadd.f32 0.0, %v3250
    %v3252 = vpop.f32.mrf.mxu0
    %3253 = vmatprep.mubr.f32.mxu0 0.0
    %3254 = vmatmul.mubr.f32.gmra.mxu0 %v3145
    %v3255 = vpop.f32.mrf.mxu0
    %v3256 = vadd.f32 0.0, %v3255
    %v3257 = vpop.f32.mrf.mxu0
    %3258 = vmatprep.mubr.f32.mxu0 0.0
    %3259 = vmatmul.mubr.f32.gmra.mxu0 %v3147
    %v3260 = vpop.f32.mrf.mxu0
    %v3261 = vadd.f32 0.0, %v3260
    %v3262 = vpop.f32.mrf.mxu0
    %3263 = vmatprep.mubr.f32.mxu0 0.0
    %3264 = vmatmul.mubr.f32.gmra.mxu0 %v3149
    %v3265 = vpop.f32.mrf.mxu0
    %v3266 = vadd.f32 0.0, %v3265
    %v3267 = vpop.f32.mrf.mxu0
    %3268 = vmatprep.mubr.f32.mxu0 0.0
    %3269 = vmatmul.mubr.f32.gmra.mxu0 %v3151
    %v3270 = vpop.f32.mrf.mxu0
    %v3271 = vadd.f32 0.0, %v3270
    %v3272 = vpop.f32.mrf.mxu0
    %3273 = vdwg.mxu0
    %v3274 = vmul.f32 %v3236, 0.125
    %v3275 = vmul.f32 %v3241, 0.125
    %v3276 = vmul.f32 %v3246, 0.125
    %v3277 = vmul.f32 %v3251, 0.125
    %v3278 = vmul.f32 %v3256, 0.125
    %v3279 = vmul.f32 %v3261, 0.125
    %v3280 = vmul.f32 %v3266, 0.125
    %v3281 = vmul.f32 %v3271, 0.125
    %v3282 = vadd.f32 %v3274, %v3067
    %v3283 = vadd.f32 %v3275, %v3072
    %v3284 = vadd.f32 %v3276, %v3077
    %v3285 = vadd.f32 %v3277, %v3082
    %v3286 = vadd.f32 %v3278, %v3087
    %v3287 = vadd.f32 %v3279, %v3092
    %v3288 = vadd.f32 %v3280, %v3097
    %v3289 = vadd.f32 %v3281, %v3102
    %v3290 = vsel %vm156, %v3282, -inf
    %3291 = vmax.xlane.f32.xlu0 %v3290
    %v3292 = vpop.xlane.xlu0 %3291
    %v3293 = vsel %vm156, %v3283, -inf
    %3294 = vmax.xlane.f32.xlu0 %v3293
    %v3295 = vpop.xlane.xlu0 %3294
    %v3296 = vsel %vm156, %v3284, -inf
    %3297 = vmax.xlane.f32.xlu0 %v3296
    %v3298 = vpop.xlane.xlu0 %3297
    %v3299 = vsel %vm156, %v3285, -inf
    %3300 = vmax.xlane.f32.xlu0 %v3299
    %v3301 = vpop.xlane.xlu0 %3300
    %v3302 = vsel %vm156, %v3286, -inf
    %3303 = vmax.xlane.f32.xlu0 %v3302
    %v3304 = vpop.xlane.xlu0 %3303
    %v3305 = vsel %vm156, %v3287, -inf
    %3306 = vmax.xlane.f32.xlu0 %v3305
    %v3307 = vpop.xlane.xlu0 %3306
    %v3308 = vsel %vm156, %v3288, -inf
    %3309 = vmax.xlane.f32.xlu0 %v3308
    %v3310 = vpop.xlane.xlu0 %3309
    %v3311 = vsel %vm156, %v3289, -inf
    %3312 = vmax.xlane.f32.xlu0 %v3311
    %v3313 = vpop.xlane.xlu0 %3312
    %v3314 = vsub.f32 %v3282, %v3292
    %v3315 = vsub.f32 %v3283, %v3295
    %v3316 = vsub.f32 %v3284, %v3298
    %v3317 = vsub.f32 %v3285, %v3301
    %v3318 = vsub.f32 %v3286, %v3304
    %v3319 = vsub.f32 %v3287, %v3307
    %v3320 = vsub.f32 %v3288, %v3310
    %v3321 = vsub.f32 %v3289, %v3313
    %v3322 = vmul.f32 %v3314, 1.442695
    %v3323 = vpow.pop %v3322
    %v3324 = vmul.f32 %v3315, 1.442695
    %v3325 = vpow.pop %v3324
    %v3326 = vmul.f32 %v3316, 1.442695
    %v3327 = vpow.pop %v3326
    %v3328 = vmul.f32 %v3317, 1.442695
    %v3329 = vpow.pop %v3328
    %v3330 = vmul.f32 %v3318, 1.442695
    %v3331 = vpow.pop %v3330
    %v3332 = vmul.f32 %v3319, 1.442695
    %v3333 = vpow.pop %v3332
    %v3334 = vmul.f32 %v3320, 1.442695
    %v3335 = vpow.pop %v3334
    %v3336 = vmul.f32 %v3321, 1.442695
    %v3337 = vpow.pop %v3336
    %v3338 = vsel %vm156, %v3323, 0.0
    %3339 = vadd.xlane.f32.xlu0 %v3338
    %v3340 = vpop.xlane.xlu0 %3339
    %v3341 = vsel %vm156, %v3325, 0.0
    %3342 = vadd.xlane.f32.xlu0 %v3341
    %v3343 = vpop.xlane.xlu0 %3342
    %v3344 = vsel %vm156, %v3327, 0.0
    %3345 = vadd.xlane.f32.xlu0 %v3344
    %v3346 = vpop.xlane.xlu0 %3345
    %v3347 = vsel %vm156, %v3329, 0.0
    %3348 = vadd.xlane.f32.xlu0 %v3347
    %v3349 = vpop.xlane.xlu0 %3348
    %v3350 = vsel %vm156, %v3331, 0.0
    %3351 = vadd.xlane.f32.xlu0 %v3350
    %v3352 = vpop.xlane.xlu0 %3351
    %v3353 = vsel %vm156, %v3333, 0.0
    %3354 = vadd.xlane.f32.xlu0 %v3353
    %v3355 = vpop.xlane.xlu0 %3354
    %v3356 = vsel %vm156, %v3335, 0.0
    %3357 = vadd.xlane.f32.xlu0 %v3356
    %v3358 = vpop.xlane.xlu0 %3357
    %v3359 = vsel %vm156, %v3337, 0.0
    %3360 = vadd.xlane.f32.xlu0 %v3359
    %v3361 = vpop.xlane.xlu0 %3360
    %v3362 = vrcp.pop %v3340
    %v3363 = vrcp.pop %v3343
    %v3364 = vrcp.pop %v3346
    %v3365 = vrcp.pop %v3349
    %v3366 = vrcp.pop %v3352
    %v3367 = vrcp.pop %v3355
    %v3368 = vrcp.pop %v3358
    %v3369 = vrcp.pop %v3361
    %v3370 = vmul.f32 %v3323, %v3362
    %v3371 = vmul.f32 %v3325, %v3363
    %v3372 = vmul.f32 %v3327, %v3364
    %v3373 = vmul.f32 %v3329, %v3365
    %v3374 = vmul.f32 %v3331, %v3366
    %v3375 = vmul.f32 %v3333, %v3367
    %v3376 = vmul.f32 %v3335, %v3368
    %v3377 = vmul.f32 %v3337, %v3369
    %3378 = vrot.lane.b32.xlu0 %v3105, 112
    %v3379 = vpop.permute.xlu0 %3378
    %3380 = vrot.lane.b32.xlu0 %v3106, 112
    %v3381 = vpop.permute.xlu0 %3380
    %3382 = vrot.lane.b32.xlu0 %v3107, 112
    %v3383 = vpop.permute.xlu0 %3382
    %3384 = vrot.lane.b32.xlu0 %v3108, 112
    %v3385 = vpop.permute.xlu0 %3384
    %3386 = vrot.lane.b32.xlu0 %v3109, 112
    %v3387 = vpop.permute.xlu0 %3386
    %3388 = vrot.lane.b32.xlu0 %v3110, 112
    %v3389 = vpop.permute.xlu0 %3388
    %3390 = vrot.lane.b32.xlu0 %v3111, 112
    %v3391 = vpop.permute.xlu0 %3390
    %3392 = vrot.lane.b32.xlu0 %v3112, 112
    %v3393 = vpop.permute.xlu0 %3392
    %v3403 = vsel %vm156, %v3370, 0
    %v3406 = vsel %vm156, %v3371, 0
    %v3409 = vsel %vm156, %v3372, 0
    %v3412 = vsel %vm156, %v3373, 0
    %v3415 = vsel %vm156, %v3374, 0
    %v3418 = vsel %vm156, %v3375, 0
    %v3421 = vsel %vm156, %v3376, 0
    %v3424 = vsel %vm156, %v3377, 0
    %3426 = vmatprep.subr.mxu0 0.0
    %3427 = vmatpush1.msra.mxu0 0.0
    %3428 = vmatprep.subr.mxu0 0.0
    %3429 = vmatpush1.msra.mxu0 0.0
    %3430 = vmatprep.subr.mxu0 0.0
    %3431 = vmatpush1.msra.mxu0 0.0
    %3432 = vmatprep.subr.mxu0 0.0
    %3433 = vmatpush1.msra.mxu0 0.0
    %3434 = vmatprep.subr.mxu0 0.0
    %3435 = vmatpush1.msra.mxu0 0.0
    %3436 = vmatprep.subr.mxu0 0.0
    %3437 = vmatpush1.msra.mxu0 0.0
    %3438 = vmatprep.subr.mxu0 0.0
    %3439 = vmatpush1.msra.mxu0 0.0
    %3440 = vmatprep.subr.mxu0 0.0
    %3441 = vmatpush1.msra.mxu0 0.0
    %3442 = vmatprep.subr.mxu0 0.0
    %3443 = vmatpush1.msra.mxu0 %v3393
    %3444 = vmatprep.subr.mxu0 0.0
    %3445 = vmatpush1.msra.mxu0 %v3391
    %3446 = vmatprep.subr.mxu0 0.0
    %3447 = vmatpush1.msra.mxu0 %v3389
    %3448 = vmatprep.subr.mxu0 0.0
    %3449 = vmatpush1.msra.mxu0 %v3387
    %3450 = vmatprep.subr.mxu0 0.0
    %3451 = vmatpush1.msra.mxu0 %v3385
    %3452 = vmatprep.subr.mxu0 0.0
    %3453 = vmatpush1.msra.mxu0 %v3383
    %3454 = vmatprep.subr.mxu0 0.0
    %3455 = vmatpush1.msra.mxu0 %v3381
    %3456 = vmatprep.subr.mxu0 0.0
    %3457 = vmatpush1.msra.mxu0 %v3379
    %3458 = vmatprep.subr.mxu0 0.0
    %3459 = vmatpush2.msra.mxu0 0.0
    %3460 = vmatprep.subr.mxu0 0.0
    %3461 = vmatpush2.msra.mxu0 0.0
    %3462 = vmatprep.subr.mxu0 0.0
    %3463 = vmatpush2.msra.mxu0 0.0
    %3464 = vmatprep.subr.mxu0 0.0
    %3465 = vmatpush2.msra.mxu0 0.0
    %3466 = vmatprep.subr.mxu0 0.0
    %3467 = vmatpush2.msra.mxu0 0.0
    %3468 = vmatprep.subr.mxu0 0.0
    %3469 = vmatpush2.msra.mxu0 0.0
    %3470 = vmatprep.subr.mxu0 0.0
    %3471 = vmatpush2.msra.mxu0 0.0
    %3472 = vmatprep.subr.mxu0 0.0
    %3473 = vmatpush2.msra.mxu0 0.0
    %3474 = vmatprep.subr.mxu0 0.0
    %3475 = vmatpush2.msra.mxu0 0.0
    %3476 = vmatprep.subr.mxu0 0.0
    %3477 = vmatpush2.msra.mxu0 0.0
    %3478 = vmatprep.subr.mxu0 0.0
    %3479 = vmatpush2.msra.mxu0 0.0
    %3480 = vmatprep.subr.mxu0 0.0
    %3481 = vmatpush2.msra.mxu0 0.0
    %3482 = vmatprep.subr.mxu0 0.0
    %3483 = vmatpush2.msra.mxu0 0.0
    %3484 = vmatprep.subr.mxu0 0.0
    %3485 = vmatpush2.msra.mxu0 0.0
    %3486 = vmatprep.subr.mxu0 0.0
    %3487 = vmatpush2.msra.mxu0 0.0
    %3488 = vmatprep.subr.mxu0 0.0
    %3489 = vmatpush2.msra.mxu0 0.0
    %3490 = vmatprep.mubr.f32.mxu0 0.0
    %3491 = vmatmul.mubr.f32.gmra.mxu0 %v3403
    %v3492 = vpop.f32.mrf.mxu0
    %v3493 = vadd.f32 0.0, %v3492
    %v3494 = vpop.f32.mrf.mxu0
    %3495 = vmatprep.mubr.f32.mxu0 0.0
    %3496 = vmatmul.mubr.f32.gmra.mxu0 %v3406
    %v3497 = vpop.f32.mrf.mxu0
    %v3498 = vadd.f32 0.0, %v3497
    %v3499 = vpop.f32.mrf.mxu0
    %3500 = vmatprep.mubr.f32.mxu0 0.0
    %3501 = vmatmul.mubr.f32.gmra.mxu0 %v3409
    %v3502 = vpop.f32.mrf.mxu0
    %v3503 = vadd.f32 0.0, %v3502
    %v3504 = vpop.f32.mrf.mxu0
    %3505 = vmatprep.mubr.f32.mxu0 0.0
    %3506 = vmatmul.mubr.f32.gmra.mxu0 %v3412
    %v3507 = vpop.f32.mrf.mxu0
    %v3508 = vadd.f32 0.0, %v3507
    %v3509 = vpop.f32.mrf.mxu0
    %3510 = vmatprep.mubr.f32.mxu0 0.0
    %3511 = vmatmul.mubr.f32.gmra.mxu0 %v3415
    %v3512 = vpop.f32.mrf.mxu0
    %v3513 = vadd.f32 0.0, %v3512
    %v3514 = vpop.f32.mrf.mxu0
    %3515 = vmatprep.mubr.f32.mxu0 0.0
    %3516 = vmatmul.mubr.f32.gmra.mxu0 %v3418
    %v3517 = vpop.f32.mrf.mxu0
    %v3518 = vadd.f32 0.0, %v3517
    %v3519 = vpop.f32.mrf.mxu0
    %3520 = vmatprep.mubr.f32.mxu0 0.0
    %3521 = vmatmul.mubr.f32.gmra.mxu0 %v3421
    %v3522 = vpop.f32.mrf.mxu0
    %v3523 = vadd.f32 0.0, %v3522
    %v3524 = vpop.f32.mrf.mxu0
    %3525 = vmatprep.mubr.f32.mxu0 0.0
    %3526 = vmatmul.mubr.f32.gmra.mxu0 %v3424
    %v3527 = vpop.f32.mrf.mxu0
    %v3528 = vadd.f32 0.0, %v3527
    %v3529 = vpop.f32.mrf.mxu0
    %3530 = vdwg.mxu0
    %v3531 = vld [vmem:[%s473] sm:$0xff]
    %v3532 = vld [vmem:[%s473 + $0x8] sm:$0xff]
    %v3533 = vld [vmem:[%s473 + $0x10] sm:$0xff]
    %v3534 = vld [vmem:[%s473 + $0x18] sm:$0xff]
    %v3535 = vld [vmem:[%s473 + $0x20] sm:$0xff]
    %v3536 = vld [vmem:[%s473 + $0x28] sm:$0xff]
    %v3537 = vld [vmem:[%s473 + $0x30] sm:$0xff]
    %v3538 = vld [vmem:[%s473 + $0x38] sm:$0xff]
    %3547 = vrot.lane.b32.xlu0 %v3531, 120
    %v3548 = vpop.permute.xlu0 %3547
    %3549 = vrot.lane.b32.xlu0 %v3532, 120
    %v3550 = vpop.permute.xlu0 %3549
    %3551 = vrot.lane.b32.xlu0 %v3533, 120
    %v3552 = vpop.permute.xlu0 %3551
    %3553 = vrot.lane.b32.xlu0 %v3534, 120
    %v3554 = vpop.permute.xlu0 %3553
    %3555 = vrot.lane.b32.xlu0 %v3535, 120
    %v3556 = vpop.permute.xlu0 %3555
    %3557 = vrot.lane.b32.xlu0 %v3536, 120
    %v3558 = vpop.permute.xlu0 %3557
    %3559 = vrot.lane.b32.xlu0 %v3537, 120
    %v3560 = vpop.permute.xlu0 %3559
    %3561 = vrot.lane.b32.xlu0 %v3538, 120
    %v3562 = vpop.permute.xlu0 %3561
    %v3563 = vsel %vm461, %v3531, 0
    %v3565 = vsel %vm461, %v3532, 0
    %v3567 = vsel %vm461, %v3533, 0
    %v3569 = vsel %vm461, %v3534, 0
    %v3571 = vsel %vm461, %v3535, 0
    %v3573 = vsel %vm461, %v3536, 0
    %v3575 = vsel %vm461, %v3537, 0
    %v3577 = vsel %vm461, %v3538, 0
    %v3579 = vsel %vm461, %v3548, 0
    %v3581 = vsel %vm461, %v3550, 0
    %v3583 = vsel %vm461, %v3552, 0
    %v3585 = vsel %vm461, %v3554, 0
    %v3587 = vsel %vm461, %v3556, 0
    %v3589 = vsel %vm461, %v3558, 0
    %v3591 = vsel %vm461, %v3560, 0
    %v3593 = vsel %vm461, %v3562, 0
    %3595 = vmatprep.subr.mxu0 0.0
    %3596 = vmatpush1.xpose.msra.mxu0 0.0
    %3597 = vmatprep.subr.mxu0 0.0
    %3598 = vmatpush1.xpose.msra.mxu0 0.0
    %3599 = vmatprep.subr.mxu0 0.0
    %3600 = vmatpush1.xpose.msra.mxu0 0.0
    %3601 = vmatprep.subr.mxu0 0.0
    %3602 = vmatpush1.xpose.msra.mxu0 0.0
    %3603 = vmatprep.subr.mxu0 0.0
    %3604 = vmatpush1.xpose.msra.mxu0 0.0
    %3605 = vmatprep.subr.mxu0 0.0
    %3606 = vmatpush1.xpose.msra.mxu0 0.0
    %3607 = vmatprep.subr.mxu0 0.0
    %3608 = vmatpush1.xpose.msra.mxu0 0.0
    %3609 = vmatprep.subr.mxu0 0.0
    %3610 = vmatpush1.xpose.msra.mxu0 0.0
    %3611 = vmatprep.subr.mxu0 0.0
    %3612 = vmatpush1.xpose.msra.mxu0 %v3593
    %3613 = vmatprep.subr.mxu0 0.0
    %3614 = vmatpush1.xpose.msra.mxu0 %v3591
    %3615 = vmatprep.subr.mxu0 0.0
    %3616 = vmatpush1.xpose.msra.mxu0 %v3589
    %3617 = vmatprep.subr.mxu0 0.0
    %3618 = vmatpush1.xpose.msra.mxu0 %v3587
    %3619 = vmatprep.subr.mxu0 0.0
    %3620 = vmatpush1.xpose.msra.mxu0 %v3585
    %3621 = vmatprep.subr.mxu0 0.0
    %3622 = vmatpush1.xpose.msra.mxu0 %v3583
    %3623 = vmatprep.subr.mxu0 0.0
    %3624 = vmatpush1.xpose.msra.mxu0 %v3581
    %3625 = vmatprep.subr.mxu0 0.0
    %3626 = vmatpush1.xpose.msra.mxu0 %v3579
    %3627 = vmatprep.subr.mxu0 0.0
    %3628 = vmatpush2.xpose.msra.mxu0 0.0
    %3629 = vmatprep.subr.mxu0 0.0
    %3630 = vmatpush2.xpose.msra.mxu0 0.0
    %3631 = vmatprep.subr.mxu0 0.0
    %3632 = vmatpush2.xpose.msra.mxu0 0.0
    %3633 = vmatprep.subr.mxu0 0.0
    %3634 = vmatpush2.xpose.msra.mxu0 0.0
    %3635 = vmatprep.subr.mxu0 0.0
    %3636 = vmatpush2.xpose.msra.mxu0 0.0
    %3637 = vmatprep.subr.mxu0 0.0
    %3638 = vmatpush2.xpose.msra.mxu0 0.0
    %3639 = vmatprep.subr.mxu0 0.0
    %3640 = vmatpush2.xpose.msra.mxu0 0.0
    %3641 = vmatprep.subr.mxu0 0.0
    %3642 = vmatpush2.xpose.msra.mxu0 0.0
    %3643 = vmatprep.subr.mxu0 0.0
    %3644 = vmatpush2.xpose.msra.mxu0 0.0
    %3645 = vmatprep.subr.mxu0 0.0
    %3646 = vmatpush2.xpose.msra.mxu0 0.0
    %3647 = vmatprep.subr.mxu0 0.0
    %3648 = vmatpush2.xpose.msra.mxu0 0.0
    %3649 = vmatprep.subr.mxu0 0.0
    %3650 = vmatpush2.xpose.msra.mxu0 0.0
    %3651 = vmatprep.subr.mxu0 0.0
    %3652 = vmatpush2.xpose.msra.mxu0 0.0
    %3653 = vmatprep.subr.mxu0 0.0
    %3654 = vmatpush2.xpose.msra.mxu0 0.0
    %3655 = vmatprep.subr.mxu0 0.0
    %3656 = vmatpush2.xpose.msra.mxu0 0.0
    %3657 = vmatprep.subr.mxu0 0.0
    %3658 = vmatpush2.xpose.msra.mxu0 0.0
    %3659 = vmatprep.mubr.f32.mxu0 0.0
    %3660 = vmatmul.mubr.f32.gmra.mxu0 %v3563
    %v3661 = vpop.f32.mrf.mxu0
    %v3662 = vadd.f32 0.0, %v3661
    %v3663 = vpop.f32.mrf.mxu0
    %3664 = vmatprep.mubr.f32.mxu0 0.0
    %3665 = vmatmul.mubr.f32.gmra.mxu0 %v3565
    %v3666 = vpop.f32.mrf.mxu0
    %v3667 = vadd.f32 0.0, %v3666
    %v3668 = vpop.f32.mrf.mxu0
    %3669 = vmatprep.mubr.f32.mxu0 0.0
    %3670 = vmatmul.mubr.f32.gmra.mxu0 %v3567
    %v3671 = vpop.f32.mrf.mxu0
    %v3672 = vadd.f32 0.0, %v3671
    %v3673 = vpop.f32.mrf.mxu0
    %3674 = vmatprep.mubr.f32.mxu0 0.0
    %3675 = vmatmul.mubr.f32.gmra.mxu0 %v3569
    %v3676 = vpop.f32.mrf.mxu0
    %v3677 = vadd.f32 0.0, %v3676
    %v3678 = vpop.f32.mrf.mxu0
    %3679 = vmatprep.mubr.f32.mxu0 0.0
    %3680 = vmatmul.mubr.f32.gmra.mxu0 %v3571
    %v3681 = vpop.f32.mrf.mxu0
    %v3682 = vadd.f32 0.0, %v3681
    %v3683 = vpop.f32.mrf.mxu0
    %3684 = vmatprep.mubr.f32.mxu0 0.0
    %3685 = vmatmul.mubr.f32.gmra.mxu0 %v3573
    %v3686 = vpop.f32.mrf.mxu0
    %v3687 = vadd.f32 0.0, %v3686
    %v3688 = vpop.f32.mrf.mxu0
    %3689 = vmatprep.mubr.f32.mxu0 0.0
    %3690 = vmatmul.mubr.f32.gmra.mxu0 %v3575
    %v3691 = vpop.f32.mrf.mxu0
    %v3692 = vadd.f32 0.0, %v3691
    %v3693 = vpop.f32.mrf.mxu0
    %3694 = vmatprep.mubr.f32.mxu0 0.0
    %3695 = vmatmul.mubr.f32.gmra.mxu0 %v3577
    %v3696 = vpop.f32.mrf.mxu0
    %v3697 = vadd.f32 0.0, %v3696
    %v3698 = vpop.f32.mrf.mxu0
    %3699 = vdwg.mxu0
    %v3700 = vmul.f32 %v3662, 0.125
    %v3701 = vmul.f32 %v3667, 0.125
    %v3702 = vmul.f32 %v3672, 0.125
    %v3703 = vmul.f32 %v3677, 0.125
    %v3704 = vmul.f32 %v3682, 0.125
    %v3705 = vmul.f32 %v3687, 0.125
    %v3706 = vmul.f32 %v3692, 0.125
    %v3707 = vmul.f32 %v3697, 0.125
    %3716 = vrot.lane.b32.xlu0 %v3067, 64
    %v3717 = vpop.permute.xlu0 %3716
    %3718 = vrot.lane.b32.xlu0 %v3072, 64
    %v3719 = vpop.permute.xlu0 %3718
    %3720 = vrot.lane.b32.xlu0 %v3077, 64
    %v3721 = vpop.permute.xlu0 %3720
    %3722 = vrot.lane.b32.xlu0 %v3082, 64
    %v3723 = vpop.permute.xlu0 %3722
    %3724 = vrot.lane.b32.xlu0 %v3087, 64
    %v3725 = vpop.permute.xlu0 %3724
    %3726 = vrot.lane.b32.xlu0 %v3092, 64
    %v3727 = vpop.permute.xlu0 %3726
    %3728 = vrot.lane.b32.xlu0 %v3097, 64
    %v3729 = vpop.permute.xlu0 %3728
    %3730 = vrot.lane.b32.xlu0 %v3102, 64
    %v3731 = vpop.permute.xlu0 %3730
    %v3740 = vadd.f32 %v3700, %v3717
    %v3741 = vadd.f32 %v3701, %v3719
    %v3742 = vadd.f32 %v3702, %v3721
    %v3743 = vadd.f32 %v3703, %v3723
    %v3744 = vadd.f32 %v3704, %v3725
    %v3745 = vadd.f32 %v3705, %v3727
    %v3746 = vadd.f32 %v3706, %v3729
    %v3747 = vadd.f32 %v3707, %v3731
    %v3748 = vsel %vm156, %v3740, -inf
    %3749 = vmax.xlane.f32.xlu0 %v3748
    %v3750 = vpop.xlane.xlu0 %3749
    %v3751 = vsel %vm156, %v3741, -inf
    %3752 = vmax.xlane.f32.xlu0 %v3751
    %v3753 = vpop.xlane.xlu0 %3752
    %v3754 = vsel %vm156, %v3742, -inf
    %3755 = vmax.xlane.f32.xlu0 %v3754
    %v3756 = vpop.xlane.xlu0 %3755
    %v3757 = vsel %vm156, %v3743, -inf
    %3758 = vmax.xlane.f32.xlu0 %v3757
    %v3759 = vpop.xlane.xlu0 %3758
    %v3760 = vsel %vm156, %v3744, -inf
    %3761 = vmax.xlane.f32.xlu0 %v3760
    %v3762 = vpop.xlane.xlu0 %3761
    %v3763 = vsel %vm156, %v3745, -inf
    %3764 = vmax.xlane.f32.xlu0 %v3763
    %v3765 = vpop.xlane.xlu0 %3764
    %v3766 = vsel %vm156, %v3746, -inf
    %3767 = vmax.xlane.f32.xlu0 %v3766
    %v3768 = vpop.xlane.xlu0 %3767
    %v3769 = vsel %vm156, %v3747, -inf
    %3770 = vmax.xlane.f32.xlu0 %v3769
    %v3771 = vpop.xlane.xlu0 %3770
    %v3772 = vsub.f32 %v3740, %v3750
    %v3773 = vsub.f32 %v3741, %v3753
    %v3774 = vsub.f32 %v3742, %v3756
    %v3775 = vsub.f32 %v3743, %v3759
    %v3776 = vsub.f32 %v3744, %v3762
    %v3777 = vsub.f32 %v3745, %v3765
    %v3778 = vsub.f32 %v3746, %v3768
    %v3779 = vsub.f32 %v3747, %v3771
    %v3780 = vmul.f32 %v3772, 1.442695
    %v3781 = vpow.pop %v3780
    %v3782 = vmul.f32 %v3773, 1.442695
    %v3783 = vpow.pop %v3782
    %v3784 = vmul.f32 %v3774, 1.442695
    %v3785 = vpow.pop %v3784
    %v3786 = vmul.f32 %v3775, 1.442695
    %v3787 = vpow.pop %v3786
    %v3788 = vmul.f32 %v3776, 1.442695
    %v3789 = vpow.pop %v3788
    %v3790 = vmul.f32 %v3777, 1.442695
    %v3791 = vpow.pop %v3790
    %v3792 = vmul.f32 %v3778, 1.442695
    %v3793 = vpow.pop %v3792
    %v3794 = vmul.f32 %v3779, 1.442695
    %v3795 = vpow.pop %v3794
    %v3796 = vsel %vm156, %v3781, 0.0
    %3797 = vadd.xlane.f32.xlu0 %v3796
    %v3798 = vpop.xlane.xlu0 %3797
    %v3799 = vsel %vm156, %v3783, 0.0
    %3800 = vadd.xlane.f32.xlu0 %v3799
    %v3801 = vpop.xlane.xlu0 %3800
    %v3802 = vsel %vm156, %v3785, 0.0
    %3803 = vadd.xlane.f32.xlu0 %v3802
    %v3804 = vpop.xlane.xlu0 %3803
    %v3805 = vsel %vm156, %v3787, 0.0
    %3806 = vadd.xlane.f32.xlu0 %v3805
    %v3807 = vpop.xlane.xlu0 %3806
    %v3808 = vsel %vm156, %v3789, 0.0
    %3809 = vadd.xlane.f32.xlu0 %v3808
    %v3810 = vpop.xlane.xlu0 %3809
    %v3811 = vsel %vm156, %v3791, 0.0
    %3812 = vadd.xlane.f32.xlu0 %v3811
    %v3813 = vpop.xlane.xlu0 %3812
    %v3814 = vsel %vm156, %v3793, 0.0
    %3815 = vadd.xlane.f32.xlu0 %v3814
    %v3816 = vpop.xlane.xlu0 %3815
    %v3817 = vsel %vm156, %v3795, 0.0
    %3818 = vadd.xlane.f32.xlu0 %v3817
    %v3819 = vpop.xlane.xlu0 %3818
    %v3820 = vrcp.pop %v3798
    %v3821 = vrcp.pop %v3801
    %v3822 = vrcp.pop %v3804
    %v3823 = vrcp.pop %v3807
    %v3824 = vrcp.pop %v3810
    %v3825 = vrcp.pop %v3813
    %v3826 = vrcp.pop %v3816
    %v3827 = vrcp.pop %v3819
    %v3828 = vmul.f32 %v3781, %v3820
    %v3829 = vmul.f32 %v3783, %v3821
    %v3830 = vmul.f32 %v3785, %v3822
    %v3831 = vmul.f32 %v3787, %v3823
    %v3832 = vmul.f32 %v3789, %v3824
    %v3833 = vmul.f32 %v3791, %v3825
    %v3834 = vmul.f32 %v3793, %v3826
    %v3835 = vmul.f32 %v3795, %v3827
    %3836 = vrot.lane.b32.xlu0 %v3531, 112
    %v3837 = vpop.permute.xlu0 %3836
    %3838 = vrot.lane.b32.xlu0 %v3532, 112
    %v3839 = vpop.permute.xlu0 %3838
    %3840 = vrot.lane.b32.xlu0 %v3533, 112
    %v3841 = vpop.permute.xlu0 %3840
    %3842 = vrot.lane.b32.xlu0 %v3534, 112
    %v3843 = vpop.permute.xlu0 %3842
    %3844 = vrot.lane.b32.xlu0 %v3535, 112
    %v3845 = vpop.permute.xlu0 %3844
    %3846 = vrot.lane.b32.xlu0 %v3536, 112
    %v3847 = vpop.permute.xlu0 %3846
    %3848 = vrot.lane.b32.xlu0 %v3537, 112
    %v3849 = vpop.permute.xlu0 %3848
    %3850 = vrot.lane.b32.xlu0 %v3538, 112
    %v3851 = vpop.permute.xlu0 %3850
    %v3861 = vsel %vm156, %v3828, 0
    %v3864 = vsel %vm156, %v3829, 0
    %v3867 = vsel %vm156, %v3830, 0
    %v3870 = vsel %vm156, %v3831, 0
    %v3873 = vsel %vm156, %v3832, 0
    %v3876 = vsel %vm156, %v3833, 0
    %v3879 = vsel %vm156, %v3834, 0
    %v3882 = vsel %vm156, %v3835, 0
    %3884 = vmatprep.subr.mxu0 0.0
    %3885 = vmatpush1.msra.mxu0 0.0
    %3886 = vmatprep.subr.mxu0 0.0
    %3887 = vmatpush1.msra.mxu0 0.0
    %3888 = vmatprep.subr.mxu0 0.0
    %3889 = vmatpush1.msra.mxu0 0.0
    %3890 = vmatprep.subr.mxu0 0.0
    %3891 = vmatpush1.msra.mxu0 0.0
    %3892 = vmatprep.subr.mxu0 0.0
    %3893 = vmatpush1.msra.mxu0 0.0
    %3894 = vmatprep.subr.mxu0 0.0
    %3895 = vmatpush1.msra.mxu0 0.0
    %3896 = vmatprep.subr.mxu0 0.0
    %3897 = vmatpush1.msra.mxu0 0.0
    %3898 = vmatprep.subr.mxu0 0.0
    %3899 = vmatpush1.msra.mxu0 0.0
    %3900 = vmatprep.subr.mxu0 0.0
    %3901 = vmatpush1.msra.mxu0 %v3851
    %3902 = vmatprep.subr.mxu0 0.0
    %3903 = vmatpush1.msra.mxu0 %v3849
    %3904 = vmatprep.subr.mxu0 0.0
    %3905 = vmatpush1.msra.mxu0 %v3847
    %3906 = vmatprep.subr.mxu0 0.0
    %3907 = vmatpush1.msra.mxu0 %v3845
    %3908 = vmatprep.subr.mxu0 0.0
    %3909 = vmatpush1.msra.mxu0 %v3843
    %3910 = vmatprep.subr.mxu0 0.0
    %3911 = vmatpush1.msra.mxu0 %v3841
    %3912 = vmatprep.subr.mxu0 0.0
    %3913 = vmatpush1.msra.mxu0 %v3839
    %3914 = vmatprep.subr.mxu0 0.0
    %3915 = vmatpush1.msra.mxu0 %v3837
    %3916 = vmatprep.subr.mxu0 0.0
    %3917 = vmatpush2.msra.mxu0 0.0
    %3918 = vmatprep.subr.mxu0 0.0
    %3919 = vmatpush2.msra.mxu0 0.0
    %3920 = vmatprep.subr.mxu0 0.0
    %3921 = vmatpush2.msra.mxu0 0.0
    %3922 = vmatprep.subr.mxu0 0.0
    %3923 = vmatpush2.msra.mxu0 0.0
    %3924 = vmatprep.subr.mxu0 0.0
    %3925 = vmatpush2.msra.mxu0 0.0
    %3926 = vmatprep.subr.mxu0 0.0
    %3927 = vmatpush2.msra.mxu0 0.0
    %3928 = vmatprep.subr.mxu0 0.0
    %3929 = vmatpush2.msra.mxu0 0.0
    %3930 = vmatprep.subr.mxu0 0.0
    %3931 = vmatpush2.msra.mxu0 0.0
    %3932 = vmatprep.subr.mxu0 0.0
    %3933 = vmatpush2.msra.mxu0 0.0
    %3934 = vmatprep.subr.mxu0 0.0
    %3935 = vmatpush2.msra.mxu0 0.0
    %3936 = vmatprep.subr.mxu0 0.0
    %3937 = vmatpush2.msra.mxu0 0.0
    %3938 = vmatprep.subr.mxu0 0.0
    %3939 = vmatpush2.msra.mxu0 0.0
    %3940 = vmatprep.subr.mxu0 0.0
    %3941 = vmatpush2.msra.mxu0 0.0
    %3942 = vmatprep.subr.mxu0 0.0
    %3943 = vmatpush2.msra.mxu0 0.0
    %3944 = vmatprep.subr.mxu0 0.0
    %3945 = vmatpush2.msra.mxu0 0.0
    %3946 = vmatprep.subr.mxu0 0.0
    %3947 = vmatpush2.msra.mxu0 0.0
    %3948 = vmatprep.mubr.f32.mxu0 0.0
    %3949 = vmatmul.mubr.f32.gmra.mxu0 %v3861
    %v3950 = vpop.f32.mrf.mxu0
    %v3951 = vadd.f32 0.0, %v3950
    %v3952 = vpop.f32.mrf.mxu0
    %3953 = vmatprep.mubr.f32.mxu0 0.0
    %3954 = vmatmul.mubr.f32.gmra.mxu0 %v3864
    %v3955 = vpop.f32.mrf.mxu0
    %v3956 = vadd.f32 0.0, %v3955
    %v3957 = vpop.f32.mrf.mxu0
    %3958 = vmatprep.mubr.f32.mxu0 0.0
    %3959 = vmatmul.mubr.f32.gmra.mxu0 %v3867
    %v3960 = vpop.f32.mrf.mxu0
    %v3961 = vadd.f32 0.0, %v3960
    %v3962 = vpop.f32.mrf.mxu0
    %3963 = vmatprep.mubr.f32.mxu0 0.0
    %3964 = vmatmul.mubr.f32.gmra.mxu0 %v3870
    %v3965 = vpop.f32.mrf.mxu0
    %v3966 = vadd.f32 0.0, %v3965
    %v3967 = vpop.f32.mrf.mxu0
    %3968 = vmatprep.mubr.f32.mxu0 0.0
    %3969 = vmatmul.mubr.f32.gmra.mxu0 %v3873
    %v3970 = vpop.f32.mrf.mxu0
    %v3971 = vadd.f32 0.0, %v3970
    %v3972 = vpop.f32.mrf.mxu0
    %3973 = vmatprep.mubr.f32.mxu0 0.0
    %3974 = vmatmul.mubr.f32.gmra.mxu0 %v3876
    %v3975 = vpop.f32.mrf.mxu0
    %v3976 = vadd.f32 0.0, %v3975
    %v3977 = vpop.f32.mrf.mxu0
    %3978 = vmatprep.mubr.f32.mxu0 0.0
    %3979 = vmatmul.mubr.f32.gmra.mxu0 %v3879
    %v3980 = vpop.f32.mrf.mxu0
    %v3981 = vadd.f32 0.0, %v3980
    %v3982 = vpop.f32.mrf.mxu0
    %3983 = vmatprep.mubr.f32.mxu0 0.0
    %3984 = vmatmul.mubr.f32.gmra.mxu0 %v3882
    %v3985 = vpop.f32.mrf.mxu0
    %v3986 = vadd.f32 0.0, %v3985
    %v3987 = vpop.f32.mrf.mxu0
    %3988 = vdwg.mxu0
    %3997 = vrot.lane.b32.xlu0 %v3951, 8
    %v3998 = vpop.permute.xlu0 %3997
    %3999 = vrot.lane.b32.xlu0 %v3956, 8
    %v4000 = vpop.permute.xlu0 %3999
    %4001 = vrot.lane.b32.xlu0 %v3961, 8
    %v4002 = vpop.permute.xlu0 %4001
    %4003 = vrot.lane.b32.xlu0 %v3966, 8
    %v4004 = vpop.permute.xlu0 %4003
    %4005 = vrot.lane.b32.xlu0 %v3971, 8
    %v4006 = vpop.permute.xlu0 %4005
    %4007 = vrot.lane.b32.xlu0 %v3976, 8
    %v4008 = vpop.permute.xlu0 %4007
    %4009 = vrot.lane.b32.xlu0 %v3981, 8
    %v4010 = vpop.permute.xlu0 %4009
    %4011 = vrot.lane.b32.xlu0 %v3986, 8
    %v4012 = vpop.permute.xlu0 %4011
    %v4021 = vsel %vm461, %v3493, %v3998
    %v4022 = vsel %vm461, %v3498, %v4000
    %v4023 = vsel %vm461, %v3503, %v4002
    %v4024 = vsel %vm461, %v3508, %v4004
    %v4025 = vsel %vm461, %v3513, %v4006
    %v4026 = vsel %vm461, %v3518, %v4008
    %v4027 = vsel %vm461, %v3523, %v4010
    %v4028 = vsel %vm461, %v3528, %v4012
    %4029 = vxpose.xlu0.b32.start [1/16] %v4021, 128
    %4030 = vxpose.xlu0.b32.cont [2/16] %v4022, 128
    %4031 = vxpose.xlu0.b32.cont [3/16] %v4023, 128
    %4032 = vxpose.xlu0.b32.cont [4/16] %v4024, 128
    %4033 = vxpose.xlu0.b32.cont [5/16] %v4025, 128
    %4034 = vxpose.xlu0.b32.cont [6/16] %v4026, 128
    %4035 = vxpose.xlu0.b32.cont [7/16] %v4027, 128
    %4036 = vxpose.xlu0.b32.cont [8/16] %v4028, 128
    %4037 = vxpose.xlu0.b32.cont [9/16] 0.0, 128
    %4038 = vxpose.xlu0.b32.cont [10/16] 0.0, 128
    %4039 = vxpose.xlu0.b32.cont [11/16] 0.0, 128
    %4040 = vxpose.xlu0.b32.cont [12/16] 0.0, 128
    %4041 = vxpose.xlu0.b32.cont [13/16] 0.0, 128
    %4042 = vxpose.xlu0.b32.cont [14/16] 0.0, 128
    %4043 = vxpose.xlu0.b32.cont [15/16] 0.0, 128
    %4044 = vxpose.xlu0.b32.end [16/16] 0.0, 128
    %v4045 = vpop.trf.xlu0
    %v4046 = vpop.trf.xlu0
    %v4047 = vpop.trf.xlu0
    %v4048 = vpop.trf.xlu0
    %v4049 = vpop.trf.xlu0
    %v4050 = vpop.trf.xlu0
    %v4051 = vpop.trf.xlu0
    %v4052 = vpop.trf.xlu0
    %v4053 = vpop.trf.xlu0
    %v4054 = vpop.trf.xlu0
    %v4055 = vpop.trf.xlu0
    %v4056 = vpop.trf.xlu0
    %v4057 = vpop.trf.xlu0
    %v4058 = vpop.trf.xlu0
    %v4059 = vpop.trf.xlu0
    %v4060 = vpop.trf.xlu0
    %v4062 = vsel %vm156, %v4045, 0
    %v4065 = vsel %vm156, %v4046, 0
    %4067 = vmatprep.subr.mxu0 0.0
    %4068 = vmatpush1.msra.mxu0 0.0
    %4069 = vmatprep.subr.mxu0 0.0
    %4070 = vmatpush1.msra.mxu0 0.0
    %4071 = vmatprep.subr.mxu0 0.0
    %4072 = vmatpush1.msra.mxu0 0.0
    %4073 = vmatprep.subr.mxu0 0.0
    %4074 = vmatpush1.msra.mxu0 0.0
    %4075 = vmatprep.subr.mxu0 0.0
    %4076 = vmatpush1.msra.mxu0 0.0
    %4077 = vmatprep.subr.mxu0 0.0
    %4078 = vmatpush1.msra.mxu0 0.0
    %4079 = vmatprep.subr.mxu0 0.0
    %4080 = vmatpush1.msra.mxu0 0.0
    %4081 = vmatprep.subr.mxu0 0.0
    %4082 = vmatpush1.msra.mxu0 0.0
    %4083 = vmatprep.subr.mxu0 0.0
    %4084 = vmatpush1.msra.mxu0 %v2854
    %4085 = vmatprep.subr.mxu0 0.0
    %4086 = vmatpush1.msra.mxu0 %v2853
    %4087 = vmatprep.subr.mxu0 0.0
    %4088 = vmatpush1.msra.mxu0 %v2852
    %4089 = vmatprep.subr.mxu0 0.0
    %4090 = vmatpush1.msra.mxu0 %v2851
    %4091 = vmatprep.subr.mxu0 0.0
    %4092 = vmatpush1.msra.mxu0 %v2850
    %4093 = vmatprep.subr.mxu0 0.0
    %4094 = vmatpush1.msra.mxu0 %v2849
    %4095 = vmatprep.subr.mxu0 0.0
    %4096 = vmatpush1.msra.mxu0 %v2848
    %4097 = vmatprep.subr.mxu0 0.0
    %4098 = vmatpush1.msra.mxu0 %v2847
    %4099 = vmatprep.subr.mxu0 0.0
    %4100 = vmatpush2.msra.mxu0 0.0
    %4101 = vmatprep.subr.mxu0 0.0
    %4102 = vmatpush2.msra.mxu0 0.0
    %4103 = vmatprep.subr.mxu0 0.0
    %4104 = vmatpush2.msra.mxu0 0.0
    %4105 = vmatprep.subr.mxu0 0.0
    %4106 = vmatpush2.msra.mxu0 0.0
    %4107 = vmatprep.subr.mxu0 0.0
    %4108 = vmatpush2.msra.mxu0 0.0
    %4109 = vmatprep.subr.mxu0 0.0
    %4110 = vmatpush2.msra.mxu0 0.0
    %4111 = vmatprep.subr.mxu0 0.0
    %4112 = vmatpush2.msra.mxu0 0.0
    %4113 = vmatprep.subr.mxu0 0.0
    %4114 = vmatpush2.msra.mxu0 0.0
    %4115 = vmatprep.subr.mxu0 0.0
    %4116 = vmatpush2.msra.mxu0 0.0
    %4117 = vmatprep.subr.mxu0 0.0
    %4118 = vmatpush2.msra.mxu0 0.0
    %4119 = vmatprep.subr.mxu0 0.0
    %4120 = vmatpush2.msra.mxu0 0.0
    %4121 = vmatprep.subr.mxu0 0.0
    %4122 = vmatpush2.msra.mxu0 0.0
    %4123 = vmatprep.subr.mxu0 0.0
    %4124 = vmatpush2.msra.mxu0 0.0
    %4125 = vmatprep.subr.mxu0 0.0
    %4126 = vmatpush2.msra.mxu0 0.0
    %4127 = vmatprep.subr.mxu0 0.0
    %4128 = vmatpush2.msra.mxu0 0.0
    %4129 = vmatprep.subr.mxu0 0.0
    %4130 = vmatpush2.msra.mxu0 0.0
    %4131 = vmatprep.mubr.f32.mxu0 0.0
    %4132 = vmatmul.mubr.f32.gmra.mxu0 %v4062
    %v4133 = vpop.f32.mrf.mxu0
    %v4134 = vadd.f32 0.0, %v4133
    %v4135 = vpop.f32.mrf.mxu0
    %4136 = vmatprep.mubr.f32.mxu0 0.0
    %4137 = vmatmul.mubr.f32.gmra.mxu0 %v4065
    %v4138 = vpop.f32.mrf.mxu0
    %v4139 = vadd.f32 0.0, %v4138
    %v4140 = vpop.f32.mrf.mxu0
    %4141 = vdwg.mxu0
    %v4142 = vsub.f32 %v4134, %v194
    %v4143 = vsub.f32 %v4139, %v195
    %v4144 = vsel %vm156, %v4142, 0.0
    %4145 = vadd.xlane.f32.xlu0 %v4144
    %v4146 = vpop.xlane.xlu0 %4145
    %v4147 = vsel %vm156, %v4143, 0.0
    %4148 = vadd.xlane.f32.xlu0 %v4147
    %v4149 = vpop.xlane.xlu0 %4148
    %v4150 = vmul.f32 %v4146, %v163
    %v4151 = vmul.f32 %v4149, %v163
    %v4152 = vsub.f32 %v4142, %v4150
    %v4153 = vsub.f32 %v4143, %v4151
    %v4154 = vmul.f32 %v4152, %v4152
    %v4155 = vmul.f32 %v4153, %v4153
    %v4156 = vsel %vm156, %v4154, 0.0
    %4157 = vadd.xlane.f32.xlu0 %v4156
    %v4158 = vpop.xlane.xlu0 %4157
    %v4159 = vsel %vm156, %v4155, 0.0
    %4160 = vadd.xlane.f32.xlu0 %v4159
    %v4161 = vpop.xlane.xlu0 %4160
    %v4162 = vmul.f32 %v4158, %v163
    %v4163 = vmul.f32 %v4161, %v163
    %v4164 = vadd.f32 %v4162, 1e-05
    %v4165 = vadd.f32 %v4163, 1e-05
    %v4166 = vrsqrt.pop %v4164
    %v4167 = vrsqrt.pop %v4165
    %v4168 = vmul.f32 %v4152, %v4166
    %v4169 = vmul.f32 %v4153, %v4167
    %v4170 = vlaneseq
    %v4171 = vshrl.u32 %v4170, 7
    %v4172 = vsub.s32 2, %v4171
    %v4173 = vrot.slane %v155, %v4172
    %v4174 = vmul.f32 %v4168, %v4173
    %v4175 = vmul.f32 %v4169, %v4173
    %v4176 = vlaneseq
    %v4177 = vshrl.u32 %v4176, 7
    %v4178 = vsub.s32 3, %v4177
    %v4179 = vrot.slane %v155, %v4178
    %v4180 = vadd.f32 %v4174, %v4179
    %v4181 = vadd.f32 %v4175, %v4179
    %v4182 = vadd.f32 %v4180, %v153
    %v4183 = vadd.f32 %v4181, %v154
    %v4184 = vsel %vm156, %v4182, 0.0
    %4185 = vadd.xlane.f32.xlu0 %v4184
    %v4186 = vpop.xlane.xlu0 %4185
    %v4187 = vsel %vm156, %v4183, 0.0
    %4188 = vadd.xlane.f32.xlu0 %v4187
    %v4189 = vpop.xlane.xlu0 %4188
    %v4190 = vmul.f32 %v4186, %v163
    %v4191 = vmul.f32 %v4189, %v163
    %v4192 = vsub.f32 %v4182, %v4190
    %v4193 = vsub.f32 %v4183, %v4191
    %v4194 = vmul.f32 %v4192, %v4192
    %v4195 = vmul.f32 %v4193, %v4193
    %v4196 = vsel %vm156, %v4194, 0.0
    %4197 = vadd.xlane.f32.xlu0 %v4196
    %v4198 = vpop.xlane.xlu0 %4197
    %v4199 = vsel %vm156, %v4195, 0.0
    %4200 = vadd.xlane.f32.xlu0 %v4199
    %v4201 = vpop.xlane.xlu0 %4200
    %v4202 = vmul.f32 %v4198, %v163
    %v4203 = vmul.f32 %v4201, %v163
    %v4204 = vadd.f32 %v4202, 1e-05
    %v4205 = vadd.f32 %v4203, 1e-05
    %v4206 = vrsqrt.pop %v4204
    %v4207 = vrsqrt.pop %v4205
    %v4208 = vmul.f32 %v4192, %v4206
    %v4209 = vmul.f32 %v4193, %v4207
    %v4210 = vlaneseq
    %v4211 = vshrl.u32 %v4210, 7
    %v4212 = vsub.s32 4, %v4211
    %v4213 = vrot.slane %v155, %v4212
    %v4214 = vmul.f32 %v4208, %v4213
    %v4215 = vmul.f32 %v4209, %v4213
    %v4216 = vlaneseq
    %v4217 = vshrl.u32 %v4216, 7
    %v4218 = vsub.s32 5, %v4217
    %v4219 = vrot.slane %v155, %v4218
    %v4220 = vadd.f32 %v4214, %v4219
    %v4221 = vadd.f32 %v4215, %v4219
    %v4222 = vld [vmem:[#allocation11] sm:$0x3]
    %v4223 = vand.u32 2147483647, %v4220
    %v4224 = vand.u32 2147483647, %v4221
    %v4225 = vsel %vm156, %v4223, -inf
    %4226 = vmax.xlane.f32.xlu0 %v4225
    %v4227 = vpop.xlane.xlu0 %4226
    %v4228 = vsel %vm156, %v4224, -inf
    %4229 = vmax.xlane.f32.xlu0 %v4228
    %v4230 = vpop.xlane.xlu0 %4229
    %v4231 = vmax.f32 %v4227, 1e-05
    %v4232 = vmax.f32 %v4230, 1e-05
    %v4233 = vrcp.pop %v4231
    %v4234 = vmul.f32 127.0, %v4233
    %v4235 = vrcp.pop %v4232
    %v4236 = vmul.f32 127.0, %v4235
    %v4237 = vmul.f32 %v4220, %v4234
    %v4238 = vmul.f32 %v4221, %v4236
    %v4239 = vround.ne.pseudo %v4237
    %v4240 = vround.ne.pseudo %v4238
    %v4241 = vmax.f32 %v4239, -128.0
    %v4242 = vmax.f32 %v4240, -128.0
    %v4243 = vmin.f32 %v4241, 127.0
    %v4244 = vmin.f32 %v4242, 127.0
    %v4245 = vpack.c.bf16 %v4244, %v4243
    %v4246 = vmul.f32 %v4231, 0.007874016
    %v4247 = vmul.f32 %v4232, 0.007874016
    %v4248 = vld [vmem:[#allocation10] sm:$0xf]
    %v4249 = vld [vmem:[#allocation10 + $0x4] sm:$0xf]
    %v4250 = vld [vmem:[#allocation10 + $0x8] sm:$0xf]
    %v4251 = vld [vmem:[#allocation10 + $0xc] sm:$0xf]
    %v4252 = vld [vmem:[#allocation10 + $0x10] sm:$0xf]
    %v4253 = vld [vmem:[#allocation10 + $0x14] sm:$0xf]
    %v4254 = vld [vmem:[#allocation10 + $0x18] sm:$0xf]
    %v4255 = vld [vmem:[#allocation10 + $0x1c] sm:$0xf]
    %v4264 = vunpack.c.l.b16 %v4248
    %v4265 = vunpack.c.l.b16 %v4249
    %v4266 = vunpack.c.l.b16 %v4250
    %v4267 = vunpack.c.l.b16 %v4251
    %v4268 = vunpack.c.l.b16 %v4252
    %v4269 = vunpack.c.l.b16 %v4253
    %v4270 = vunpack.c.l.b16 %v4254
    %v4271 = vunpack.c.l.b16 %v4255
    %v4272 = vpack.c.b16 %v4265, %v4264
    %v4273 = vpack.c.b16 %v4267, %v4266
    %v4274 = vpack.c.b16 %v4269, %v4268
    %v4275 = vpack.c.b16 %v4271, %v4270
    %v4277 = vsel %vm156, %v4245, 0
    %v4280 = vsel %vm156, %v4272, 0
    %v4283 = vsel %vm156, %v4273, 0
    %v4286 = vsel %vm156, %v4274, 0
    %v4289 = vsel %vm156, %v4275, 0
    %4291 = vmatprep.subr.bf16.mxu0 0
    %4292 = vmatpush1.bf16.xpose.msra.mxu0 0
    %4293 = vmatprep.subr.bf16.mxu0 0
    %4294 = vmatpush1.bf16.xpose.msra.mxu0 0
    %4295 = vmatprep.subr.bf16.mxu0 0
    %4296 = vmatpush1.bf16.xpose.msra.mxu0 0
    %4297 = vmatprep.subr.bf16.mxu0 0
    %4298 = vmatpush1.bf16.xpose.msra.mxu0 0
    %4299 = vmatprep.subr.bf16.mxu0 0
    %4300 = vmatpush1.bf16.xpose.msra.mxu0 %v4289
    %4301 = vmatprep.subr.bf16.mxu0 0
    %4302 = vmatpush1.bf16.xpose.msra.mxu0 %v4286
    %4303 = vmatprep.subr.bf16.mxu0 0
    %4304 = vmatpush1.bf16.xpose.msra.mxu0 %v4283
    %4305 = vmatprep.subr.bf16.mxu0 0
    %4306 = vmatpush1.bf16.xpose.msra.mxu0 %v4280
    %4307 = vmatprep.subr.bf16.mxu0 0
    %4308 = vmatpush2.bf16.xpose.msra.mxu0 0
    %4309 = vmatprep.subr.bf16.mxu0 0
    %4310 = vmatpush2.bf16.xpose.msra.mxu0 0
    %4311 = vmatprep.subr.bf16.mxu0 0
    %4312 = vmatpush2.bf16.xpose.msra.mxu0 0
    %4313 = vmatprep.subr.bf16.mxu0 0
    %4314 = vmatpush2.bf16.xpose.msra.mxu0 0
    %4315 = vmatprep.subr.bf16.mxu0 0
    %4316 = vmatpush2.bf16.xpose.msra.mxu0 0
    %4317 = vmatprep.subr.bf16.mxu0 0
    %4318 = vmatpush2.bf16.xpose.msra.mxu0 0
    %4319 = vmatprep.subr.bf16.mxu0 0
    %4320 = vmatpush2.bf16.xpose.msra.mxu0 0
    %4321 = vmatprep.subr.bf16.mxu0 0
    %4322 = vmatpush2.bf16.xpose.msra.mxu0 0
    %4323 = vmatprep.mubr.bf16.mxu0 0
    %4324 = vmatmul.mubr.bf16.gmra.mxu0 %v4277
    %v4325 = vpop.f32.mrf.mxu0
    %v4326 = vadd.f32 0.0, %v4325
    %v4327 = vpop.f32.mrf.mxu0
    %v4328 = vpop.f32.mrf.mxu0
    %v4329 = vadd.f32 0.0, %v4328
    %v4330 = vpop.f32.mrf.mxu0
    %4331 = vdwg.mxu0
    %s4332 = sld [smem:[#allocation17]]
    %v4333 = vstv %s4332
    %v4334 = vmul.f32 %v4246, %v4333
    %v4335 = vmul.f32 %v4247, %v4333
    %v4336 = vmul.f32 %v4326, %v4334
    %v4337 = vmul.f32 %v4329, %v4335
    %v4338 = vlaneseq
    %v4339 = vshrl.u32 %v4338, 7
    %v4340 = vsub.s32 0, %v4339
    %v4341 = vrot.slane %v4222, %v4340
    %v4342 = vadd.f32 %v4336, %v4341
    %v4343 = vadd.f32 %v4337, %v4341
    %v4344 = vmul.f32 %v4342, 0.5
    %v4345 = vmul.f32 %v4343, 0.5
    %v4346 = vmul.f32 %v4342, 0.044715
    %v4347 = vmul.f32 %v4343, 0.044715
    %v4348 = vmul.f32 %v4346, %v4342
    %v4349 = vmul.f32 %v4347, %v4343
    %v4350 = vmul.f32 %v4348, %v4342
    %v4351 = vmul.f32 %v4349, %v4343
    %v4352 = vadd.f32 %v4342, %v4350
    %v4353 = vadd.f32 %v4343, %v4351
    %v4354 = vmul.f32 %v4352, 0.7978846
    %v4355 = vmul.f32 %v4353, 0.7978846
    %v4356 = vtanh.pop %v4354
    %v4357 = vtanh.pop %v4355
    %v4358 = vadd.f32 %v4356, 1.0
    %v4359 = vadd.f32 %v4357, 1.0
    %v4360 = vmul.f32 %v4344, %v4358
    %v4361 = vmul.f32 %v4345, %v4359
    %v4362 = vsel %vm156, %v4360, 0.0
    %4363 = vadd.xlane.f32.xlu0 %v4362
    %v4364 = vpop.xlane.xlu0 %4363
    %v4365 = vsel %vm156, %v4361, 0.0
    %4366 = vadd.xlane.f32.xlu0 %v4365
    %v4367 = vpop.xlane.xlu0 %4366
    %v4368 = vmul.f32 %v4364, %v163
    %v4369 = vmul.f32 %v4367, %v163
    %v4370 = vsub.f32 %v4360, %v4368
    %v4371 = vsub.f32 %v4361, %v4369
    %v4372 = vmul.f32 %v4370, %v4370
    %v4373 = vmul.f32 %v4371, %v4371
    %v4374 = vsel %vm156, %v4372, 0.0
    %4375 = vadd.xlane.f32.xlu0 %v4374
    %v4376 = vpop.xlane.xlu0 %4375
    %v4377 = vsel %vm156, %v4373, 0.0
    %4378 = vadd.xlane.f32.xlu0 %v4377
    %v4379 = vpop.xlane.xlu0 %4378
    %v4380 = vmul.f32 %v4376, %v163
    %v4381 = vmul.f32 %v4379, %v163
    %v4382 = vadd.f32 %v4380, 1e-05
    %v4383 = vadd.f32 %v4381, 1e-05
    %v4384 = vrsqrt.pop %v4382
    %v4385 = vrsqrt.pop %v4383
    %v4386 = vmul.f32 %v4370, %v4384
    %v4387 = vmul.f32 %v4371, %v4385
    %v4388 = vlaneseq
    %v4389 = vshrl.u32 %v4388, 7
    %v4390 = vsub.s32 6, %v4389
    %v4391 = vrot.slane %v155, %v4390
    %v4392 = vmul.f32 %v4386, %v4391
    %v4393 = vmul.f32 %v4387, %v4391
    %v4394 = vlaneseq
    %v4395 = vshrl.u32 %v4394, 7
    %v4396 = vsub.s32 7, %v4395
    %v4397 = vrot.slane %v155, %v4396
    %v4398 = vadd.f32 %v4392, %v4397
    %v4399 = vadd.f32 %v4393, %v4397
    %v4400 = vand.u32 2147483647, %v4398
    %v4401 = vand.u32 2147483647, %v4399
    %v4402 = vsel %vm156, %v4400, -inf
    %4403 = vmax.xlane.f32.xlu0 %v4402
    %v4404 = vpop.xlane.xlu0 %4403
    %v4405 = vsel %vm156, %v4401, -inf
    %4406 = vmax.xlane.f32.xlu0 %v4405
    %v4407 = vpop.xlane.xlu0 %4406
    %v4408 = vmax.f32 %v4404, 1e-05
    %v4409 = vmax.f32 %v4407, 1e-05
    %v4410 = vrcp.pop %v4408
    %v4411 = vmul.f32 127.0, %v4410
    %v4412 = vrcp.pop %v4409
    %v4413 = vmul.f32 127.0, %v4412
    %v4414 = vmul.f32 %v4398, %v4411
    %v4415 = vmul.f32 %v4399, %v4413
    %v4416 = vround.ne.pseudo %v4414
    %v4417 = vround.ne.pseudo %v4415
    %v4418 = vmax.f32 %v4416, -128.0
    %v4419 = vmax.f32 %v4417, -128.0
    %v4420 = vmin.f32 %v4418, 127.0
    %v4421 = vmin.f32 %v4419, 127.0
    %v4422 = vpack.c.bf16 %v4421, %v4420
    %v4423 = vmul.f32 %v4408, 0.007874016
    %v4424 = vmul.f32 %v4409, 0.007874016
    %s4425 = scalar_lea.vmem [#allocation10], 32
    %v4426 = vld [vmem:[%s4425] sm:$0xf]
    %v4427 = vld [vmem:[%s4425 + $0x4] sm:$0xf]
    %v4428 = vld [vmem:[%s4425 + $0x8] sm:$0xf]
    %v4429 = vld [vmem:[%s4425 + $0xc] sm:$0xf]
    %v4430 = vld [vmem:[%s4425 + $0x10] sm:$0xf]
    %v4431 = vld [vmem:[%s4425 + $0x14] sm:$0xf]
    %v4432 = vld [vmem:[%s4425 + $0x18] sm:$0xf]
    %v4433 = vld [vmem:[%s4425 + $0x1c] sm:$0xf]
    %v4442 = vunpack.c.l.b16 %v4426
    %v4443 = vunpack.c.l.b16 %v4427
    %v4444 = vunpack.c.l.b16 %v4428
    %v4445 = vunpack.c.l.b16 %v4429
    %v4446 = vunpack.c.l.b16 %v4430
    %v4447 = vunpack.c.l.b16 %v4431
    %v4448 = vunpack.c.l.b16 %v4432
    %v4449 = vunpack.c.l.b16 %v4433
    %v4450 = vpack.c.b16 %v4443, %v4442
    %v4451 = vpack.c.b16 %v4445, %v4444
    %v4452 = vpack.c.b16 %v4447, %v4446
    %v4453 = vpack.c.b16 %v4449, %v4448
    %v4455 = vsel %vm156, %v4422, 0
    %v4458 = vsel %vm156, %v4450, 0
    %v4461 = vsel %vm156, %v4451, 0
    %v4464 = vsel %vm156, %v4452, 0
    %v4467 = vsel %vm156, %v4453, 0
    %4469 = vmatprep.subr.bf16.mxu0 0
    %4470 = vmatpush1.bf16.xpose.msra.mxu0 0
    %4471 = vmatprep.subr.bf16.mxu0 0
    %4472 = vmatpush1.bf16.xpose.msra.mxu0 0
    %4473 = vmatprep.subr.bf16.mxu0 0
    %4474 = vmatpush1.bf16.xpose.msra.mxu0 0
    %4475 = vmatprep.subr.bf16.mxu0 0
    %4476 = vmatpush1.bf16.xpose.msra.mxu0 0
    %4477 = vmatprep.subr.bf16.mxu0 0
    %4478 = vmatpush1.bf16.xpose.msra.mxu0 %v4467
    %4479 = vmatprep.subr.bf16.mxu0 0
    %4480 = vmatpush1.bf16.xpose.msra.mxu0 %v4464
    %4481 = vmatprep.subr.bf16.mxu0 0
    %4482 = vmatpush1.bf16.xpose.msra.mxu0 %v4461
    %4483 = vmatprep.subr.bf16.mxu0 0
    %4484 = vmatpush1.bf16.xpose.msra.mxu0 %v4458
    %4485 = vmatprep.subr.bf16.mxu0 0
    %4486 = vmatpush2.bf16.xpose.msra.mxu0 0
    %4487 = vmatprep.subr.bf16.mxu0 0
    %4488 = vmatpush2.bf16.xpose.msra.mxu0 0
    %4489 = vmatprep.subr.bf16.mxu0 0
    %4490 = vmatpush2.bf16.xpose.msra.mxu0 0
    %4491 = vmatprep.subr.bf16.mxu0 0
    %4492 = vmatpush2.bf16.xpose.msra.mxu0 0
    %4493 = vmatprep.subr.bf16.mxu0 0
    %4494 = vmatpush2.bf16.xpose.msra.mxu0 0
    %4495 = vmatprep.subr.bf16.mxu0 0
    %4496 = vmatpush2.bf16.xpose.msra.mxu0 0
    %4497 = vmatprep.subr.bf16.mxu0 0
    %4498 = vmatpush2.bf16.xpose.msra.mxu0 0
    %4499 = vmatprep.subr.bf16.mxu0 0
    %4500 = vmatpush2.bf16.xpose.msra.mxu0 0
    %4501 = vmatprep.mubr.bf16.mxu0 0
    %4502 = vmatmul.mubr.bf16.gmra.mxu0 %v4455
    %v4503 = vpop.f32.mrf.mxu0
    %v4504 = vadd.f32 0.0, %v4503
    %v4505 = vpop.f32.mrf.mxu0
    %v4506 = vpop.f32.mrf.mxu0
    %v4507 = vadd.f32 0.0, %v4506
    %v4508 = vpop.f32.mrf.mxu0
    %4509 = vdwg.mxu0
    %s4510 = sld [smem:[#allocation17 + $0x1]]
    %v4511 = vstv %s4510
    %v4512 = vmul.f32 %v4423, %v4511
    %v4513 = vmul.f32 %v4424, %v4511
    %v4514 = vmul.f32 %v4504, %v4512
    %v4515 = vmul.f32 %v4507, %v4513
    %v4516 = vlaneseq
    %v4517 = vshrl.u32 %v4516, 7
    %v4518 = vsub.s32 1, %v4517
    %v4519 = vrot.slane %v4222, %v4518
    %v4520 = vadd.f32 %v4514, %v4519
    %v4521 = vadd.f32 %v4515, %v4519
    %v4522 = vadd.f32 %v4520, %v4182
    %v4523 = vadd.f32 %v4521, %v4183
    %4524 = vst.msk [vmem:[#allocation18] sm:$0xff] %vm156, %v4522
    %4525 = vst.msk [vmem:[#allocation18 + $0x8] sm:$0xff] %vm156, %v4523
    // Predicated region
    $region94: #{channel_attention.1} parent=1 // pred_check
      _
    $region95: #{channel_attention.1} parent=1 // pred_check_branch
      %4527 = sbr.rel (0) target = $region97
    $region96: #{channel_attention.1} parent=1 // pred_region
      %s4529 = ssub.s32 256, 256
      %4530 = vsyncadd [#allocation5], %s4529
      %s4531 = sshll.u32 [#allocation18], 4
      %s4532 = int_to_ptr.vmem [resolvable:$true] %s4531
      %4537 = dma.vmem_to_hbm [thread:$0]  %s4532, 256, %s15, [#allocation5], 128, 128, 8
    $region97: #{channel_attention.1} parent=1 // pred_fallthru
      _
    // Predicated region
    $region98: #{channel_attention.1} parent=1 // pred_check
      _
    $region99: #{channel_attention.1} parent=1 // pred_check_branch
      %4539 = sbr.rel (0) target = $region101
    $region100: #{channel_attention.1} parent=1 // pred_region
      %4540 = dma.done [#allocation5], 256
    $region101: #{channel_attention.1} parent=1 // pred_fallthru
      _
    %4541 = vsyncpa [#allocation4], 1
    %4542 = vsyncpa [#allocation9], 1
    %4543 = vsyncpa [#allocation12], 1
    %4544 = vsyncpa [#allocation15], 1
    %4545 = vsyncpa [#allocation5], 1
    %4546 = vsyncpa [#allocation6], 1
    %4547 = vsyncpa [#allocation7], 1

</llo_original>
